<compile_context>
chip_gen: v5e
topology: v5e:2x2
jax: 0.10.0
libtpu: 0.0.40
codegen_flags: <defaults>
</compile_context>

<pallas_src>
import functools
import math

import jax
import jax.numpy as jnp
from jax.experimental import pallas as pl
from jax.experimental.pallas import tpu as pltpu


def _upsample_group_kernel(x_ref, o_ref, *, g: int, s: int, w: int):
    """x_ref: (TILE, g*w)  ->  o_ref: (TILE, g*s*w*s).

    Each grouped output row holds, for each of its g input rows, the s vertical
    copies of that row's lane-upsampled (x s) pixels laid out contiguously —
    exactly the row-major order of the NCHW output.  Pure data movement
    (bit-exact for any dtype).
    """
    ws = w * s
    # Single lane-axis element repeat over the whole grouped row.
    xw = jnp.repeat(x_ref[...], s, axis=-1)               # (TILE, g*w*s)
    for gi in range(g):
        chunk = xw[:, gi * ws:(gi + 1) * ws]               # upsampled input row gi
        base = gi * s * ws
        for dh in range(s):                                 # s vertical copies
            o_ref[:, base + dh * ws: base + (dh + 1) * ws] = chunk


def _divisors(n: int):
    out = []
    i = 1
    while i * i <= n:
        if n % i == 0:
            out.append(i)
            if i != n // i:
                out.append(n // i)
        i += 1
    return sorted(out)


def _smallest_dividing_multiple(m: int, n: int):
    for d in _divisors(n):
        if d % m == 0:
            return d
    return None


def _round_up(x: int, m: int) -> int:
    return (x + m - 1) // m * m


def _pick_group(rows: int, w: int, s: int, max_unroll: int = 256) -> int:
    """Pick g (dividing rows) so the grouped output row g*s*w*s is a multiple
    of 128 lanes (and ideally the grouped input row g*w too)."""
    out_unit = s * w * s
    g_out = 128 // math.gcd(out_unit, 128)      # lane-dense output super-row
    g_in = 128 // math.gcd(w, 128)              # lane-dense input row (nice-to-have)
    lcm = (g_out * g_in) // math.gcd(g_out, g_in)
    for m in (lcm, g_out):
        g = _smallest_dividing_multiple(m, rows)
        if g is not None and g * s <= max_unroll:
            return g
    return 1  # still correct; just falls back to masked (narrow) stores


def _pick_tile(grouped_rows: int, in_w: int, out_w: int, s: int,
               itemsize: int, align: int, budget_bytes: int) -> int:
    # Double-buffered input + output blocks plus the in-kernel repeat
    # temporary, all counted with their lane padding (to 128) in VMEM.
    per_row = (2 * (_round_up(in_w, 128) + _round_up(out_w, 128))
               + _round_up(in_w * s, 128)) * itemsize
    cap = max(1, budget_bytes // per_row)
    divs = _divisors(grouped_rows)
    ok = [d for d in divs if (d % align == 0 or d == grouped_rows)]
    valid = [d for d in ok if d <= cap]
    if not valid:
        return min(ok)  # smallest legal tile (pathological shapes only)
    # Prefer >= 8 grid steps (>= 4 per TensorCore on a v7x megacore) using the
    # largest block that still yields them; for small tensors take the largest
    # block with an even step count (or a single step).
    steps_ok = [d for d in valid if grouped_rows // d >= 8]
    if steps_ok:
        even = [d for d in steps_ok if (grouped_rows // d) % 2 == 0]
        return max(even) if even else max(steps_ok)
    even = [d for d in valid
            if (grouped_rows // d) % 2 == 0 or grouped_rows // d == 1]
    return max(even) if even else max(valid)


def upsample_nearest(x: jax.Array, scale_factor: int = 1) -> jax.Array:
    """Equivalent of Upsample(scale_factor, mode='nearest').forward(x), NCHW."""
    assert x.ndim == 4, "expected NCHW input"
    if float(scale_factor) != float(int(scale_factor)) or int(scale_factor) < 1:
        raise ValueError("only positive integer scale factors are supported")
    s = int(scale_factor)
    if s == 1:
        return x  # identity: skip the HBM round trip entirely

    B, C, H, W = x.shape
    rows = B * C * H
    itemsize = x.dtype.itemsize

    # Generation-aware VMEM limits: <= 48 MiB on v7x (64 MiB physical),
    # 64 MiB on v5e/v6e (128 MiB physical); conservative default if the query
    # is unavailable.
    try:
        vmem_cap = int(pltpu.get_tpu_info().vmem_capacity_bytes)
    except Exception:
        vmem_cap = 64 * 1024 * 1024
    vmem_limit = min(vmem_cap * 3 // 4, 64 * 1024 * 1024)
    block_budget = max(1 * 1024 * 1024, vmem_limit // 2)

    g = _pick_group(rows, W, s)
    grouped = rows // g
    in_w = g * W
    out_w = g * s * W * s

    align = max(8, 32 // itemsize)  # sublane packing: 8 f32 / 16 bf16 / 32 int8
    tile = _pick_tile(grouped, in_w, out_w, s, itemsize, align, block_budget)
    grid = (grouped // tile,)

    x2 = x.reshape(grouped, in_w)   # free reshape of contiguous NCHW data
    kernel = functools.partial(_upsample_group_kernel, g=g, s=s, w=W)

    out2 = pl.pallas_call(
        kernel,
        out_shape=jax.ShapeDtypeStruct((grouped, out_w), x.dtype),
        grid=grid,
        in_specs=[pl.BlockSpec((tile, in_w), lambda i: (i, 0))],
        out_specs=pl.BlockSpec((tile, out_w), lambda i: (i, 0)),
        compiler_params=pltpu.CompilerParams(
            dimension_semantics=("parallel",),
            vmem_limit_bytes=vmem_limit,
        ),
        cost_estimate=pl.CostEstimate(
            flops=0,
            transcendentals=0,
            bytes_accessed=(1 + s * s) * x.size * itemsize,
        ),
    )(x2)

    return out2.reshape(B, C, H * s, W * s)


# TODO(synk): only the Upsample (nearest, integer scale) block of MultiDarknet
# is implemented as a Pallas kernel; the conv/BN/leaky, maxpool, route/shortcut
# and YOLO-decode layers require the Darknet cfg files + weights and are not
# built here.  The real graph-level win is fusing this upsample into its
# consumer's input index_map to remove the s^2-sized HBM intermediate.


if __name__ == "__main__":
    root = jax.random.PRNGKey(0)
    k0, k1, k2 = jax.random.split(root, 3)

    def _ref(x, s):
        return jnp.repeat(jnp.repeat(x, s, axis=2), s, axis=3)

    # Main case: matches the module's Upsample(scale_factor=2) on small NCHW.
    B, C, H, W = 2, 4, 16, 16
    x = jax.random.normal(k0, (B, C, H, W), dtype=jnp.float32)
    out = jax.block_until_ready(upsample_nearest(x, scale_factor=2))
    assert out.shape == (B, C, H * 2, W * 2)
    assert out.dtype == x.dtype
    assert jnp.array_equal(out, _ref(x, 2))

    # Awkward YOLO-like width where no lane-dense grouping divides the rows
    # (exercises the g=1 fallback path).
    x13 = jax.random.normal(k1, (1, 3, 13, 13), dtype=jnp.float32)
    out13 = jax.block_until_ready(upsample_nearest(x13, scale_factor=2))
    assert jnp.array_equal(out13, _ref(x13, 2))

    # Odd scale factor.
    x8 = jax.random.normal(k2, (2, 2, 8, 8), dtype=jnp.float32)
    out8 = jax.block_until_ready(upsample_nearest(x8, scale_factor=3))
    assert jnp.array_equal(out8, _ref(x8, 3))

    # Identity path (scale_factor == 1) short-circuits.
    out1 = jax.block_until_ready(upsample_nearest(x, scale_factor=1))
    assert jnp.array_equal(out1, x)

    print("KERNEL_OK")
</pallas_src>

<mosaic_0001>
module attributes {stable_mosaic.version = 11 : i64} {
  func.func @_upsample_group_kernel(%arg0: i32, %arg1: memref<16x128xf32, #tpu.memory_space<vmem>>, %arg2: memref<16x512xf32, #tpu.memory_space<vmem>>) attributes {dimension_semantics = [#tpu.dimension_semantics<parallel>], iteration_bounds = array<i64: 1>, scalar_prefetch = 0 : i64, scratch_operands = 0 : i64, tpu.core_type = #tpu.core_type<tc>, window_params = [{transform_indices = @transform_0, window_bounds = array<i64: 16, 128>}, {transform_indices = @transform_1, window_bounds = array<i64: 16, 512>}]} {
    %c0 = arith.constant 0 : index
    %c0_0 = arith.constant 0 : index
    %0 = vector.load %arg1[%c0, %c0_0] : memref<16x128xf32, #tpu.memory_space<vmem>>, vector<16x128xf32>
    %1 = vector.shape_cast %0 : vector<16x128xf32> to vector<16x128x1xf32>
    %2 = vector.broadcast %1 : vector<16x128x1xf32> to vector<16x128x2xf32>
    %3 = vector.shape_cast %2 : vector<16x128x2xf32> to vector<16x256xf32>
    %4 = vector.extract_strided_slice %3 {offsets = [0, 0], sizes = [16, 32], strides = [1, 1]} : vector<16x256xf32> to vector<16x32xf32>
    %c0_1 = arith.constant 0 : index
    %c0_2 = arith.constant 0 : index
    %5 = vector.load %arg2[%c0_1, %c0_2] : memref<16x512xf32, #tpu.memory_space<vmem>>, vector<16x32xf32>
    tpu.vector_store %arg2[%c0_1, %c0_2], %4 {strides = array<i32>} : memref<16x512xf32, #tpu.memory_space<vmem>>, vector<16x32xf32>,
    %c0_3 = arith.constant 0 : index
    %c32 = arith.constant 32 : index
    %6 = vector.load %arg2[%c0_3, %c32] : memref<16x512xf32, #tpu.memory_space<vmem>>, vector<16x32xf32>
    tpu.vector_store %arg2[%c0_3, %c32], %4 {strides = array<i32>} : memref<16x512xf32, #tpu.memory_space<vmem>>, vector<16x32xf32>,
    %7 = vector.extract_strided_slice %3 {offsets = [0, 32], sizes = [16, 32], strides = [1, 1]} : vector<16x256xf32> to vector<16x32xf32>
    %c0_4 = arith.constant 0 : index
    %c64 = arith.constant 64 : index
    %8 = vector.load %arg2[%c0_4, %c64] : memref<16x512xf32, #tpu.memory_space<vmem>>, vector<16x32xf32>
    tpu.vector_store %arg2[%c0_4, %c64], %7 {strides = array<i32>} : memref<16x512xf32, #tpu.memory_space<vmem>>, vector<16x32xf32>,
    %c0_5 = arith.constant 0 : index
    %c96 = arith.constant 96 : index
    %9 = vector.load %arg2[%c0_5, %c96] : memref<16x512xf32, #tpu.memory_space<vmem>>, vector<16x32xf32>
    tpu.vector_store %arg2[%c0_5, %c96], %7 {strides = array<i32>} : memref<16x512xf32, #tpu.memory_space<vmem>>, vector<16x32xf32>,
    %10 = vector.extract_strided_slice %3 {offsets = [0, 64], sizes = [16, 32], strides = [1, 1]} : vector<16x256xf32> to vector<16x32xf32>
    %c0_6 = arith.constant 0 : index
    %c128 = arith.constant 128 : index
    %11 = vector.load %arg2[%c0_6, %c128] : memref<16x512xf32, #tpu.memory_space<vmem>>, vector<16x32xf32>
    tpu.vector_store %arg2[%c0_6, %c128], %10 {strides = array<i32>} : memref<16x512xf32, #tpu.memory_space<vmem>>, vector<16x32xf32>,
    %c0_7 = arith.constant 0 : index
    %c160 = arith.constant 160 : index
    %12 = vector.load %arg2[%c0_7, %c160] : memref<16x512xf32, #tpu.memory_space<vmem>>, vector<16x32xf32>
    tpu.vector_store %arg2[%c0_7, %c160], %10 {strides = array<i32>} : memref<16x512xf32, #tpu.memory_space<vmem>>, vector<16x32xf32>,
    %13 = vector.extract_strided_slice %3 {offsets = [0, 96], sizes = [16, 32], strides = [1, 1]} : vector<16x256xf32> to vector<16x32xf32>
    %c0_8 = arith.constant 0 : index
    %c192 = arith.constant 192 : index
    %14 = vector.load %arg2[%c0_8, %c192] : memref<16x512xf32, #tpu.memory_space<vmem>>, vector<16x32xf32>
    tpu.vector_store %arg2[%c0_8, %c192], %13 {strides = array<i32>} : memref<16x512xf32, #tpu.memory_space<vmem>>, vector<16x32xf32>,
    %c0_9 = arith.constant 0 : index
    %c224 = arith.constant 224 : index
    %15 = vector.load %arg2[%c0_9, %c224] : memref<16x512xf32, #tpu.memory_space<vmem>>, vector<16x32xf32>
    tpu.vector_store %arg2[%c0_9, %c224], %13 {strides = array<i32>} : memref<16x512xf32, #tpu.memory_space<vmem>>, vector<16x32xf32>,
    %16 = vector.extract_strided_slice %3 {offsets = [0, 128], sizes = [16, 32], strides = [1, 1]} : vector<16x256xf32> to vector<16x32xf32>
    %c0_10 = arith.constant 0 : index
    %c256 = arith.constant 256 : index
    %17 = vector.load %arg2[%c0_10, %c256] : memref<16x512xf32, #tpu.memory_space<vmem>>, vector<16x32xf32>
    tpu.vector_store %arg2[%c0_10, %c256], %16 {strides = array<i32>} : memref<16x512xf32, #tpu.memory_space<vmem>>, vector<16x32xf32>,
    %c0_11 = arith.constant 0 : index
    %c288 = arith.constant 288 : index
    %18 = vector.load %arg2[%c0_11, %c288] : memref<16x512xf32, #tpu.memory_space<vmem>>, vector<16x32xf32>
    tpu.vector_store %arg2[%c0_11, %c288], %16 {strides = array<i32>} : memref<16x512xf32, #tpu.memory_space<vmem>>, vector<16x32xf32>,
    %19 = vector.extract_strided_slice %3 {offsets = [0, 160], sizes = [16, 32], strides = [1, 1]} : vector<16x256xf32> to vector<16x32xf32>
    %c0_12 = arith.constant 0 : index
    %c320 = arith.constant 320 : index
    %20 = vector.load %arg2[%c0_12, %c320] : memref<16x512xf32, #tpu.memory_space<vmem>>, vector<16x32xf32>
    tpu.vector_store %arg2[%c0_12, %c320], %19 {strides = array<i32>} : memref<16x512xf32, #tpu.memory_space<vmem>>, vector<16x32xf32>,
    %c0_13 = arith.constant 0 : index
    %c352 = arith.constant 352 : index
    %21 = vector.load %arg2[%c0_13, %c352] : memref<16x512xf32, #tpu.memory_space<vmem>>, vector<16x32xf32>
    tpu.vector_store %arg2[%c0_13, %c352], %19 {strides = array<i32>} : memref<16x512xf32, #tpu.memory_space<vmem>>, vector<16x32xf32>,
    %22 = vector.extract_strided_slice %3 {offsets = [0, 192], sizes = [16, 32], strides = [1, 1]} : vector<16x256xf32> to vector<16x32xf32>
    %c0_14 = arith.constant 0 : index
    %c384 = arith.constant 384 : index
    %23 = vector.load %arg2[%c0_14, %c384] : memref<16x512xf32, #tpu.memory_space<vmem>>, vector<16x32xf32>
    tpu.vector_store %arg2[%c0_14, %c384], %22 {strides = array<i32>} : memref<16x512xf32, #tpu.memory_space<vmem>>, vector<16x32xf32>,
    %c0_15 = arith.constant 0 : index
    %c416 = arith.constant 416 : index
    %24 = vector.load %arg2[%c0_15, %c416] : memref<16x512xf32, #tpu.memory_space<vmem>>, vector<16x32xf32>
    tpu.vector_store %arg2[%c0_15, %c416], %22 {strides = array<i32>} : memref<16x512xf32, #tpu.memory_space<vmem>>, vector<16x32xf32>,
    %25 = vector.extract_strided_slice %3 {offsets = [0, 224], sizes = [16, 32], strides = [1, 1]} : vector<16x256xf32> to vector<16x32xf32>
    %c0_16 = arith.constant 0 : index
    %c448 = arith.constant 448 : index
    %26 = vector.load %arg2[%c0_16, %c448] : memref<16x512xf32, #tpu.memory_space<vmem>>, vector<16x32xf32>
    tpu.vector_store %arg2[%c0_16, %c448], %25 {strides = array<i32>} : memref<16x512xf32, #tpu.memory_space<vmem>>, vector<16x32xf32>,
    %c0_17 = arith.constant 0 : index
    %c480 = arith.constant 480 : index
    %27 = vector.load %arg2[%c0_17, %c480] : memref<16x512xf32, #tpu.memory_space<vmem>>, vector<16x32xf32>
    tpu.vector_store %arg2[%c0_17, %c480], %25 {strides = array<i32>} : memref<16x512xf32, #tpu.memory_space<vmem>>, vector<16x32xf32>,
    return
  }
  func.func @transform_0(%arg0: i32) -> (i32, i32) {
    %c0_i32 = arith.constant 0 : i32
    %c0_i32_0 = arith.constant 0 : i32
    return %arg0, %c0_i32 : i32, i32
  }
  func.func @transform_1(%arg0: i32) -> (i32, i32) {
    %c0_i32 = arith.constant 0 : i32
    %c0_i32_0 = arith.constant 0 : i32
    return %arg0, %c0_i32 : i32, i32
  }
}

</mosaic_0001>

<llo_original>
// kernel: tpu_custom_call.1
$region0: #{tpu_custom_call.1}
  #allocation0 [shape = 'u32[]', space=smem, size = 0x4, offset = 0x4, fixed_abs, tag = 'smem constant byte address 0x4 - core index']
  #allocation1 [shape = 'u32[72,128]{1,0:T(1,128)}', space=vmem, size = 0x9000, scoped, tag = 'internal scratch']
  %s0 = inlined_call_operand.hbm [shape: f32[16,128], index: 0, kind: input, shape index: {}]
  %s1 = inlined_call_operand.hbm [shape: f32[16,512], index: 1, kind: output, shape index: {}]
  %s2 = sld [smem:[#allocation0]]
  $region18: #{tpu_custom_call.1} parent=0
    _
  %s4 = ssub.s32 1, %s2
  %s5 = scalar_select 0, %s4, %s2
  $region1: #{tpu_custom_call.1} parent=0
    #allocation2 [shape = 'u8[8192]{0}', space=vmem, size = 0x2000, scoped, tag = 'input window, operand 0, single buffered']
    #allocation3 [shape = 's32[1]{0}', space=sflag, size = 0x4, scoped, tag = 'scoped memory for tpu_custom_call.1']
    #allocation4 [shape = 's32[1]{0}', space=sflag, size = 0x4, scoped, tag = 'scoped memory for tpu_custom_call.1']
    #allocation5 [shape = 'u8[32768]{0}', space=vmem, size = 0x8000, scoped, tag = 'output window, operand 0, single buffered']
    %6 = vsyncpa [#allocation3], 0
    %7 = vsyncpa [#allocation4], 0
    // Predicated region
    $region2: #{tpu_custom_call.1} parent=1 // pred_check
      _
    $region3: #{tpu_custom_call.1} parent=1 // pred_check_branch
      %9 = sbr.rel (0) target = $region5
    $region4: #{tpu_custom_call.1} parent=1 // pred_region
      %11 = vsyncadd [#allocation3], 0
      %s12 = sshll.u32 %s0, 4
      %s13 = int_to_ptr.hbm [resolvable:$true] %s12
      %s14 = sshll.u32 [#allocation2], 4
      %s15 = int_to_ptr.vmem [resolvable:$true] %s14
      %20 = dma.hbm_to_vmem [thread:$0]  %s13, 256, %s15, [#allocation3], 128, 128, 8
    $region5: #{tpu_custom_call.1} parent=1 // pred_fallthru
      _
    // Predicated region
    $region6: #{tpu_custom_call.1} parent=1 // pred_check
      _
    $region7: #{tpu_custom_call.1} parent=1 // pred_check_branch
      %22 = sbr.rel (0) target = $region9
    $region8: #{tpu_custom_call.1} parent=1 // pred_region
      %24 = dma.done [#allocation3], 256
    $region9: #{tpu_custom_call.1} parent=1 // pred_fallthru
      _
    %v25 = vld [vmem:[#allocation2] sm:$0xff]
    %v26 = vld [vmem:[#allocation2 + $0x8] sm:$0xff]
    %v27 = vperm.slane %v25, 0
    %v28 = vlaneseq
    %v29 = vshrl.u32 %v28, 7
    %31 = vset.pattern.permute.xlu0 %v29
    %32 = vperm.xlu0 %31, %v27
    %v33 = vpop.permute.xlu0 %32
    %v34 = vlaneseq
    %v35 = vshrl.u32 %v34, 7
    %v36 = vadd.s32 %v35, 8
    %37 = vset.pattern.permute.xlu0 %v36
    %38 = vperm.xlu0 %37, %v27
    %v39 = vpop.permute.xlu0 %38
    %v40 = vlaneseq
    %v41 = vshrl.u32 %v40, 7
    %v42 = vadd.s32 %v41, 16
    %43 = vset.pattern.permute.xlu0 %v42
    %44 = vperm.xlu0 %43, %v27
    %v45 = vpop.permute.xlu0 %44
    %v46 = vlaneseq
    %v47 = vshrl.u32 %v46, 7
    %v48 = vadd.s32 %v47, 24
    %49 = vset.pattern.permute.xlu0 %v48
    %50 = vperm.xlu0 %49, %v27
    %v51 = vpop.permute.xlu0 %50
    %v52 = vlaneseq
    %v53 = vshrl.u32 %v52, 7
    %v54 = vadd.s32 %v53, 32
    %55 = vset.pattern.permute.xlu0 %v54
    %56 = vperm.xlu0 %55, %v27
    %v57 = vpop.permute.xlu0 %56
    %v58 = vlaneseq
    %v59 = vshrl.u32 %v58, 7
    %v60 = vadd.s32 %v59, 40
    %61 = vset.pattern.permute.xlu0 %v60
    %62 = vperm.xlu0 %61, %v27
    %v63 = vpop.permute.xlu0 %62
    %v64 = vlaneseq
    %v65 = vshrl.u32 %v64, 7
    %v66 = vadd.s32 %v65, 48
    %67 = vset.pattern.permute.xlu0 %v66
    %68 = vperm.xlu0 %67, %v27
    %v69 = vpop.permute.xlu0 %68
    %v70 = vlaneseq
    %v71 = vshrl.u32 %v70, 7
    %v72 = vadd.s32 %v71, 56
    %73 = vset.pattern.permute.xlu0 %v72
    %74 = vperm.xlu0 %73, %v27
    %v75 = vpop.permute.xlu0 %74
    %v76 = vlaneseq
    %v77 = vshrl.u32 %v76, 7
    %v78 = vadd.s32 %v77, 64
    %79 = vset.pattern.permute.xlu0 %v78
    %80 = vperm.xlu0 %79, %v27
    %v81 = vpop.permute.xlu0 %80
    %v82 = vlaneseq
    %v83 = vshrl.u32 %v82, 7
    %v84 = vadd.s32 %v83, 72
    %85 = vset.pattern.permute.xlu0 %v84
    %86 = vperm.xlu0 %85, %v27
    %v87 = vpop.permute.xlu0 %86
    %v88 = vlaneseq
    %v89 = vshrl.u32 %v88, 7
    %v90 = vadd.s32 %v89, 80
    %91 = vset.pattern.permute.xlu0 %v90
    %92 = vperm.xlu0 %91, %v27
    %v93 = vpop.permute.xlu0 %92
    %v94 = vlaneseq
    %v95 = vshrl.u32 %v94, 7
    %v96 = vadd.s32 %v95, 88
    %97 = vset.pattern.permute.xlu0 %v96
    %98 = vperm.xlu0 %97, %v27
    %v99 = vpop.permute.xlu0 %98
    %v100 = vlaneseq
    %v101 = vshrl.u32 %v100, 7
    %v102 = vadd.s32 %v101, 96
    %103 = vset.pattern.permute.xlu0 %v102
    %104 = vperm.xlu0 %103, %v27
    %v105 = vpop.permute.xlu0 %104
    %v106 = vlaneseq
    %v107 = vshrl.u32 %v106, 7
    %v108 = vadd.s32 %v107, 104
    %109 = vset.pattern.permute.xlu0 %v108
    %110 = vperm.xlu0 %109, %v27
    %v111 = vpop.permute.xlu0 %110
    %v112 = vlaneseq
    %v113 = vshrl.u32 %v112, 7
    %v114 = vadd.s32 %v113, 112
    %115 = vset.pattern.permute.xlu0 %v114
    %116 = vperm.xlu0 %115, %v27
    %v117 = vpop.permute.xlu0 %116
    %v118 = vlaneseq
    %v119 = vshrl.u32 %v118, 7
    %v120 = vadd.s32 %v119, 120
    %121 = vset.pattern.permute.xlu0 %v120
    %122 = vperm.xlu0 %121, %v27
    %v123 = vpop.permute.xlu0 %122
    %v124 = vperm.slane %v25, 1
    %v125 = vlaneseq
    %v126 = vshrl.u32 %v125, 7
    %128 = vset.pattern.permute.xlu0 %v126
    %129 = vperm.xlu0 %128, %v124
    %v130 = vpop.permute.xlu0 %129
    %v131 = vlaneseq
    %v132 = vshrl.u32 %v131, 7
    %v133 = vadd.s32 %v132, 8
    %134 = vset.pattern.permute.xlu0 %v133
    %135 = vperm.xlu0 %134, %v124
    %v136 = vpop.permute.xlu0 %135
    %v137 = vlaneseq
    %v138 = vshrl.u32 %v137, 7
    %v139 = vadd.s32 %v138, 16
    %140 = vset.pattern.permute.xlu0 %v139
    %141 = vperm.xlu0 %140, %v124
    %v142 = vpop.permute.xlu0 %141
    %v143 = vlaneseq
    %v144 = vshrl.u32 %v143, 7
    %v145 = vadd.s32 %v144, 24
    %146 = vset.pattern.permute.xlu0 %v145
    %147 = vperm.xlu0 %146, %v124
    %v148 = vpop.permute.xlu0 %147
    %v149 = vlaneseq
    %v150 = vshrl.u32 %v149, 7
    %v151 = vadd.s32 %v150, 32
    %152 = vset.pattern.permute.xlu0 %v151
    %153 = vperm.xlu0 %152, %v124
    %v154 = vpop.permute.xlu0 %153
    %v155 = vlaneseq
    %v156 = vshrl.u32 %v155, 7
    %v157 = vadd.s32 %v156, 40
    %158 = vset.pattern.permute.xlu0 %v157
    %159 = vperm.xlu0 %158, %v124
    %v160 = vpop.permute.xlu0 %159
    %v161 = vlaneseq
    %v162 = vshrl.u32 %v161, 7
    %v163 = vadd.s32 %v162, 48
    %164 = vset.pattern.permute.xlu0 %v163
    %165 = vperm.xlu0 %164, %v124
    %v166 = vpop.permute.xlu0 %165
    %v167 = vlaneseq
    %v168 = vshrl.u32 %v167, 7
    %v169 = vadd.s32 %v168, 56
    %170 = vset.pattern.permute.xlu0 %v169
    %171 = vperm.xlu0 %170, %v124
    %v172 = vpop.permute.xlu0 %171
    %v173 = vlaneseq
    %v174 = vshrl.u32 %v173, 7
    %v175 = vadd.s32 %v174, 64
    %176 = vset.pattern.permute.xlu0 %v175
    %177 = vperm.xlu0 %176, %v124
    %v178 = vpop.permute.xlu0 %177
    %v179 = vlaneseq
    %v180 = vshrl.u32 %v179, 7
    %v181 = vadd.s32 %v180, 72
    %182 = vset.pattern.permute.xlu0 %v181
    %183 = vperm.xlu0 %182, %v124
    %v184 = vpop.permute.xlu0 %183
    %v185 = vlaneseq
    %v186 = vshrl.u32 %v185, 7
    %v187 = vadd.s32 %v186, 80
    %188 = vset.pattern.permute.xlu0 %v187
    %189 = vperm.xlu0 %188, %v124
    %v190 = vpop.permute.xlu0 %189
    %v191 = vlaneseq
    %v192 = vshrl.u32 %v191, 7
    %v193 = vadd.s32 %v192, 88
    %194 = vset.pattern.permute.xlu0 %v193
    %195 = vperm.xlu0 %194, %v124
    %v196 = vpop.permute.xlu0 %195
    %v197 = vlaneseq
    %v198 = vshrl.u32 %v197, 7
    %v199 = vadd.s32 %v198, 96
    %200 = vset.pattern.permute.xlu0 %v199
    %201 = vperm.xlu0 %200, %v124
    %v202 = vpop.permute.xlu0 %201
    %v203 = vlaneseq
    %v204 = vshrl.u32 %v203, 7
    %v205 = vadd.s32 %v204, 104
    %206 = vset.pattern.permute.xlu0 %v205
    %207 = vperm.xlu0 %206, %v124
    %v208 = vpop.permute.xlu0 %207
    %v209 = vlaneseq
    %v210 = vshrl.u32 %v209, 7
    %v211 = vadd.s32 %v210, 112
    %212 = vset.pattern.permute.xlu0 %v211
    %213 = vperm.xlu0 %212, %v124
    %v214 = vpop.permute.xlu0 %213
    %v215 = vlaneseq
    %v216 = vshrl.u32 %v215, 7
    %v217 = vadd.s32 %v216, 120
    %218 = vset.pattern.permute.xlu0 %v217
    %219 = vperm.xlu0 %218, %v124
    %v220 = vpop.permute.xlu0 %219
    %v221 = vperm.slane %v25, 2
    %v222 = vlaneseq
    %v223 = vshrl.u32 %v222, 7
    %225 = vset.pattern.permute.xlu0 %v223
    %226 = vperm.xlu0 %225, %v221
    %v227 = vpop.permute.xlu0 %226
    %v228 = vlaneseq
    %v229 = vshrl.u32 %v228, 7
    %v230 = vadd.s32 %v229, 8
    %231 = vset.pattern.permute.xlu0 %v230
    %232 = vperm.xlu0 %231, %v221
    %v233 = vpop.permute.xlu0 %232
    %v234 = vlaneseq
    %v235 = vshrl.u32 %v234, 7
    %v236 = vadd.s32 %v235, 16
    %237 = vset.pattern.permute.xlu0 %v236
    %238 = vperm.xlu0 %237, %v221
    %v239 = vpop.permute.xlu0 %238
    %v240 = vlaneseq
    %v241 = vshrl.u32 %v240, 7
    %v242 = vadd.s32 %v241, 24
    %243 = vset.pattern.permute.xlu0 %v242
    %244 = vperm.xlu0 %243, %v221
    %v245 = vpop.permute.xlu0 %244
    %v246 = vlaneseq
    %v247 = vshrl.u32 %v246, 7
    %v248 = vadd.s32 %v247, 32
    %249 = vset.pattern.permute.xlu0 %v248
    %250 = vperm.xlu0 %249, %v221
    %v251 = vpop.permute.xlu0 %250
    %v252 = vlaneseq
    %v253 = vshrl.u32 %v252, 7
    %v254 = vadd.s32 %v253, 40
    %255 = vset.pattern.permute.xlu0 %v254
    %256 = vperm.xlu0 %255, %v221
    %v257 = vpop.permute.xlu0 %256
    %v258 = vlaneseq
    %v259 = vshrl.u32 %v258, 7
    %v260 = vadd.s32 %v259, 48
    %261 = vset.pattern.permute.xlu0 %v260
    %262 = vperm.xlu0 %261, %v221
    %v263 = vpop.permute.xlu0 %262
    %v264 = vlaneseq
    %v265 = vshrl.u32 %v264, 7
    %v266 = vadd.s32 %v265, 56
    %267 = vset.pattern.permute.xlu0 %v266
    %268 = vperm.xlu0 %267, %v221
    %v269 = vpop.permute.xlu0 %268
    %v270 = vlaneseq
    %v271 = vshrl.u32 %v270, 7
    %v272 = vadd.s32 %v271, 64
    %273 = vset.pattern.permute.xlu0 %v272
    %274 = vperm.xlu0 %273, %v221
    %v275 = vpop.permute.xlu0 %274
    %v276 = vlaneseq
    %v277 = vshrl.u32 %v276, 7
    %v278 = vadd.s32 %v277, 72
    %279 = vset.pattern.permute.xlu0 %v278
    %280 = vperm.xlu0 %279, %v221
    %v281 = vpop.permute.xlu0 %280
    %v282 = vlaneseq
    %v283 = vshrl.u32 %v282, 7
    %v284 = vadd.s32 %v283, 80
    %285 = vset.pattern.permute.xlu0 %v284
    %286 = vperm.xlu0 %285, %v221
    %v287 = vpop.permute.xlu0 %286
    %v288 = vlaneseq
    %v289 = vshrl.u32 %v288, 7
    %v290 = vadd.s32 %v289, 88
    %291 = vset.pattern.permute.xlu0 %v290
    %292 = vperm.xlu0 %291, %v221
    %v293 = vpop.permute.xlu0 %292
    %v294 = vlaneseq
    %v295 = vshrl.u32 %v294, 7
    %v296 = vadd.s32 %v295, 96
    %297 = vset.pattern.permute.xlu0 %v296
    %298 = vperm.xlu0 %297, %v221
    %v299 = vpop.permute.xlu0 %298
    %v300 = vlaneseq
    %v301 = vshrl.u32 %v300, 7
    %v302 = vadd.s32 %v301, 104
    %303 = vset.pattern.permute.xlu0 %v302
    %304 = vperm.xlu0 %303, %v221
    %v305 = vpop.permute.xlu0 %304
    %v306 = vlaneseq
    %v307 = vshrl.u32 %v306, 7
    %v308 = vadd.s32 %v307, 112
    %309 = vset.pattern.permute.xlu0 %v308
    %310 = vperm.xlu0 %309, %v221
    %v311 = vpop.permute.xlu0 %310
    %v312 = vlaneseq
    %v313 = vshrl.u32 %v312, 7
    %v314 = vadd.s32 %v313, 120
    %315 = vset.pattern.permute.xlu0 %v314
    %316 = vperm.xlu0 %315, %v221
    %v317 = vpop.permute.xlu0 %316
    %v318 = vperm.slane %v25, 3
    %v319 = vlaneseq
    %v320 = vshrl.u32 %v319, 7
    %322 = vset.pattern.permute.xlu0 %v320
    %323 = vperm.xlu0 %322, %v318
    %v324 = vpop.permute.xlu0 %323
    %v325 = vlaneseq
    %v326 = vshrl.u32 %v325, 7
    %v327 = vadd.s32 %v326, 8
    %328 = vset.pattern.permute.xlu0 %v327
    %329 = vperm.xlu0 %328, %v318
    %v330 = vpop.permute.xlu0 %329
    %v331 = vlaneseq
    %v332 = vshrl.u32 %v331, 7
    %v333 = vadd.s32 %v332, 16
    %334 = vset.pattern.permute.xlu0 %v333
    %335 = vperm.xlu0 %334, %v318
    %v336 = vpop.permute.xlu0 %335
    %v337 = vlaneseq
    %v338 = vshrl.u32 %v337, 7
    %v339 = vadd.s32 %v338, 24
    %340 = vset.pattern.permute.xlu0 %v339
    %341 = vperm.xlu0 %340, %v318
    %v342 = vpop.permute.xlu0 %341
    %v343 = vlaneseq
    %v344 = vshrl.u32 %v343, 7
    %v345 = vadd.s32 %v344, 32
    %346 = vset.pattern.permute.xlu0 %v345
    %347 = vperm.xlu0 %346, %v318
    %v348 = vpop.permute.xlu0 %347
    %v349 = vlaneseq
    %v350 = vshrl.u32 %v349, 7
    %v351 = vadd.s32 %v350, 40
    %352 = vset.pattern.permute.xlu0 %v351
    %353 = vperm.xlu0 %352, %v318
    %v354 = vpop.permute.xlu0 %353
    %v355 = vlaneseq
    %v356 = vshrl.u32 %v355, 7
    %v357 = vadd.s32 %v356, 48
    %358 = vset.pattern.permute.xlu0 %v357
    %359 = vperm.xlu0 %358, %v318
    %v360 = vpop.permute.xlu0 %359
    %v361 = vlaneseq
    %v362 = vshrl.u32 %v361, 7
    %v363 = vadd.s32 %v362, 56
    %364 = vset.pattern.permute.xlu0 %v363
    %365 = vperm.xlu0 %364, %v318
    %v366 = vpop.permute.xlu0 %365
    %v367 = vlaneseq
    %v368 = vshrl.u32 %v367, 7
    %v369 = vadd.s32 %v368, 64
    %370 = vset.pattern.permute.xlu0 %v369
    %371 = vperm.xlu0 %370, %v318
    %v372 = vpop.permute.xlu0 %371
    %v373 = vlaneseq
    %v374 = vshrl.u32 %v373, 7
    %v375 = vadd.s32 %v374, 72
    %376 = vset.pattern.permute.xlu0 %v375
    %377 = vperm.xlu0 %376, %v318
    %v378 = vpop.permute.xlu0 %377
    %v379 = vlaneseq
    %v380 = vshrl.u32 %v379, 7
    %v381 = vadd.s32 %v380, 80
    %382 = vset.pattern.permute.xlu0 %v381
    %383 = vperm.xlu0 %382, %v318
    %v384 = vpop.permute.xlu0 %383
    %v385 = vlaneseq
    %v386 = vshrl.u32 %v385, 7
    %v387 = vadd.s32 %v386, 88
    %388 = vset.pattern.permute.xlu0 %v387
    %389 = vperm.xlu0 %388, %v318
    %v390 = vpop.permute.xlu0 %389
    %v391 = vlaneseq
    %v392 = vshrl.u32 %v391, 7
    %v393 = vadd.s32 %v392, 96
    %394 = vset.pattern.permute.xlu0 %v393
    %395 = vperm.xlu0 %394, %v318
    %v396 = vpop.permute.xlu0 %395
    %v397 = vlaneseq
    %v398 = vshrl.u32 %v397, 7
    %v399 = vadd.s32 %v398, 104
    %400 = vset.pattern.permute.xlu0 %v399
    %401 = vperm.xlu0 %400, %v318
    %v402 = vpop.permute.xlu0 %401
    %v403 = vlaneseq
    %v404 = vshrl.u32 %v403, 7
    %v405 = vadd.s32 %v404, 112
    %406 = vset.pattern.permute.xlu0 %v405
    %407 = vperm.xlu0 %406, %v318
    %v408 = vpop.permute.xlu0 %407
    %v409 = vlaneseq
    %v410 = vshrl.u32 %v409, 7
    %v411 = vadd.s32 %v410, 120
    %412 = vset.pattern.permute.xlu0 %v411
    %413 = vperm.xlu0 %412, %v318
    %v414 = vpop.permute.xlu0 %413
    %v415 = vperm.slane %v25, 4
    %v416 = vlaneseq
    %v417 = vshrl.u32 %v416, 7
    %419 = vset.pattern.permute.xlu0 %v417
    %420 = vperm.xlu0 %419, %v415
    %v421 = vpop.permute.xlu0 %420
    %v422 = vlaneseq
    %v423 = vshrl.u32 %v422, 7
    %v424 = vadd.s32 %v423, 8
    %425 = vset.pattern.permute.xlu0 %v424
    %426 = vperm.xlu0 %425, %v415
    %v427 = vpop.permute.xlu0 %426
    %v428 = vlaneseq
    %v429 = vshrl.u32 %v428, 7
    %v430 = vadd.s32 %v429, 16
    %431 = vset.pattern.permute.xlu0 %v430
    %432 = vperm.xlu0 %431, %v415
    %v433 = vpop.permute.xlu0 %432
    %v434 = vlaneseq
    %v435 = vshrl.u32 %v434, 7
    %v436 = vadd.s32 %v435, 24
    %437 = vset.pattern.permute.xlu0 %v436
    %438 = vperm.xlu0 %437, %v415
    %v439 = vpop.permute.xlu0 %438
    %v440 = vlaneseq
    %v441 = vshrl.u32 %v440, 7
    %v442 = vadd.s32 %v441, 32
    %443 = vset.pattern.permute.xlu0 %v442
    %444 = vperm.xlu0 %443, %v415
    %v445 = vpop.permute.xlu0 %444
    %v446 = vlaneseq
    %v447 = vshrl.u32 %v446, 7
    %v448 = vadd.s32 %v447, 40
    %449 = vset.pattern.permute.xlu0 %v448
    %450 = vperm.xlu0 %449, %v415
    %v451 = vpop.permute.xlu0 %450
    %v452 = vlaneseq
    %v453 = vshrl.u32 %v452, 7
    %v454 = vadd.s32 %v453, 48
    %455 = vset.pattern.permute.xlu0 %v454
    %456 = vperm.xlu0 %455, %v415
    %v457 = vpop.permute.xlu0 %456
    %v458 = vlaneseq
    %v459 = vshrl.u32 %v458, 7
    %v460 = vadd.s32 %v459, 56
    %461 = vset.pattern.permute.xlu0 %v460
    %462 = vperm.xlu0 %461, %v415
    %v463 = vpop.permute.xlu0 %462
    %v464 = vlaneseq
    %v465 = vshrl.u32 %v464, 7
    %v466 = vadd.s32 %v465, 64
    %467 = vset.pattern.permute.xlu0 %v466
    %468 = vperm.xlu0 %467, %v415
    %v469 = vpop.permute.xlu0 %468
    %v470 = vlaneseq
    %v471 = vshrl.u32 %v470, 7
    %v472 = vadd.s32 %v471, 72
    %473 = vset.pattern.permute.xlu0 %v472
    %474 = vperm.xlu0 %473, %v415
    %v475 = vpop.permute.xlu0 %474
    %v476 = vlaneseq
    %v477 = vshrl.u32 %v476, 7
    %v478 = vadd.s32 %v477, 80
    %479 = vset.pattern.permute.xlu0 %v478
    %480 = vperm.xlu0 %479, %v415
    %v481 = vpop.permute.xlu0 %480
    %v482 = vlaneseq
    %v483 = vshrl.u32 %v482, 7
    %v484 = vadd.s32 %v483, 88
    %485 = vset.pattern.permute.xlu0 %v484
    %486 = vperm.xlu0 %485, %v415
    %v487 = vpop.permute.xlu0 %486
    %v488 = vlaneseq
    %v489 = vshrl.u32 %v488, 7
    %v490 = vadd.s32 %v489, 96
    %491 = vset.pattern.permute.xlu0 %v490
    %492 = vperm.xlu0 %491, %v415
    %v493 = vpop.permute.xlu0 %492
    %v494 = vlaneseq
    %v495 = vshrl.u32 %v494, 7
    %v496 = vadd.s32 %v495, 104
    %497 = vset.pattern.permute.xlu0 %v496
    %498 = vperm.xlu0 %497, %v415
    %v499 = vpop.permute.xlu0 %498
    %v500 = vlaneseq
    %v501 = vshrl.u32 %v500, 7
    %v502 = vadd.s32 %v501, 112
    %503 = vset.pattern.permute.xlu0 %v502
    %504 = vperm.xlu0 %503, %v415
    %v505 = vpop.permute.xlu0 %504
    %v506 = vlaneseq
    %v507 = vshrl.u32 %v506, 7
    %v508 = vadd.s32 %v507, 120
    %509 = vset.pattern.permute.xlu0 %v508
    %510 = vperm.xlu0 %509, %v415
    %v511 = vpop.permute.xlu0 %510
    %v512 = vperm.slane %v25, 5
    %v513 = vlaneseq
    %v514 = vshrl.u32 %v513, 7
    %516 = vset.pattern.permute.xlu0 %v514
    %517 = vperm.xlu0 %516, %v512
    %v518 = vpop.permute.xlu0 %517
    %v519 = vlaneseq
    %v520 = vshrl.u32 %v519, 7
    %v521 = vadd.s32 %v520, 8
    %522 = vset.pattern.permute.xlu0 %v521
    %523 = vperm.xlu0 %522, %v512
    %v524 = vpop.permute.xlu0 %523
    %v525 = vlaneseq
    %v526 = vshrl.u32 %v525, 7
    %v527 = vadd.s32 %v526, 16
    %528 = vset.pattern.permute.xlu0 %v527
    %529 = vperm.xlu0 %528, %v512
    %v530 = vpop.permute.xlu0 %529
    %v531 = vlaneseq
    %v532 = vshrl.u32 %v531, 7
    %v533 = vadd.s32 %v532, 24
    %534 = vset.pattern.permute.xlu0 %v533
    %535 = vperm.xlu0 %534, %v512
    %v536 = vpop.permute.xlu0 %535
    %v537 = vlaneseq
    %v538 = vshrl.u32 %v537, 7
    %v539 = vadd.s32 %v538, 32
    %540 = vset.pattern.permute.xlu0 %v539
    %541 = vperm.xlu0 %540, %v512
    %v542 = vpop.permute.xlu0 %541
    %v543 = vlaneseq
    %v544 = vshrl.u32 %v543, 7
    %v545 = vadd.s32 %v544, 40
    %546 = vset.pattern.permute.xlu0 %v545
    %547 = vperm.xlu0 %546, %v512
    %v548 = vpop.permute.xlu0 %547
    %v549 = vlaneseq
    %v550 = vshrl.u32 %v549, 7
    %v551 = vadd.s32 %v550, 48
    %552 = vset.pattern.permute.xlu0 %v551
    %553 = vperm.xlu0 %552, %v512
    %v554 = vpop.permute.xlu0 %553
    %v555 = vlaneseq
    %v556 = vshrl.u32 %v555, 7
    %v557 = vadd.s32 %v556, 56
    %558 = vset.pattern.permute.xlu0 %v557
    %559 = vperm.xlu0 %558, %v512
    %v560 = vpop.permute.xlu0 %559
    %v561 = vlaneseq
    %v562 = vshrl.u32 %v561, 7
    %v563 = vadd.s32 %v562, 64
    %564 = vset.pattern.permute.xlu0 %v563
    %565 = vperm.xlu0 %564, %v512
    %v566 = vpop.permute.xlu0 %565
    %v567 = vlaneseq
    %v568 = vshrl.u32 %v567, 7
    %v569 = vadd.s32 %v568, 72
    %570 = vset.pattern.permute.xlu0 %v569
    %571 = vperm.xlu0 %570, %v512
    %v572 = vpop.permute.xlu0 %571
    %v573 = vlaneseq
    %v574 = vshrl.u32 %v573, 7
    %v575 = vadd.s32 %v574, 80
    %576 = vset.pattern.permute.xlu0 %v575
    %577 = vperm.xlu0 %576, %v512
    %v578 = vpop.permute.xlu0 %577
    %v579 = vlaneseq
    %v580 = vshrl.u32 %v579, 7
    %v581 = vadd.s32 %v580, 88
    %582 = vset.pattern.permute.xlu0 %v581
    %583 = vperm.xlu0 %582, %v512
    %v584 = vpop.permute.xlu0 %583
    %v585 = vlaneseq
    %v586 = vshrl.u32 %v585, 7
    %v587 = vadd.s32 %v586, 96
    %588 = vset.pattern.permute.xlu0 %v587
    %589 = vperm.xlu0 %588, %v512
    %v590 = vpop.permute.xlu0 %589
    %v591 = vlaneseq
    %v592 = vshrl.u32 %v591, 7
    %v593 = vadd.s32 %v592, 104
    %594 = vset.pattern.permute.xlu0 %v593
    %595 = vperm.xlu0 %594, %v512
    %v596 = vpop.permute.xlu0 %595
    %v597 = vlaneseq
    %v598 = vshrl.u32 %v597, 7
    %v599 = vadd.s32 %v598, 112
    %600 = vset.pattern.permute.xlu0 %v599
    %601 = vperm.xlu0 %600, %v512
    %v602 = vpop.permute.xlu0 %601
    %v603 = vlaneseq
    %v604 = vshrl.u32 %v603, 7
    %v605 = vadd.s32 %v604, 120
    %606 = vset.pattern.permute.xlu0 %v605
    %607 = vperm.xlu0 %606, %v512
    %v608 = vpop.permute.xlu0 %607
    %v609 = vperm.slane %v25, 6
    %v610 = vlaneseq
    %v611 = vshrl.u32 %v610, 7
    %613 = vset.pattern.permute.xlu0 %v611
    %614 = vperm.xlu0 %613, %v609
    %v615 = vpop.permute.xlu0 %614
    %v616 = vlaneseq
    %v617 = vshrl.u32 %v616, 7
    %v618 = vadd.s32 %v617, 8
    %619 = vset.pattern.permute.xlu0 %v618
    %620 = vperm.xlu0 %619, %v609
    %v621 = vpop.permute.xlu0 %620
    %v622 = vlaneseq
    %v623 = vshrl.u32 %v622, 7
    %v624 = vadd.s32 %v623, 16
    %625 = vset.pattern.permute.xlu0 %v624
    %626 = vperm.xlu0 %625, %v609
    %v627 = vpop.permute.xlu0 %626
    %v628 = vlaneseq
    %v629 = vshrl.u32 %v628, 7
    %v630 = vadd.s32 %v629, 24
    %631 = vset.pattern.permute.xlu0 %v630
    %632 = vperm.xlu0 %631, %v609
    %v633 = vpop.permute.xlu0 %632
    %v634 = vlaneseq
    %v635 = vshrl.u32 %v634, 7
    %v636 = vadd.s32 %v635, 32
    %637 = vset.pattern.permute.xlu0 %v636
    %638 = vperm.xlu0 %637, %v609
    %v639 = vpop.permute.xlu0 %638
    %v640 = vlaneseq
    %v641 = vshrl.u32 %v640, 7
    %v642 = vadd.s32 %v641, 40
    %643 = vset.pattern.permute.xlu0 %v642
    %644 = vperm.xlu0 %643, %v609
    %v645 = vpop.permute.xlu0 %644
    %v646 = vlaneseq
    %v647 = vshrl.u32 %v646, 7
    %v648 = vadd.s32 %v647, 48
    %649 = vset.pattern.permute.xlu0 %v648
    %650 = vperm.xlu0 %649, %v609
    %v651 = vpop.permute.xlu0 %650
    %v652 = vlaneseq
    %v653 = vshrl.u32 %v652, 7
    %v654 = vadd.s32 %v653, 56
    %655 = vset.pattern.permute.xlu0 %v654
    %656 = vperm.xlu0 %655, %v609
    %v657 = vpop.permute.xlu0 %656
    %v658 = vlaneseq
    %v659 = vshrl.u32 %v658, 7
    %v660 = vadd.s32 %v659, 64
    %661 = vset.pattern.permute.xlu0 %v660
    %662 = vperm.xlu0 %661, %v609
    %v663 = vpop.permute.xlu0 %662
    %v664 = vlaneseq
    %v665 = vshrl.u32 %v664, 7
    %v666 = vadd.s32 %v665, 72
    %667 = vset.pattern.permute.xlu0 %v666
    %668 = vperm.xlu0 %667, %v609
    %v669 = vpop.permute.xlu0 %668
    %v670 = vlaneseq
    %v671 = vshrl.u32 %v670, 7
    %v672 = vadd.s32 %v671, 80
    %673 = vset.pattern.permute.xlu0 %v672
    %674 = vperm.xlu0 %673, %v609
    %v675 = vpop.permute.xlu0 %674
    %v676 = vlaneseq
    %v677 = vshrl.u32 %v676, 7
    %v678 = vadd.s32 %v677, 88
    %679 = vset.pattern.permute.xlu0 %v678
    %680 = vperm.xlu0 %679, %v609
    %v681 = vpop.permute.xlu0 %680
    %v682 = vlaneseq
    %v683 = vshrl.u32 %v682, 7
    %v684 = vadd.s32 %v683, 96
    %685 = vset.pattern.permute.xlu0 %v684
    %686 = vperm.xlu0 %685, %v609
    %v687 = vpop.permute.xlu0 %686
    %v688 = vlaneseq
    %v689 = vshrl.u32 %v688, 7
    %v690 = vadd.s32 %v689, 104
    %691 = vset.pattern.permute.xlu0 %v690
    %692 = vperm.xlu0 %691, %v609
    %v693 = vpop.permute.xlu0 %692
    %v694 = vlaneseq
    %v695 = vshrl.u32 %v694, 7
    %v696 = vadd.s32 %v695, 112
    %697 = vset.pattern.permute.xlu0 %v696
    %698 = vperm.xlu0 %697, %v609
    %v699 = vpop.permute.xlu0 %698
    %v700 = vlaneseq
    %v701 = vshrl.u32 %v700, 7
    %v702 = vadd.s32 %v701, 120
    %703 = vset.pattern.permute.xlu0 %v702
    %704 = vperm.xlu0 %703, %v609
    %v705 = vpop.permute.xlu0 %704
    %v706 = vperm.slane %v25, 7
    %v707 = vlaneseq
    %v708 = vshrl.u32 %v707, 7
    %710 = vset.pattern.permute.xlu0 %v708
    %711 = vperm.xlu0 %710, %v706
    %v712 = vpop.permute.xlu0 %711
    %v713 = vlaneseq
    %v714 = vshrl.u32 %v713, 7
    %v715 = vadd.s32 %v714, 8
    %716 = vset.pattern.permute.xlu0 %v715
    %717 = vperm.xlu0 %716, %v706
    %v718 = vpop.permute.xlu0 %717
    %v719 = vlaneseq
    %v720 = vshrl.u32 %v719, 7
    %v721 = vadd.s32 %v720, 16
    %722 = vset.pattern.permute.xlu0 %v721
    %723 = vperm.xlu0 %722, %v706
    %v724 = vpop.permute.xlu0 %723
    %v725 = vlaneseq
    %v726 = vshrl.u32 %v725, 7
    %v727 = vadd.s32 %v726, 24
    %728 = vset.pattern.permute.xlu0 %v727
    %729 = vperm.xlu0 %728, %v706
    %v730 = vpop.permute.xlu0 %729
    %v731 = vlaneseq
    %v732 = vshrl.u32 %v731, 7
    %v733 = vadd.s32 %v732, 32
    %734 = vset.pattern.permute.xlu0 %v733
    %735 = vperm.xlu0 %734, %v706
    %v736 = vpop.permute.xlu0 %735
    %v737 = vlaneseq
    %v738 = vshrl.u32 %v737, 7
    %v739 = vadd.s32 %v738, 40
    %740 = vset.pattern.permute.xlu0 %v739
    %741 = vperm.xlu0 %740, %v706
    %v742 = vpop.permute.xlu0 %741
    %v743 = vlaneseq
    %v744 = vshrl.u32 %v743, 7
    %v745 = vadd.s32 %v744, 48
    %746 = vset.pattern.permute.xlu0 %v745
    %747 = vperm.xlu0 %746, %v706
    %v748 = vpop.permute.xlu0 %747
    %v749 = vlaneseq
    %v750 = vshrl.u32 %v749, 7
    %v751 = vadd.s32 %v750, 56
    %752 = vset.pattern.permute.xlu0 %v751
    %753 = vperm.xlu0 %752, %v706
    %v754 = vpop.permute.xlu0 %753
    %v755 = vlaneseq
    %v756 = vshrl.u32 %v755, 7
    %v757 = vadd.s32 %v756, 64
    %758 = vset.pattern.permute.xlu0 %v757
    %759 = vperm.xlu0 %758, %v706
    %v760 = vpop.permute.xlu0 %759
    %v761 = vlaneseq
    %v762 = vshrl.u32 %v761, 7
    %v763 = vadd.s32 %v762, 72
    %764 = vset.pattern.permute.xlu0 %v763
    %765 = vperm.xlu0 %764, %v706
    %v766 = vpop.permute.xlu0 %765
    %v767 = vlaneseq
    %v768 = vshrl.u32 %v767, 7
    %v769 = vadd.s32 %v768, 80
    %770 = vset.pattern.permute.xlu0 %v769
    %771 = vperm.xlu0 %770, %v706
    %v772 = vpop.permute.xlu0 %771
    %v773 = vlaneseq
    %v774 = vshrl.u32 %v773, 7
    %v775 = vadd.s32 %v774, 88
    %776 = vset.pattern.permute.xlu0 %v775
    %777 = vperm.xlu0 %776, %v706
    %v778 = vpop.permute.xlu0 %777
    %v779 = vlaneseq
    %v780 = vshrl.u32 %v779, 7
    %v781 = vadd.s32 %v780, 96
    %782 = vset.pattern.permute.xlu0 %v781
    %783 = vperm.xlu0 %782, %v706
    %v784 = vpop.permute.xlu0 %783
    %v785 = vlaneseq
    %v786 = vshrl.u32 %v785, 7
    %v787 = vadd.s32 %v786, 104
    %788 = vset.pattern.permute.xlu0 %v787
    %789 = vperm.xlu0 %788, %v706
    %v790 = vpop.permute.xlu0 %789
    %v791 = vlaneseq
    %v792 = vshrl.u32 %v791, 7
    %v793 = vadd.s32 %v792, 112
    %794 = vset.pattern.permute.xlu0 %v793
    %795 = vperm.xlu0 %794, %v706
    %v796 = vpop.permute.xlu0 %795
    %v797 = vlaneseq
    %v798 = vshrl.u32 %v797, 7
    %v799 = vadd.s32 %v798, 120
    %800 = vset.pattern.permute.xlu0 %v799
    %801 = vperm.xlu0 %800, %v706
    %v802 = vpop.permute.xlu0 %801
    %v803 = vperm.slane %v26, 0
    %v804 = vlaneseq
    %v805 = vshrl.u32 %v804, 7
    %807 = vset.pattern.permute.xlu0 %v805
    %808 = vperm.xlu0 %807, %v803
    %v809 = vpop.permute.xlu0 %808
    %v810 = vlaneseq
    %v811 = vshrl.u32 %v810, 7
    %v812 = vadd.s32 %v811, 8
    %813 = vset.pattern.permute.xlu0 %v812
    %814 = vperm.xlu0 %813, %v803
    %v815 = vpop.permute.xlu0 %814
    %v816 = vlaneseq
    %v817 = vshrl.u32 %v816, 7
    %v818 = vadd.s32 %v817, 16
    %819 = vset.pattern.permute.xlu0 %v818
    %820 = vperm.xlu0 %819, %v803
    %v821 = vpop.permute.xlu0 %820
    %v822 = vlaneseq
    %v823 = vshrl.u32 %v822, 7
    %v824 = vadd.s32 %v823, 24
    %825 = vset.pattern.permute.xlu0 %v824
    %826 = vperm.xlu0 %825, %v803
    %v827 = vpop.permute.xlu0 %826
    %v828 = vlaneseq
    %v829 = vshrl.u32 %v828, 7
    %v830 = vadd.s32 %v829, 32
    %831 = vset.pattern.permute.xlu0 %v830
    %832 = vperm.xlu0 %831, %v803
    %v833 = vpop.permute.xlu0 %832
    %v834 = vlaneseq
    %v835 = vshrl.u32 %v834, 7
    %v836 = vadd.s32 %v835, 40
    %837 = vset.pattern.permute.xlu0 %v836
    %838 = vperm.xlu0 %837, %v803
    %v839 = vpop.permute.xlu0 %838
    %v840 = vlaneseq
    %v841 = vshrl.u32 %v840, 7
    %v842 = vadd.s32 %v841, 48
    %843 = vset.pattern.permute.xlu0 %v842
    %844 = vperm.xlu0 %843, %v803
    %v845 = vpop.permute.xlu0 %844
    %v846 = vlaneseq
    %v847 = vshrl.u32 %v846, 7
    %v848 = vadd.s32 %v847, 56
    %849 = vset.pattern.permute.xlu0 %v848
    %850 = vperm.xlu0 %849, %v803
    %v851 = vpop.permute.xlu0 %850
    %v852 = vlaneseq
    %v853 = vshrl.u32 %v852, 7
    %v854 = vadd.s32 %v853, 64
    %855 = vset.pattern.permute.xlu0 %v854
    %856 = vperm.xlu0 %855, %v803
    %v857 = vpop.permute.xlu0 %856
    %v858 = vlaneseq
    %v859 = vshrl.u32 %v858, 7
    %v860 = vadd.s32 %v859, 72
    %861 = vset.pattern.permute.xlu0 %v860
    %862 = vperm.xlu0 %861, %v803
    %v863 = vpop.permute.xlu0 %862
    %v864 = vlaneseq
    %v865 = vshrl.u32 %v864, 7
    %v866 = vadd.s32 %v865, 80
    %867 = vset.pattern.permute.xlu0 %v866
    %868 = vperm.xlu0 %867, %v803
    %v869 = vpop.permute.xlu0 %868
    %v870 = vlaneseq
    %v871 = vshrl.u32 %v870, 7
    %v872 = vadd.s32 %v871, 88
    %873 = vset.pattern.permute.xlu0 %v872
    %874 = vperm.xlu0 %873, %v803
    %v875 = vpop.permute.xlu0 %874
    %v876 = vlaneseq
    %v877 = vshrl.u32 %v876, 7
    %v878 = vadd.s32 %v877, 96
    %879 = vset.pattern.permute.xlu0 %v878
    %880 = vperm.xlu0 %879, %v803
    %v881 = vpop.permute.xlu0 %880
    %v882 = vlaneseq
    %v883 = vshrl.u32 %v882, 7
    %v884 = vadd.s32 %v883, 104
    %885 = vset.pattern.permute.xlu0 %v884
    %886 = vperm.xlu0 %885, %v803
    %v887 = vpop.permute.xlu0 %886
    %v888 = vlaneseq
    %v889 = vshrl.u32 %v888, 7
    %v890 = vadd.s32 %v889, 112
    %891 = vset.pattern.permute.xlu0 %v890
    %892 = vperm.xlu0 %891, %v803
    %v893 = vpop.permute.xlu0 %892
    %v894 = vlaneseq
    %v895 = vshrl.u32 %v894, 7
    %v896 = vadd.s32 %v895, 120
    %897 = vset.pattern.permute.xlu0 %v896
    %898 = vperm.xlu0 %897, %v803
    %v899 = vpop.permute.xlu0 %898
    %v900 = vperm.slane %v26, 1
    %v901 = vlaneseq
    %v902 = vshrl.u32 %v901, 7
    %904 = vset.pattern.permute.xlu0 %v902
    %905 = vperm.xlu0 %904, %v900
    %v906 = vpop.permute.xlu0 %905
    %v907 = vlaneseq
    %v908 = vshrl.u32 %v907, 7
    %v909 = vadd.s32 %v908, 8
    %910 = vset.pattern.permute.xlu0 %v909
    %911 = vperm.xlu0 %910, %v900
    %v912 = vpop.permute.xlu0 %911
    %v913 = vlaneseq
    %v914 = vshrl.u32 %v913, 7
    %v915 = vadd.s32 %v914, 16
    %916 = vset.pattern.permute.xlu0 %v915
    %917 = vperm.xlu0 %916, %v900
    %v918 = vpop.permute.xlu0 %917
    %v919 = vlaneseq
    %v920 = vshrl.u32 %v919, 7
    %v921 = vadd.s32 %v920, 24
    %922 = vset.pattern.permute.xlu0 %v921
    %923 = vperm.xlu0 %922, %v900
    %v924 = vpop.permute.xlu0 %923
    %v925 = vlaneseq
    %v926 = vshrl.u32 %v925, 7
    %v927 = vadd.s32 %v926, 32
    %928 = vset.pattern.permute.xlu0 %v927
    %929 = vperm.xlu0 %928, %v900
    %v930 = vpop.permute.xlu0 %929
    %v931 = vlaneseq
    %v932 = vshrl.u32 %v931, 7
    %v933 = vadd.s32 %v932, 40
    %934 = vset.pattern.permute.xlu0 %v933
    %935 = vperm.xlu0 %934, %v900
    %v936 = vpop.permute.xlu0 %935
    %v937 = vlaneseq
    %v938 = vshrl.u32 %v937, 7
    %v939 = vadd.s32 %v938, 48
    %940 = vset.pattern.permute.xlu0 %v939
    %941 = vperm.xlu0 %940, %v900
    %v942 = vpop.permute.xlu0 %941
    %v943 = vlaneseq
    %v944 = vshrl.u32 %v943, 7
    %v945 = vadd.s32 %v944, 56
    %946 = vset.pattern.permute.xlu0 %v945
    %947 = vperm.xlu0 %946, %v900
    %v948 = vpop.permute.xlu0 %947
    %v949 = vlaneseq
    %v950 = vshrl.u32 %v949, 7
    %v951 = vadd.s32 %v950, 64
    %952 = vset.pattern.permute.xlu0 %v951
    %953 = vperm.xlu0 %952, %v900
    %v954 = vpop.permute.xlu0 %953
    %v955 = vlaneseq
    %v956 = vshrl.u32 %v955, 7
    %v957 = vadd.s32 %v956, 72
    %958 = vset.pattern.permute.xlu0 %v957
    %959 = vperm.xlu0 %958, %v900
    %v960 = vpop.permute.xlu0 %959
    %v961 = vlaneseq
    %v962 = vshrl.u32 %v961, 7
    %v963 = vadd.s32 %v962, 80
    %964 = vset.pattern.permute.xlu0 %v963
    %965 = vperm.xlu0 %964, %v900
    %v966 = vpop.permute.xlu0 %965
    %v967 = vlaneseq
    %v968 = vshrl.u32 %v967, 7
    %v969 = vadd.s32 %v968, 88
    %970 = vset.pattern.permute.xlu0 %v969
    %971 = vperm.xlu0 %970, %v900
    %v972 = vpop.permute.xlu0 %971
    %v973 = vlaneseq
    %v974 = vshrl.u32 %v973, 7
    %v975 = vadd.s32 %v974, 96
    %976 = vset.pattern.permute.xlu0 %v975
    %977 = vperm.xlu0 %976, %v900
    %v978 = vpop.permute.xlu0 %977
    %v979 = vlaneseq
    %v980 = vshrl.u32 %v979, 7
    %v981 = vadd.s32 %v980, 104
    %982 = vset.pattern.permute.xlu0 %v981
    %983 = vperm.xlu0 %982, %v900
    %v984 = vpop.permute.xlu0 %983
    %v985 = vlaneseq
    %v986 = vshrl.u32 %v985, 7
    %v987 = vadd.s32 %v986, 112
    %988 = vset.pattern.permute.xlu0 %v987
    %989 = vperm.xlu0 %988, %v900
    %v990 = vpop.permute.xlu0 %989
    %v991 = vlaneseq
    %v992 = vshrl.u32 %v991, 7
    %v993 = vadd.s32 %v992, 120
    %994 = vset.pattern.permute.xlu0 %v993
    %995 = vperm.xlu0 %994, %v900
    %v996 = vpop.permute.xlu0 %995
    %v997 = vperm.slane %v26, 2
    %v998 = vlaneseq
    %v999 = vshrl.u32 %v998, 7
    %1001 = vset.pattern.permute.xlu0 %v999
    %1002 = vperm.xlu0 %1001, %v997
    %v1003 = vpop.permute.xlu0 %1002
    %v1004 = vlaneseq
    %v1005 = vshrl.u32 %v1004, 7
    %v1006 = vadd.s32 %v1005, 8
    %1007 = vset.pattern.permute.xlu0 %v1006
    %1008 = vperm.xlu0 %1007, %v997
    %v1009 = vpop.permute.xlu0 %1008
    %v1010 = vlaneseq
    %v1011 = vshrl.u32 %v1010, 7
    %v1012 = vadd.s32 %v1011, 16
    %1013 = vset.pattern.permute.xlu0 %v1012
    %1014 = vperm.xlu0 %1013, %v997
    %v1015 = vpop.permute.xlu0 %1014
    %v1016 = vlaneseq
    %v1017 = vshrl.u32 %v1016, 7
    %v1018 = vadd.s32 %v1017, 24
    %1019 = vset.pattern.permute.xlu0 %v1018
    %1020 = vperm.xlu0 %1019, %v997
    %v1021 = vpop.permute.xlu0 %1020
    %v1022 = vlaneseq
    %v1023 = vshrl.u32 %v1022, 7
    %v1024 = vadd.s32 %v1023, 32
    %1025 = vset.pattern.permute.xlu0 %v1024
    %1026 = vperm.xlu0 %1025, %v997
    %v1027 = vpop.permute.xlu0 %1026
    %v1028 = vlaneseq
    %v1029 = vshrl.u32 %v1028, 7
    %v1030 = vadd.s32 %v1029, 40
    %1031 = vset.pattern.permute.xlu0 %v1030
    %1032 = vperm.xlu0 %1031, %v997
    %v1033 = vpop.permute.xlu0 %1032
    %v1034 = vlaneseq
    %v1035 = vshrl.u32 %v1034, 7
    %v1036 = vadd.s32 %v1035, 48
    %1037 = vset.pattern.permute.xlu0 %v1036
    %1038 = vperm.xlu0 %1037, %v997
    %v1039 = vpop.permute.xlu0 %1038
    %v1040 = vlaneseq
    %v1041 = vshrl.u32 %v1040, 7
    %v1042 = vadd.s32 %v1041, 56
    %1043 = vset.pattern.permute.xlu0 %v1042
    %1044 = vperm.xlu0 %1043, %v997
    %v1045 = vpop.permute.xlu0 %1044
    %v1046 = vlaneseq
    %v1047 = vshrl.u32 %v1046, 7
    %v1048 = vadd.s32 %v1047, 64
    %1049 = vset.pattern.permute.xlu0 %v1048
    %1050 = vperm.xlu0 %1049, %v997
    %v1051 = vpop.permute.xlu0 %1050
    %v1052 = vlaneseq
    %v1053 = vshrl.u32 %v1052, 7
    %v1054 = vadd.s32 %v1053, 72
    %1055 = vset.pattern.permute.xlu0 %v1054
    %1056 = vperm.xlu0 %1055, %v997
    %v1057 = vpop.permute.xlu0 %1056
    %v1058 = vlaneseq
    %v1059 = vshrl.u32 %v1058, 7
    %v1060 = vadd.s32 %v1059, 80
    %1061 = vset.pattern.permute.xlu0 %v1060
    %1062 = vperm.xlu0 %1061, %v997
    %v1063 = vpop.permute.xlu0 %1062
    %v1064 = vlaneseq
    %v1065 = vshrl.u32 %v1064, 7
    %v1066 = vadd.s32 %v1065, 88
    %1067 = vset.pattern.permute.xlu0 %v1066
    %1068 = vperm.xlu0 %1067, %v997
    %v1069 = vpop.permute.xlu0 %1068
    %v1070 = vlaneseq
    %v1071 = vshrl.u32 %v1070, 7
    %v1072 = vadd.s32 %v1071, 96
    %1073 = vset.pattern.permute.xlu0 %v1072
    %1074 = vperm.xlu0 %1073, %v997
    %v1075 = vpop.permute.xlu0 %1074
    %v1076 = vlaneseq
    %v1077 = vshrl.u32 %v1076, 7
    %v1078 = vadd.s32 %v1077, 104
    %1079 = vset.pattern.permute.xlu0 %v1078
    %1080 = vperm.xlu0 %1079, %v997
    %v1081 = vpop.permute.xlu0 %1080
    %v1082 = vlaneseq
    %v1083 = vshrl.u32 %v1082, 7
    %v1084 = vadd.s32 %v1083, 112
    %1085 = vset.pattern.permute.xlu0 %v1084
    %1086 = vperm.xlu0 %1085, %v997
    %v1087 = vpop.permute.xlu0 %1086
    %v1088 = vlaneseq
    %v1089 = vshrl.u32 %v1088, 7
    %v1090 = vadd.s32 %v1089, 120
    %1091 = vset.pattern.permute.xlu0 %v1090
    %1092 = vperm.xlu0 %1091, %v997
    %v1093 = vpop.permute.xlu0 %1092
    %v1094 = vperm.slane %v26, 3
    %v1095 = vlaneseq
    %v1096 = vshrl.u32 %v1095, 7
    %1098 = vset.pattern.permute.xlu0 %v1096
    %1099 = vperm.xlu0 %1098, %v1094
    %v1100 = vpop.permute.xlu0 %1099
    %v1101 = vlaneseq
    %v1102 = vshrl.u32 %v1101, 7
    %v1103 = vadd.s32 %v1102, 8
    %1104 = vset.pattern.permute.xlu0 %v1103
    %1105 = vperm.xlu0 %1104, %v1094
    %v1106 = vpop.permute.xlu0 %1105
    %v1107 = vlaneseq
    %v1108 = vshrl.u32 %v1107, 7
    %v1109 = vadd.s32 %v1108, 16
    %1110 = vset.pattern.permute.xlu0 %v1109
    %1111 = vperm.xlu0 %1110, %v1094
    %v1112 = vpop.permute.xlu0 %1111
    %v1113 = vlaneseq
    %v1114 = vshrl.u32 %v1113, 7
    %v1115 = vadd.s32 %v1114, 24
    %1116 = vset.pattern.permute.xlu0 %v1115
    %1117 = vperm.xlu0 %1116, %v1094
    %v1118 = vpop.permute.xlu0 %1117
    %v1119 = vlaneseq
    %v1120 = vshrl.u32 %v1119, 7
    %v1121 = vadd.s32 %v1120, 32
    %1122 = vset.pattern.permute.xlu0 %v1121
    %1123 = vperm.xlu0 %1122, %v1094
    %v1124 = vpop.permute.xlu0 %1123
    %v1125 = vlaneseq
    %v1126 = vshrl.u32 %v1125, 7
    %v1127 = vadd.s32 %v1126, 40
    %1128 = vset.pattern.permute.xlu0 %v1127
    %1129 = vperm.xlu0 %1128, %v1094
    %v1130 = vpop.permute.xlu0 %1129
    %v1131 = vlaneseq
    %v1132 = vshrl.u32 %v1131, 7
    %v1133 = vadd.s32 %v1132, 48
    %1134 = vset.pattern.permute.xlu0 %v1133
    %1135 = vperm.xlu0 %1134, %v1094
    %v1136 = vpop.permute.xlu0 %1135
    %v1137 = vlaneseq
    %v1138 = vshrl.u32 %v1137, 7
    %v1139 = vadd.s32 %v1138, 56
    %1140 = vset.pattern.permute.xlu0 %v1139
    %1141 = vperm.xlu0 %1140, %v1094
    %v1142 = vpop.permute.xlu0 %1141
    %v1143 = vlaneseq
    %v1144 = vshrl.u32 %v1143, 7
    %v1145 = vadd.s32 %v1144, 64
    %1146 = vset.pattern.permute.xlu0 %v1145
    %1147 = vperm.xlu0 %1146, %v1094
    %v1148 = vpop.permute.xlu0 %1147
    %v1149 = vlaneseq
    %v1150 = vshrl.u32 %v1149, 7
    %v1151 = vadd.s32 %v1150, 72
    %1152 = vset.pattern.permute.xlu0 %v1151
    %1153 = vperm.xlu0 %1152, %v1094
    %v1154 = vpop.permute.xlu0 %1153
    %v1155 = vlaneseq
    %v1156 = vshrl.u32 %v1155, 7
    %v1157 = vadd.s32 %v1156, 80
    %1158 = vset.pattern.permute.xlu0 %v1157
    %1159 = vperm.xlu0 %1158, %v1094
    %v1160 = vpop.permute.xlu0 %1159
    %v1161 = vlaneseq
    %v1162 = vshrl.u32 %v1161, 7
    %v1163 = vadd.s32 %v1162, 88
    %1164 = vset.pattern.permute.xlu0 %v1163
    %1165 = vperm.xlu0 %1164, %v1094
    %v1166 = vpop.permute.xlu0 %1165
    %v1167 = vlaneseq
    %v1168 = vshrl.u32 %v1167, 7
    %v1169 = vadd.s32 %v1168, 96
    %1170 = vset.pattern.permute.xlu0 %v1169
    %1171 = vperm.xlu0 %1170, %v1094
    %v1172 = vpop.permute.xlu0 %1171
    %v1173 = vlaneseq
    %v1174 = vshrl.u32 %v1173, 7
    %v1175 = vadd.s32 %v1174, 104
    %1176 = vset.pattern.permute.xlu0 %v1175
    %1177 = vperm.xlu0 %1176, %v1094
    %v1178 = vpop.permute.xlu0 %1177
    %v1179 = vlaneseq
    %v1180 = vshrl.u32 %v1179, 7
    %v1181 = vadd.s32 %v1180, 112
    %1182 = vset.pattern.permute.xlu0 %v1181
    %1183 = vperm.xlu0 %1182, %v1094
    %v1184 = vpop.permute.xlu0 %1183
    %v1185 = vlaneseq
    %v1186 = vshrl.u32 %v1185, 7
    %v1187 = vadd.s32 %v1186, 120
    %1188 = vset.pattern.permute.xlu0 %v1187
    %1189 = vperm.xlu0 %1188, %v1094
    %v1190 = vpop.permute.xlu0 %1189
    %v1191 = vperm.slane %v26, 4
    %v1192 = vlaneseq
    %v1193 = vshrl.u32 %v1192, 7
    %1195 = vset.pattern.permute.xlu0 %v1193
    %1196 = vperm.xlu0 %1195, %v1191
    %v1197 = vpop.permute.xlu0 %1196
    %v1198 = vlaneseq
    %v1199 = vshrl.u32 %v1198, 7
    %v1200 = vadd.s32 %v1199, 8
    %1201 = vset.pattern.permute.xlu0 %v1200
    %1202 = vperm.xlu0 %1201, %v1191
    %v1203 = vpop.permute.xlu0 %1202
    %v1204 = vlaneseq
    %v1205 = vshrl.u32 %v1204, 7
    %v1206 = vadd.s32 %v1205, 16
    %1207 = vset.pattern.permute.xlu0 %v1206
    %1208 = vperm.xlu0 %1207, %v1191
    %v1209 = vpop.permute.xlu0 %1208
    %v1210 = vlaneseq
    %v1211 = vshrl.u32 %v1210, 7
    %v1212 = vadd.s32 %v1211, 24
    %1213 = vset.pattern.permute.xlu0 %v1212
    %1214 = vperm.xlu0 %1213, %v1191
    %v1215 = vpop.permute.xlu0 %1214
    %v1216 = vlaneseq
    %v1217 = vshrl.u32 %v1216, 7
    %v1218 = vadd.s32 %v1217, 32
    %1219 = vset.pattern.permute.xlu0 %v1218
    %1220 = vperm.xlu0 %1219, %v1191
    %v1221 = vpop.permute.xlu0 %1220
    %v1222 = vlaneseq
    %v1223 = vshrl.u32 %v1222, 7
    %v1224 = vadd.s32 %v1223, 40
    %1225 = vset.pattern.permute.xlu0 %v1224
    %1226 = vperm.xlu0 %1225, %v1191
    %v1227 = vpop.permute.xlu0 %1226
    %v1228 = vlaneseq
    %v1229 = vshrl.u32 %v1228, 7
    %v1230 = vadd.s32 %v1229, 48
    %1231 = vset.pattern.permute.xlu0 %v1230
    %1232 = vperm.xlu0 %1231, %v1191
    %v1233 = vpop.permute.xlu0 %1232
    %v1234 = vlaneseq
    %v1235 = vshrl.u32 %v1234, 7
    %v1236 = vadd.s32 %v1235, 56
    %1237 = vset.pattern.permute.xlu0 %v1236
    %1238 = vperm.xlu0 %1237, %v1191
    %v1239 = vpop.permute.xlu0 %1238
    %v1240 = vlaneseq
    %v1241 = vshrl.u32 %v1240, 7
    %v1242 = vadd.s32 %v1241, 64
    %1243 = vset.pattern.permute.xlu0 %v1242
    %1244 = vperm.xlu0 %1243, %v1191
    %v1245 = vpop.permute.xlu0 %1244
    %v1246 = vlaneseq
    %v1247 = vshrl.u32 %v1246, 7
    %v1248 = vadd.s32 %v1247, 72
    %1249 = vset.pattern.permute.xlu0 %v1248
    %1250 = vperm.xlu0 %1249, %v1191
    %v1251 = vpop.permute.xlu0 %1250
    %v1252 = vlaneseq
    %v1253 = vshrl.u32 %v1252, 7
    %v1254 = vadd.s32 %v1253, 80
    %1255 = vset.pattern.permute.xlu0 %v1254
    %1256 = vperm.xlu0 %1255, %v1191
    %v1257 = vpop.permute.xlu0 %1256
    %v1258 = vlaneseq
    %v1259 = vshrl.u32 %v1258, 7
    %v1260 = vadd.s32 %v1259, 88
    %1261 = vset.pattern.permute.xlu0 %v1260
    %1262 = vperm.xlu0 %1261, %v1191
    %v1263 = vpop.permute.xlu0 %1262
    %v1264 = vlaneseq
    %v1265 = vshrl.u32 %v1264, 7
    %v1266 = vadd.s32 %v1265, 96
    %1267 = vset.pattern.permute.xlu0 %v1266
    %1268 = vperm.xlu0 %1267, %v1191
    %v1269 = vpop.permute.xlu0 %1268
    %v1270 = vlaneseq
    %v1271 = vshrl.u32 %v1270, 7
    %v1272 = vadd.s32 %v1271, 104
    %1273 = vset.pattern.permute.xlu0 %v1272
    %1274 = vperm.xlu0 %1273, %v1191
    %v1275 = vpop.permute.xlu0 %1274
    %v1276 = vlaneseq
    %v1277 = vshrl.u32 %v1276, 7
    %v1278 = vadd.s32 %v1277, 112
    %1279 = vset.pattern.permute.xlu0 %v1278
    %1280 = vperm.xlu0 %1279, %v1191
    %v1281 = vpop.permute.xlu0 %1280
    %v1282 = vlaneseq
    %v1283 = vshrl.u32 %v1282, 7
    %v1284 = vadd.s32 %v1283, 120
    %1285 = vset.pattern.permute.xlu0 %v1284
    %1286 = vperm.xlu0 %1285, %v1191
    %v1287 = vpop.permute.xlu0 %1286
    %v1288 = vperm.slane %v26, 5
    %v1289 = vlaneseq
    %v1290 = vshrl.u32 %v1289, 7
    %1292 = vset.pattern.permute.xlu0 %v1290
    %1293 = vperm.xlu0 %1292, %v1288
    %v1294 = vpop.permute.xlu0 %1293
    %v1295 = vlaneseq
    %v1296 = vshrl.u32 %v1295, 7
    %v1297 = vadd.s32 %v1296, 8
    %1298 = vset.pattern.permute.xlu0 %v1297
    %1299 = vperm.xlu0 %1298, %v1288
    %v1300 = vpop.permute.xlu0 %1299
    %v1301 = vlaneseq
    %v1302 = vshrl.u32 %v1301, 7
    %v1303 = vadd.s32 %v1302, 16
    %1304 = vset.pattern.permute.xlu0 %v1303
    %1305 = vperm.xlu0 %1304, %v1288
    %v1306 = vpop.permute.xlu0 %1305
    %v1307 = vlaneseq
    %v1308 = vshrl.u32 %v1307, 7
    %v1309 = vadd.s32 %v1308, 24
    %1310 = vset.pattern.permute.xlu0 %v1309
    %1311 = vperm.xlu0 %1310, %v1288
    %v1312 = vpop.permute.xlu0 %1311
    %v1313 = vlaneseq
    %v1314 = vshrl.u32 %v1313, 7
    %v1315 = vadd.s32 %v1314, 32
    %1316 = vset.pattern.permute.xlu0 %v1315
    %1317 = vperm.xlu0 %1316, %v1288
    %v1318 = vpop.permute.xlu0 %1317
    %v1319 = vlaneseq
    %v1320 = vshrl.u32 %v1319, 7
    %v1321 = vadd.s32 %v1320, 40
    %1322 = vset.pattern.permute.xlu0 %v1321
    %1323 = vperm.xlu0 %1322, %v1288
    %v1324 = vpop.permute.xlu0 %1323
    %v1325 = vlaneseq
    %v1326 = vshrl.u32 %v1325, 7
    %v1327 = vadd.s32 %v1326, 48
    %1328 = vset.pattern.permute.xlu0 %v1327
    %1329 = vperm.xlu0 %1328, %v1288
    %v1330 = vpop.permute.xlu0 %1329
    %v1331 = vlaneseq
    %v1332 = vshrl.u32 %v1331, 7
    %v1333 = vadd.s32 %v1332, 56
    %1334 = vset.pattern.permute.xlu0 %v1333
    %1335 = vperm.xlu0 %1334, %v1288
    %v1336 = vpop.permute.xlu0 %1335
    %v1337 = vlaneseq
    %v1338 = vshrl.u32 %v1337, 7
    %v1339 = vadd.s32 %v1338, 64
    %1340 = vset.pattern.permute.xlu0 %v1339
    %1341 = vperm.xlu0 %1340, %v1288
    %v1342 = vpop.permute.xlu0 %1341
    %v1343 = vlaneseq
    %v1344 = vshrl.u32 %v1343, 7
    %v1345 = vadd.s32 %v1344, 72
    %1346 = vset.pattern.permute.xlu0 %v1345
    %1347 = vperm.xlu0 %1346, %v1288
    %v1348 = vpop.permute.xlu0 %1347
    %v1349 = vlaneseq
    %v1350 = vshrl.u32 %v1349, 7
    %v1351 = vadd.s32 %v1350, 80
    %1352 = vset.pattern.permute.xlu0 %v1351
    %1353 = vperm.xlu0 %1352, %v1288
    %v1354 = vpop.permute.xlu0 %1353
    %v1355 = vlaneseq
    %v1356 = vshrl.u32 %v1355, 7
    %v1357 = vadd.s32 %v1356, 88
    %1358 = vset.pattern.permute.xlu0 %v1357
    %1359 = vperm.xlu0 %1358, %v1288
    %v1360 = vpop.permute.xlu0 %1359
    %v1361 = vlaneseq
    %v1362 = vshrl.u32 %v1361, 7
    %v1363 = vadd.s32 %v1362, 96
    %1364 = vset.pattern.permute.xlu0 %v1363
    %1365 = vperm.xlu0 %1364, %v1288
    %v1366 = vpop.permute.xlu0 %1365
    %v1367 = vlaneseq
    %v1368 = vshrl.u32 %v1367, 7
    %v1369 = vadd.s32 %v1368, 104
    %1370 = vset.pattern.permute.xlu0 %v1369
    %1371 = vperm.xlu0 %1370, %v1288
    %v1372 = vpop.permute.xlu0 %1371
    %v1373 = vlaneseq
    %v1374 = vshrl.u32 %v1373, 7
    %v1375 = vadd.s32 %v1374, 112
    %1376 = vset.pattern.permute.xlu0 %v1375
    %1377 = vperm.xlu0 %1376, %v1288
    %v1378 = vpop.permute.xlu0 %1377
    %v1379 = vlaneseq
    %v1380 = vshrl.u32 %v1379, 7
    %v1381 = vadd.s32 %v1380, 120
    %1382 = vset.pattern.permute.xlu0 %v1381
    %1383 = vperm.xlu0 %1382, %v1288
    %v1384 = vpop.permute.xlu0 %1383
    %v1385 = vperm.slane %v26, 6
    %v1386 = vlaneseq
    %v1387 = vshrl.u32 %v1386, 7
    %1389 = vset.pattern.permute.xlu0 %v1387
    %1390 = vperm.xlu0 %1389, %v1385
    %v1391 = vpop.permute.xlu0 %1390
    %v1392 = vlaneseq
    %v1393 = vshrl.u32 %v1392, 7
    %v1394 = vadd.s32 %v1393, 8
    %1395 = vset.pattern.permute.xlu0 %v1394
    %1396 = vperm.xlu0 %1395, %v1385
    %v1397 = vpop.permute.xlu0 %1396
    %v1398 = vlaneseq
    %v1399 = vshrl.u32 %v1398, 7
    %v1400 = vadd.s32 %v1399, 16
    %1401 = vset.pattern.permute.xlu0 %v1400
    %1402 = vperm.xlu0 %1401, %v1385
    %v1403 = vpop.permute.xlu0 %1402
    %v1404 = vlaneseq
    %v1405 = vshrl.u32 %v1404, 7
    %v1406 = vadd.s32 %v1405, 24
    %1407 = vset.pattern.permute.xlu0 %v1406
    %1408 = vperm.xlu0 %1407, %v1385
    %v1409 = vpop.permute.xlu0 %1408
    %v1410 = vlaneseq
    %v1411 = vshrl.u32 %v1410, 7
    %v1412 = vadd.s32 %v1411, 32
    %1413 = vset.pattern.permute.xlu0 %v1412
    %1414 = vperm.xlu0 %1413, %v1385
    %v1415 = vpop.permute.xlu0 %1414
    %v1416 = vlaneseq
    %v1417 = vshrl.u32 %v1416, 7
    %v1418 = vadd.s32 %v1417, 40
    %1419 = vset.pattern.permute.xlu0 %v1418
    %1420 = vperm.xlu0 %1419, %v1385
    %v1421 = vpop.permute.xlu0 %1420
    %v1422 = vlaneseq
    %v1423 = vshrl.u32 %v1422, 7
    %v1424 = vadd.s32 %v1423, 48
    %1425 = vset.pattern.permute.xlu0 %v1424
    %1426 = vperm.xlu0 %1425, %v1385
    %v1427 = vpop.permute.xlu0 %1426
    %v1428 = vlaneseq
    %v1429 = vshrl.u32 %v1428, 7
    %v1430 = vadd.s32 %v1429, 56
    %1431 = vset.pattern.permute.xlu0 %v1430
    %1432 = vperm.xlu0 %1431, %v1385
    %v1433 = vpop.permute.xlu0 %1432
    %v1434 = vlaneseq
    %v1435 = vshrl.u32 %v1434, 7
    %v1436 = vadd.s32 %v1435, 64
    %1437 = vset.pattern.permute.xlu0 %v1436
    %1438 = vperm.xlu0 %1437, %v1385
    %v1439 = vpop.permute.xlu0 %1438
    %v1440 = vlaneseq
    %v1441 = vshrl.u32 %v1440, 7
    %v1442 = vadd.s32 %v1441, 72
    %1443 = vset.pattern.permute.xlu0 %v1442
    %1444 = vperm.xlu0 %1443, %v1385
    %v1445 = vpop.permute.xlu0 %1444
    %v1446 = vlaneseq
    %v1447 = vshrl.u32 %v1446, 7
    %v1448 = vadd.s32 %v1447, 80
    %1449 = vset.pattern.permute.xlu0 %v1448
    %1450 = vperm.xlu0 %1449, %v1385
    %v1451 = vpop.permute.xlu0 %1450
    %v1452 = vlaneseq
    %v1453 = vshrl.u32 %v1452, 7
    %v1454 = vadd.s32 %v1453, 88
    %1455 = vset.pattern.permute.xlu0 %v1454
    %1456 = vperm.xlu0 %1455, %v1385
    %v1457 = vpop.permute.xlu0 %1456
    %v1458 = vlaneseq
    %v1459 = vshrl.u32 %v1458, 7
    %v1460 = vadd.s32 %v1459, 96
    %1461 = vset.pattern.permute.xlu0 %v1460
    %1462 = vperm.xlu0 %1461, %v1385
    %v1463 = vpop.permute.xlu0 %1462
    %v1464 = vlaneseq
    %v1465 = vshrl.u32 %v1464, 7
    %v1466 = vadd.s32 %v1465, 104
    %1467 = vset.pattern.permute.xlu0 %v1466
    %1468 = vperm.xlu0 %1467, %v1385
    %v1469 = vpop.permute.xlu0 %1468
    %v1470 = vlaneseq
    %v1471 = vshrl.u32 %v1470, 7
    %v1472 = vadd.s32 %v1471, 112
    %1473 = vset.pattern.permute.xlu0 %v1472
    %1474 = vperm.xlu0 %1473, %v1385
    %v1475 = vpop.permute.xlu0 %1474
    %v1476 = vlaneseq
    %v1477 = vshrl.u32 %v1476, 7
    %v1478 = vadd.s32 %v1477, 120
    %1479 = vset.pattern.permute.xlu0 %v1478
    %1480 = vperm.xlu0 %1479, %v1385
    %v1481 = vpop.permute.xlu0 %1480
    %v1482 = vperm.slane %v26, 7
    %v1483 = vlaneseq
    %v1484 = vshrl.u32 %v1483, 7
    %1486 = vset.pattern.permute.xlu0 %v1484
    %1487 = vperm.xlu0 %1486, %v1482
    %v1488 = vpop.permute.xlu0 %1487
    %v1489 = vlaneseq
    %v1490 = vshrl.u32 %v1489, 7
    %v1491 = vadd.s32 %v1490, 8
    %1492 = vset.pattern.permute.xlu0 %v1491
    %1493 = vperm.xlu0 %1492, %v1482
    %v1494 = vpop.permute.xlu0 %1493
    %v1495 = vlaneseq
    %v1496 = vshrl.u32 %v1495, 7
    %v1497 = vadd.s32 %v1496, 16
    %1498 = vset.pattern.permute.xlu0 %v1497
    %1499 = vperm.xlu0 %1498, %v1482
    %v1500 = vpop.permute.xlu0 %1499
    %v1501 = vlaneseq
    %v1502 = vshrl.u32 %v1501, 7
    %v1503 = vadd.s32 %v1502, 24
    %1504 = vset.pattern.permute.xlu0 %v1503
    %1505 = vperm.xlu0 %1504, %v1482
    %v1506 = vpop.permute.xlu0 %1505
    %v1507 = vlaneseq
    %v1508 = vshrl.u32 %v1507, 7
    %v1509 = vadd.s32 %v1508, 32
    %1510 = vset.pattern.permute.xlu0 %v1509
    %1511 = vperm.xlu0 %1510, %v1482
    %v1512 = vpop.permute.xlu0 %1511
    %v1513 = vlaneseq
    %v1514 = vshrl.u32 %v1513, 7
    %v1515 = vadd.s32 %v1514, 40
    %1516 = vset.pattern.permute.xlu0 %v1515
    %1517 = vperm.xlu0 %1516, %v1482
    %v1518 = vpop.permute.xlu0 %1517
    %v1519 = vlaneseq
    %v1520 = vshrl.u32 %v1519, 7
    %v1521 = vadd.s32 %v1520, 48
    %1522 = vset.pattern.permute.xlu0 %v1521
    %1523 = vperm.xlu0 %1522, %v1482
    %v1524 = vpop.permute.xlu0 %1523
    %v1525 = vlaneseq
    %v1526 = vshrl.u32 %v1525, 7
    %v1527 = vadd.s32 %v1526, 56
    %1528 = vset.pattern.permute.xlu0 %v1527
    %1529 = vperm.xlu0 %1528, %v1482
    %v1530 = vpop.permute.xlu0 %1529
    %v1531 = vlaneseq
    %v1532 = vshrl.u32 %v1531, 7
    %v1533 = vadd.s32 %v1532, 64
    %1534 = vset.pattern.permute.xlu0 %v1533
    %1535 = vperm.xlu0 %1534, %v1482
    %v1536 = vpop.permute.xlu0 %1535
    %v1537 = vlaneseq
    %v1538 = vshrl.u32 %v1537, 7
    %v1539 = vadd.s32 %v1538, 72
    %1540 = vset.pattern.permute.xlu0 %v1539
    %1541 = vperm.xlu0 %1540, %v1482
    %v1542 = vpop.permute.xlu0 %1541
    %v1543 = vlaneseq
    %v1544 = vshrl.u32 %v1543, 7
    %v1545 = vadd.s32 %v1544, 80
    %1546 = vset.pattern.permute.xlu0 %v1545
    %1547 = vperm.xlu0 %1546, %v1482
    %v1548 = vpop.permute.xlu0 %1547
    %v1549 = vlaneseq
    %v1550 = vshrl.u32 %v1549, 7
    %v1551 = vadd.s32 %v1550, 88
    %1552 = vset.pattern.permute.xlu0 %v1551
    %1553 = vperm.xlu0 %1552, %v1482
    %v1554 = vpop.permute.xlu0 %1553
    %v1555 = vlaneseq
    %v1556 = vshrl.u32 %v1555, 7
    %v1557 = vadd.s32 %v1556, 96
    %1558 = vset.pattern.permute.xlu0 %v1557
    %1559 = vperm.xlu0 %1558, %v1482
    %v1560 = vpop.permute.xlu0 %1559
    %v1561 = vlaneseq
    %v1562 = vshrl.u32 %v1561, 7
    %v1563 = vadd.s32 %v1562, 104
    %1564 = vset.pattern.permute.xlu0 %v1563
    %1565 = vperm.xlu0 %1564, %v1482
    %v1566 = vpop.permute.xlu0 %1565
    %v1567 = vlaneseq
    %v1568 = vshrl.u32 %v1567, 7
    %v1569 = vadd.s32 %v1568, 112
    %1570 = vset.pattern.permute.xlu0 %v1569
    %1571 = vperm.xlu0 %1570, %v1482
    %v1572 = vpop.permute.xlu0 %1571
    %v1573 = vlaneseq
    %v1574 = vshrl.u32 %v1573, 7
    %v1575 = vadd.s32 %v1574, 120
    %1576 = vset.pattern.permute.xlu0 %v1575
    %1577 = vperm.xlu0 %1576, %v1482
    %v1578 = vpop.permute.xlu0 %1577
    %v1579 = vrot.slane %v227, 4
    %vm1580 = vcmask 1047556
    %v1581 = vsel %vm1580, %v1579, %v33
    %v1582 = vrot.slane %v33, 4
    %v1583 = vsel %vm1580, %v227, %v1582
    %v1585 = vunpack.c.l.s4 1983009808
    %v1586 = vunpack.c.0.s8 %v1585
    %v1587 = vperm.slane %v1581, %v1586
    %v1589 = vunpack.c.l.s4 1983009808
    %v1590 = vunpack.c.0.s8 %v1589
    %v1591 = vperm.slane %v1583, %v1590
    %v1592 = vrot.slane %v324, 4
    %v1593 = vsel %vm1580, %v1592, %v130
    %v1594 = vrot.slane %v130, 4
    %v1595 = vsel %vm1580, %v324, %v1594
    %v1597 = vunpack.c.l.s4 1983009808
    %v1598 = vunpack.c.0.s8 %v1597
    %v1599 = vperm.slane %v1593, %v1598
    %v1601 = vunpack.c.l.s4 1983009808
    %v1602 = vunpack.c.0.s8 %v1601
    %v1603 = vperm.slane %v1595, %v1602
    %v1604 = vrot.slane %v615, 4
    %v1605 = vsel %vm1580, %v1604, %v421
    %v1606 = vrot.slane %v421, 4
    %v1607 = vsel %vm1580, %v615, %v1606
    %v1609 = vunpack.c.l.s4 1983009808
    %v1610 = vunpack.c.0.s8 %v1609
    %v1611 = vperm.slane %v1605, %v1610
    %v1613 = vunpack.c.l.s4 1983009808
    %v1614 = vunpack.c.0.s8 %v1613
    %v1615 = vperm.slane %v1607, %v1614
    %v1616 = vrot.slane %v712, 4
    %v1617 = vsel %vm1580, %v1616, %v518
    %v1618 = vrot.slane %v518, 4
    %v1619 = vsel %vm1580, %v712, %v1618
    %v1621 = vunpack.c.l.s4 1983009808
    %v1622 = vunpack.c.0.s8 %v1621
    %v1623 = vperm.slane %v1617, %v1622
    %v1625 = vunpack.c.l.s4 1983009808
    %v1626 = vunpack.c.0.s8 %v1625
    %v1627 = vperm.slane %v1619, %v1626
    %v1628 = vrot.slane %v1599, 4
    %v1629 = vsel %vm1580, %v1628, %v1587
    %v1630 = vrot.slane %v1587, 4
    %v1631 = vsel %vm1580, %v1599, %v1630
    %v1633 = vunpack.c.l.s4 1934713408
    %v1634 = vunpack.c.0.s8 %v1633
    %v1635 = vperm.slane %v1629, %v1634
    %v1637 = vunpack.c.l.s4 1934713408
    %v1638 = vunpack.c.0.s8 %v1637
    %v1639 = vperm.slane %v1631, %v1638
    %v1640 = vrot.slane %v1603, 4
    %v1641 = vsel %vm1580, %v1640, %v1591
    %v1642 = vrot.slane %v1591, 4
    %v1643 = vsel %vm1580, %v1603, %v1642
    %v1645 = vunpack.c.l.s4 1934713408
    %v1646 = vunpack.c.0.s8 %v1645
    %v1647 = vperm.slane %v1641, %v1646
    %v1649 = vunpack.c.l.s4 1934713408
    %v1650 = vunpack.c.0.s8 %v1649
    %v1651 = vperm.slane %v1643, %v1650
    %v1652 = vrot.slane %v1623, 4
    %v1653 = vsel %vm1580, %v1652, %v1611
    %v1654 = vrot.slane %v1611, 4
    %v1655 = vsel %vm1580, %v1623, %v1654
    %v1657 = vunpack.c.l.s4 1934713408
    %v1658 = vunpack.c.0.s8 %v1657
    %v1659 = vperm.slane %v1653, %v1658
    %v1661 = vunpack.c.l.s4 1934713408
    %v1662 = vunpack.c.0.s8 %v1661
    %v1663 = vperm.slane %v1655, %v1662
    %v1664 = vrot.slane %v1627, 4
    %v1665 = vsel %vm1580, %v1664, %v1615
    %v1666 = vrot.slane %v1615, 4
    %v1667 = vsel %vm1580, %v1627, %v1666
    %v1669 = vunpack.c.l.s4 1934713408
    %v1670 = vunpack.c.0.s8 %v1669
    %v1671 = vperm.slane %v1665, %v1670
    %v1673 = vunpack.c.l.s4 1934713408
    %v1674 = vunpack.c.0.s8 %v1673
    %v1675 = vperm.slane %v1667, %v1674
    %v1676 = vrot.slane %v1659, 4
    %v1677 = vsel %vm1580, %v1676, %v1635
    %v1678 = vrot.slane %v1635, 4
    %v1679 = vsel %vm1580, %v1659, %v1678
    %v1680 = vrot.slane %v1663, 4
    %v1681 = vsel %vm1580, %v1680, %v1639
    %v1682 = vrot.slane %v1639, 4
    %v1683 = vsel %vm1580, %v1663, %v1682
    %v1684 = vrot.slane %v1671, 4
    %v1685 = vsel %vm1580, %v1684, %v1647
    %v1686 = vrot.slane %v1647, 4
    %v1687 = vsel %vm1580, %v1671, %v1686
    %v1688 = vrot.slane %v1675, 4
    %v1689 = vsel %vm1580, %v1688, %v1651
    %v1690 = vrot.slane %v1651, 4
    %v1691 = vsel %vm1580, %v1675, %v1690
    %v1692 = vrot.slane %v1003, 4
    %v1693 = vsel %vm1580, %v1692, %v809
    %v1694 = vrot.slane %v809, 4
    %v1695 = vsel %vm1580, %v1003, %v1694
    %v1697 = vunpack.c.l.s4 1983009808
    %v1698 = vunpack.c.0.s8 %v1697
    %v1699 = vperm.slane %v1693, %v1698
    %v1701 = vunpack.c.l.s4 1983009808
    %v1702 = vunpack.c.0.s8 %v1701
    %v1703 = vperm.slane %v1695, %v1702
    %v1704 = vrot.slane %v1100, 4
    %v1705 = vsel %vm1580, %v1704, %v906
    %v1706 = vrot.slane %v906, 4
    %v1707 = vsel %vm1580, %v1100, %v1706
    %v1709 = vunpack.c.l.s4 1983009808
    %v1710 = vunpack.c.0.s8 %v1709
    %v1711 = vperm.slane %v1705, %v1710
    %v1713 = vunpack.c.l.s4 1983009808
    %v1714 = vunpack.c.0.s8 %v1713
    %v1715 = vperm.slane %v1707, %v1714
    %v1716 = vrot.slane %v1391, 4
    %v1717 = vsel %vm1580, %v1716, %v1197
    %v1718 = vrot.slane %v1197, 4
    %v1719 = vsel %vm1580, %v1391, %v1718
    %v1721 = vunpack.c.l.s4 1983009808
    %v1722 = vunpack.c.0.s8 %v1721
    %v1723 = vperm.slane %v1717, %v1722
    %v1725 = vunpack.c.l.s4 1983009808
    %v1726 = vunpack.c.0.s8 %v1725
    %v1727 = vperm.slane %v1719, %v1726
    %v1728 = vrot.slane %v1488, 4
    %v1729 = vsel %vm1580, %v1728, %v1294
    %v1730 = vrot.slane %v1294, 4
    %v1731 = vsel %vm1580, %v1488, %v1730
    %v1733 = vunpack.c.l.s4 1983009808
    %v1734 = vunpack.c.0.s8 %v1733
    %v1735 = vperm.slane %v1729, %v1734
    %v1737 = vunpack.c.l.s4 1983009808
    %v1738 = vunpack.c.0.s8 %v1737
    %v1739 = vperm.slane %v1731, %v1738
    %v1740 = vrot.slane %v1711, 4
    %v1741 = vsel %vm1580, %v1740, %v1699
    %v1742 = vrot.slane %v1699, 4
    %v1743 = vsel %vm1580, %v1711, %v1742
    %v1745 = vunpack.c.l.s4 1934713408
    %v1746 = vunpack.c.0.s8 %v1745
    %v1747 = vperm.slane %v1741, %v1746
    %v1749 = vunpack.c.l.s4 1934713408
    %v1750 = vunpack.c.0.s8 %v1749
    %v1751 = vperm.slane %v1743, %v1750
    %v1752 = vrot.slane %v1715, 4
    %v1753 = vsel %vm1580, %v1752, %v1703
    %v1754 = vrot.slane %v1703, 4
    %v1755 = vsel %vm1580, %v1715, %v1754
    %v1757 = vunpack.c.l.s4 1934713408
    %v1758 = vunpack.c.0.s8 %v1757
    %v1759 = vperm.slane %v1753, %v1758
    %v1761 = vunpack.c.l.s4 1934713408
    %v1762 = vunpack.c.0.s8 %v1761
    %v1763 = vperm.slane %v1755, %v1762
    %v1764 = vrot.slane %v1735, 4
    %v1765 = vsel %vm1580, %v1764, %v1723
    %v1766 = vrot.slane %v1723, 4
    %v1767 = vsel %vm1580, %v1735, %v1766
    %v1769 = vunpack.c.l.s4 1934713408
    %v1770 = vunpack.c.0.s8 %v1769
    %v1771 = vperm.slane %v1765, %v1770
    %v1773 = vunpack.c.l.s4 1934713408
    %v1774 = vunpack.c.0.s8 %v1773
    %v1775 = vperm.slane %v1767, %v1774
    %v1776 = vrot.slane %v1739, 4
    %v1777 = vsel %vm1580, %v1776, %v1727
    %v1778 = vrot.slane %v1727, 4
    %v1779 = vsel %vm1580, %v1739, %v1778
    %v1781 = vunpack.c.l.s4 1934713408
    %v1782 = vunpack.c.0.s8 %v1781
    %v1783 = vperm.slane %v1777, %v1782
    %v1785 = vunpack.c.l.s4 1934713408
    %v1786 = vunpack.c.0.s8 %v1785
    %v1787 = vperm.slane %v1779, %v1786
    %v1788 = vrot.slane %v1771, 4
    %v1789 = vsel %vm1580, %v1788, %v1747
    %v1790 = vrot.slane %v1747, 4
    %v1791 = vsel %vm1580, %v1771, %v1790
    %v1792 = vrot.slane %v1775, 4
    %v1793 = vsel %vm1580, %v1792, %v1751
    %v1794 = vrot.slane %v1751, 4
    %v1795 = vsel %vm1580, %v1775, %v1794
    %v1796 = vrot.slane %v1783, 4
    %v1797 = vsel %vm1580, %v1796, %v1759
    %v1798 = vrot.slane %v1759, 4
    %v1799 = vsel %vm1580, %v1783, %v1798
    %v1800 = vrot.slane %v1787, 4
    %v1801 = vsel %vm1580, %v1800, %v1763
    %v1802 = vrot.slane %v1763, 4
    %v1803 = vsel %vm1580, %v1787, %v1802
    %v1804 = vrot.slane %v233, 4
    %v1805 = vsel %vm1580, %v1804, %v39
    %v1806 = vrot.slane %v39, 4
    %v1807 = vsel %vm1580, %v233, %v1806
    %v1809 = vunpack.c.l.s4 1983009808
    %v1810 = vunpack.c.0.s8 %v1809
    %v1811 = vperm.slane %v1805, %v1810
    %v1813 = vunpack.c.l.s4 1983009808
    %v1814 = vunpack.c.0.s8 %v1813
    %v1815 = vperm.slane %v1807, %v1814
    %v1816 = vrot.slane %v330, 4
    %v1817 = vsel %vm1580, %v1816, %v136
    %v1818 = vrot.slane %v136, 4
    %v1819 = vsel %vm1580, %v330, %v1818
    %v1821 = vunpack.c.l.s4 1983009808
    %v1822 = vunpack.c.0.s8 %v1821
    %v1823 = vperm.slane %v1817, %v1822
    %v1825 = vunpack.c.l.s4 1983009808
    %v1826 = vunpack.c.0.s8 %v1825
    %v1827 = vperm.slane %v1819, %v1826
    %v1828 = vrot.slane %v621, 4
    %v1829 = vsel %vm1580, %v1828, %v427
    %v1830 = vrot.slane %v427, 4
    %v1831 = vsel %vm1580, %v621, %v1830
    %v1833 = vunpack.c.l.s4 1983009808
    %v1834 = vunpack.c.0.s8 %v1833
    %v1835 = vperm.slane %v1829, %v1834
    %v1837 = vunpack.c.l.s4 1983009808
    %v1838 = vunpack.c.0.s8 %v1837
    %v1839 = vperm.slane %v1831, %v1838
    %v1840 = vrot.slane %v718, 4
    %v1841 = vsel %vm1580, %v1840, %v524
    %v1842 = vrot.slane %v524, 4
    %v1843 = vsel %vm1580, %v718, %v1842
    %v1845 = vunpack.c.l.s4 1983009808
    %v1846 = vunpack.c.0.s8 %v1845
    %v1847 = vperm.slane %v1841, %v1846
    %v1849 = vunpack.c.l.s4 1983009808
    %v1850 = vunpack.c.0.s8 %v1849
    %v1851 = vperm.slane %v1843, %v1850
    %v1852 = vrot.slane %v1823, 4
    %v1853 = vsel %vm1580, %v1852, %v1811
    %v1854 = vrot.slane %v1811, 4
    %v1855 = vsel %vm1580, %v1823, %v1854
    %v1857 = vunpack.c.l.s4 1934713408
    %v1858 = vunpack.c.0.s8 %v1857
    %v1859 = vperm.slane %v1853, %v1858
    %v1861 = vunpack.c.l.s4 1934713408
    %v1862 = vunpack.c.0.s8 %v1861
    %v1863 = vperm.slane %v1855, %v1862
    %v1864 = vrot.slane %v1827, 4
    %v1865 = vsel %vm1580, %v1864, %v1815
    %v1866 = vrot.slane %v1815, 4
    %v1867 = vsel %vm1580, %v1827, %v1866
    %v1869 = vunpack.c.l.s4 1934713408
    %v1870 = vunpack.c.0.s8 %v1869
    %v1871 = vperm.slane %v1865, %v1870
    %v1873 = vunpack.c.l.s4 1934713408
    %v1874 = vunpack.c.0.s8 %v1873
    %v1875 = vperm.slane %v1867, %v1874
    %v1876 = vrot.slane %v1847, 4
    %v1877 = vsel %vm1580, %v1876, %v1835
    %v1878 = vrot.slane %v1835, 4
    %v1879 = vsel %vm1580, %v1847, %v1878
    %v1881 = vunpack.c.l.s4 1934713408
    %v1882 = vunpack.c.0.s8 %v1881
    %v1883 = vperm.slane %v1877, %v1882
    %v1885 = vunpack.c.l.s4 1934713408
    %v1886 = vunpack.c.0.s8 %v1885
    %v1887 = vperm.slane %v1879, %v1886
    %v1888 = vrot.slane %v1851, 4
    %v1889 = vsel %vm1580, %v1888, %v1839
    %v1890 = vrot.slane %v1839, 4
    %v1891 = vsel %vm1580, %v1851, %v1890
    %v1893 = vunpack.c.l.s4 1934713408
    %v1894 = vunpack.c.0.s8 %v1893
    %v1895 = vperm.slane %v1889, %v1894
    %v1897 = vunpack.c.l.s4 1934713408
    %v1898 = vunpack.c.0.s8 %v1897
    %v1899 = vperm.slane %v1891, %v1898
    %v1900 = vrot.slane %v1883, 4
    %v1901 = vsel %vm1580, %v1900, %v1859
    %v1902 = vrot.slane %v1859, 4
    %v1903 = vsel %vm1580, %v1883, %v1902
    %v1904 = vrot.slane %v1887, 4
    %v1905 = vsel %vm1580, %v1904, %v1863
    %v1906 = vrot.slane %v1863, 4
    %v1907 = vsel %vm1580, %v1887, %v1906
    %v1908 = vrot.slane %v1895, 4
    %v1909 = vsel %vm1580, %v1908, %v1871
    %v1910 = vrot.slane %v1871, 4
    %v1911 = vsel %vm1580, %v1895, %v1910
    %v1912 = vrot.slane %v1899, 4
    %v1913 = vsel %vm1580, %v1912, %v1875
    %v1914 = vrot.slane %v1875, 4
    %v1915 = vsel %vm1580, %v1899, %v1914
    %v1916 = vrot.slane %v1009, 4
    %v1917 = vsel %vm1580, %v1916, %v815
    %v1918 = vrot.slane %v815, 4
    %v1919 = vsel %vm1580, %v1009, %v1918
    %v1921 = vunpack.c.l.s4 1983009808
    %v1922 = vunpack.c.0.s8 %v1921
    %v1923 = vperm.slane %v1917, %v1922
    %v1925 = vunpack.c.l.s4 1983009808
    %v1926 = vunpack.c.0.s8 %v1925
    %v1927 = vperm.slane %v1919, %v1926
    %v1928 = vrot.slane %v1106, 4
    %v1929 = vsel %vm1580, %v1928, %v912
    %v1930 = vrot.slane %v912, 4
    %v1931 = vsel %vm1580, %v1106, %v1930
    %v1933 = vunpack.c.l.s4 1983009808
    %v1934 = vunpack.c.0.s8 %v1933
    %v1935 = vperm.slane %v1929, %v1934
    %v1937 = vunpack.c.l.s4 1983009808
    %v1938 = vunpack.c.0.s8 %v1937
    %v1939 = vperm.slane %v1931, %v1938
    %v1940 = vrot.slane %v1397, 4
    %v1941 = vsel %vm1580, %v1940, %v1203
    %v1942 = vrot.slane %v1203, 4
    %v1943 = vsel %vm1580, %v1397, %v1942
    %v1945 = vunpack.c.l.s4 1983009808
    %v1946 = vunpack.c.0.s8 %v1945
    %v1947 = vperm.slane %v1941, %v1946
    %v1949 = vunpack.c.l.s4 1983009808
    %v1950 = vunpack.c.0.s8 %v1949
    %v1951 = vperm.slane %v1943, %v1950
    %v1952 = vrot.slane %v1494, 4
    %v1953 = vsel %vm1580, %v1952, %v1300
    %v1954 = vrot.slane %v1300, 4
    %v1955 = vsel %vm1580, %v1494, %v1954
    %v1957 = vunpack.c.l.s4 1983009808
    %v1958 = vunpack.c.0.s8 %v1957
    %v1959 = vperm.slane %v1953, %v1958
    %v1961 = vunpack.c.l.s4 1983009808
    %v1962 = vunpack.c.0.s8 %v1961
    %v1963 = vperm.slane %v1955, %v1962
    %v1964 = vrot.slane %v1935, 4
    %v1965 = vsel %vm1580, %v1964, %v1923
    %v1966 = vrot.slane %v1923, 4
    %v1967 = vsel %vm1580, %v1935, %v1966
    %v1969 = vunpack.c.l.s4 1934713408
    %v1970 = vunpack.c.0.s8 %v1969
    %v1971 = vperm.slane %v1965, %v1970
    %v1973 = vunpack.c.l.s4 1934713408
    %v1974 = vunpack.c.0.s8 %v1973
    %v1975 = vperm.slane %v1967, %v1974
    %v1976 = vrot.slane %v1939, 4
    %v1977 = vsel %vm1580, %v1976, %v1927
    %v1978 = vrot.slane %v1927, 4
    %v1979 = vsel %vm1580, %v1939, %v1978
    %v1981 = vunpack.c.l.s4 1934713408
    %v1982 = vunpack.c.0.s8 %v1981
    %v1983 = vperm.slane %v1977, %v1982
    %v1985 = vunpack.c.l.s4 1934713408
    %v1986 = vunpack.c.0.s8 %v1985
    %v1987 = vperm.slane %v1979, %v1986
    %v1988 = vrot.slane %v1959, 4
    %v1989 = vsel %vm1580, %v1988, %v1947
    %v1990 = vrot.slane %v1947, 4
    %v1991 = vsel %vm1580, %v1959, %v1990
    %v1993 = vunpack.c.l.s4 1934713408
    %v1994 = vunpack.c.0.s8 %v1993
    %v1995 = vperm.slane %v1989, %v1994
    %v1997 = vunpack.c.l.s4 1934713408
    %v1998 = vunpack.c.0.s8 %v1997
    %v1999 = vperm.slane %v1991, %v1998
    %v2000 = vrot.slane %v1963, 4
    %v2001 = vsel %vm1580, %v2000, %v1951
    %v2002 = vrot.slane %v1951, 4
    %v2003 = vsel %vm1580, %v1963, %v2002
    %v2005 = vunpack.c.l.s4 1934713408
    %v2006 = vunpack.c.0.s8 %v2005
    %v2007 = vperm.slane %v2001, %v2006
    %v2009 = vunpack.c.l.s4 1934713408
    %v2010 = vunpack.c.0.s8 %v2009
    %v2011 = vperm.slane %v2003, %v2010
    %v2012 = vrot.slane %v1995, 4
    %v2013 = vsel %vm1580, %v2012, %v1971
    %v2014 = vrot.slane %v1971, 4
    %v2015 = vsel %vm1580, %v1995, %v2014
    %v2016 = vrot.slane %v1999, 4
    %v2017 = vsel %vm1580, %v2016, %v1975
    %v2018 = vrot.slane %v1975, 4
    %v2019 = vsel %vm1580, %v1999, %v2018
    %v2020 = vrot.slane %v2007, 4
    %v2021 = vsel %vm1580, %v2020, %v1983
    %v2022 = vrot.slane %v1983, 4
    %v2023 = vsel %vm1580, %v2007, %v2022
    %v2024 = vrot.slane %v2011, 4
    %v2025 = vsel %vm1580, %v2024, %v1987
    %v2026 = vrot.slane %v1987, 4
    %v2027 = vsel %vm1580, %v2011, %v2026
    %v2028 = vrot.slane %v239, 4
    %v2029 = vsel %vm1580, %v2028, %v45
    %v2030 = vrot.slane %v45, 4
    %v2031 = vsel %vm1580, %v239, %v2030
    %v2033 = vunpack.c.l.s4 1983009808
    %v2034 = vunpack.c.0.s8 %v2033
    %v2035 = vperm.slane %v2029, %v2034
    %v2037 = vunpack.c.l.s4 1983009808
    %v2038 = vunpack.c.0.s8 %v2037
    %v2039 = vperm.slane %v2031, %v2038
    %v2040 = vrot.slane %v336, 4
    %v2041 = vsel %vm1580, %v2040, %v142
    %v2042 = vrot.slane %v142, 4
    %v2043 = vsel %vm1580, %v336, %v2042
    %v2045 = vunpack.c.l.s4 1983009808
    %v2046 = vunpack.c.0.s8 %v2045
    %v2047 = vperm.slane %v2041, %v2046
    %v2049 = vunpack.c.l.s4 1983009808
    %v2050 = vunpack.c.0.s8 %v2049
    %v2051 = vperm.slane %v2043, %v2050
    %v2052 = vrot.slane %v627, 4
    %v2053 = vsel %vm1580, %v2052, %v433
    %v2054 = vrot.slane %v433, 4
    %v2055 = vsel %vm1580, %v627, %v2054
    %v2057 = vunpack.c.l.s4 1983009808
    %v2058 = vunpack.c.0.s8 %v2057
    %v2059 = vperm.slane %v2053, %v2058
    %v2061 = vunpack.c.l.s4 1983009808
    %v2062 = vunpack.c.0.s8 %v2061
    %v2063 = vperm.slane %v2055, %v2062
    %v2064 = vrot.slane %v724, 4
    %v2065 = vsel %vm1580, %v2064, %v530
    %v2066 = vrot.slane %v530, 4
    %v2067 = vsel %vm1580, %v724, %v2066
    %v2069 = vunpack.c.l.s4 1983009808
    %v2070 = vunpack.c.0.s8 %v2069
    %v2071 = vperm.slane %v2065, %v2070
    %v2073 = vunpack.c.l.s4 1983009808
    %v2074 = vunpack.c.0.s8 %v2073
    %v2075 = vperm.slane %v2067, %v2074
    %v2076 = vrot.slane %v2047, 4
    %v2077 = vsel %vm1580, %v2076, %v2035
    %v2078 = vrot.slane %v2035, 4
    %v2079 = vsel %vm1580, %v2047, %v2078
    %v2081 = vunpack.c.l.s4 1934713408
    %v2082 = vunpack.c.0.s8 %v2081
    %v2083 = vperm.slane %v2077, %v2082
    %v2085 = vunpack.c.l.s4 1934713408
    %v2086 = vunpack.c.0.s8 %v2085
    %v2087 = vperm.slane %v2079, %v2086
    %v2088 = vrot.slane %v2051, 4
    %v2089 = vsel %vm1580, %v2088, %v2039
    %v2090 = vrot.slane %v2039, 4
    %v2091 = vsel %vm1580, %v2051, %v2090
    %v2093 = vunpack.c.l.s4 1934713408
    %v2094 = vunpack.c.0.s8 %v2093
    %v2095 = vperm.slane %v2089, %v2094
    %v2097 = vunpack.c.l.s4 1934713408
    %v2098 = vunpack.c.0.s8 %v2097
    %v2099 = vperm.slane %v2091, %v2098
    %v2100 = vrot.slane %v2071, 4
    %v2101 = vsel %vm1580, %v2100, %v2059
    %v2102 = vrot.slane %v2059, 4
    %v2103 = vsel %vm1580, %v2071, %v2102
    %v2105 = vunpack.c.l.s4 1934713408
    %v2106 = vunpack.c.0.s8 %v2105
    %v2107 = vperm.slane %v2101, %v2106
    %v2109 = vunpack.c.l.s4 1934713408
    %v2110 = vunpack.c.0.s8 %v2109
    %v2111 = vperm.slane %v2103, %v2110
    %v2112 = vrot.slane %v2075, 4
    %v2113 = vsel %vm1580, %v2112, %v2063
    %v2114 = vrot.slane %v2063, 4
    %v2115 = vsel %vm1580, %v2075, %v2114
    %v2117 = vunpack.c.l.s4 1934713408
    %v2118 = vunpack.c.0.s8 %v2117
    %v2119 = vperm.slane %v2113, %v2118
    %v2121 = vunpack.c.l.s4 1934713408
    %v2122 = vunpack.c.0.s8 %v2121
    %v2123 = vperm.slane %v2115, %v2122
    %v2124 = vrot.slane %v2107, 4
    %v2125 = vsel %vm1580, %v2124, %v2083
    %v2126 = vrot.slane %v2083, 4
    %v2127 = vsel %vm1580, %v2107, %v2126
    %v2128 = vrot.slane %v2111, 4
    %v2129 = vsel %vm1580, %v2128, %v2087
    %v2130 = vrot.slane %v2087, 4
    %v2131 = vsel %vm1580, %v2111, %v2130
    %v2132 = vrot.slane %v2119, 4
    %v2133 = vsel %vm1580, %v2132, %v2095
    %v2134 = vrot.slane %v2095, 4
    %v2135 = vsel %vm1580, %v2119, %v2134
    %v2136 = vrot.slane %v2123, 4
    %v2137 = vsel %vm1580, %v2136, %v2099
    %v2138 = vrot.slane %v2099, 4
    %v2139 = vsel %vm1580, %v2123, %v2138
    %v2140 = vrot.slane %v1015, 4
    %v2141 = vsel %vm1580, %v2140, %v821
    %v2142 = vrot.slane %v821, 4
    %v2143 = vsel %vm1580, %v1015, %v2142
    %v2145 = vunpack.c.l.s4 1983009808
    %v2146 = vunpack.c.0.s8 %v2145
    %v2147 = vperm.slane %v2141, %v2146
    %v2149 = vunpack.c.l.s4 1983009808
    %v2150 = vunpack.c.0.s8 %v2149
    %v2151 = vperm.slane %v2143, %v2150
    %v2152 = vrot.slane %v1112, 4
    %v2153 = vsel %vm1580, %v2152, %v918
    %v2154 = vrot.slane %v918, 4
    %v2155 = vsel %vm1580, %v1112, %v2154
    %v2157 = vunpack.c.l.s4 1983009808
    %v2158 = vunpack.c.0.s8 %v2157
    %v2159 = vperm.slane %v2153, %v2158
    %v2161 = vunpack.c.l.s4 1983009808
    %v2162 = vunpack.c.0.s8 %v2161
    %v2163 = vperm.slane %v2155, %v2162
    %v2164 = vrot.slane %v1403, 4
    %v2165 = vsel %vm1580, %v2164, %v1209
    %v2166 = vrot.slane %v1209, 4
    %v2167 = vsel %vm1580, %v1403, %v2166
    %v2169 = vunpack.c.l.s4 1983009808
    %v2170 = vunpack.c.0.s8 %v2169
    %v2171 = vperm.slane %v2165, %v2170
    %v2173 = vunpack.c.l.s4 1983009808
    %v2174 = vunpack.c.0.s8 %v2173
    %v2175 = vperm.slane %v2167, %v2174
    %v2176 = vrot.slane %v1500, 4
    %v2177 = vsel %vm1580, %v2176, %v1306
    %v2178 = vrot.slane %v1306, 4
    %v2179 = vsel %vm1580, %v1500, %v2178
    %v2181 = vunpack.c.l.s4 1983009808
    %v2182 = vunpack.c.0.s8 %v2181
    %v2183 = vperm.slane %v2177, %v2182
    %v2185 = vunpack.c.l.s4 1983009808
    %v2186 = vunpack.c.0.s8 %v2185
    %v2187 = vperm.slane %v2179, %v2186
    %v2188 = vrot.slane %v2159, 4
    %v2189 = vsel %vm1580, %v2188, %v2147
    %v2190 = vrot.slane %v2147, 4
    %v2191 = vsel %vm1580, %v2159, %v2190
    %v2193 = vunpack.c.l.s4 1934713408
    %v2194 = vunpack.c.0.s8 %v2193
    %v2195 = vperm.slane %v2189, %v2194
    %v2197 = vunpack.c.l.s4 1934713408
    %v2198 = vunpack.c.0.s8 %v2197
    %v2199 = vperm.slane %v2191, %v2198
    %v2200 = vrot.slane %v2163, 4
    %v2201 = vsel %vm1580, %v2200, %v2151
    %v2202 = vrot.slane %v2151, 4
    %v2203 = vsel %vm1580, %v2163, %v2202
    %v2205 = vunpack.c.l.s4 1934713408
    %v2206 = vunpack.c.0.s8 %v2205
    %v2207 = vperm.slane %v2201, %v2206
    %v2209 = vunpack.c.l.s4 1934713408
    %v2210 = vunpack.c.0.s8 %v2209
    %v2211 = vperm.slane %v2203, %v2210
    %v2212 = vrot.slane %v2183, 4
    %v2213 = vsel %vm1580, %v2212, %v2171
    %v2214 = vrot.slane %v2171, 4
    %v2215 = vsel %vm1580, %v2183, %v2214
    %v2217 = vunpack.c.l.s4 1934713408
    %v2218 = vunpack.c.0.s8 %v2217
    %v2219 = vperm.slane %v2213, %v2218
    %v2221 = vunpack.c.l.s4 1934713408
    %v2222 = vunpack.c.0.s8 %v2221
    %v2223 = vperm.slane %v2215, %v2222
    %v2224 = vrot.slane %v2187, 4
    %v2225 = vsel %vm1580, %v2224, %v2175
    %v2226 = vrot.slane %v2175, 4
    %v2227 = vsel %vm1580, %v2187, %v2226
    %v2229 = vunpack.c.l.s4 1934713408
    %v2230 = vunpack.c.0.s8 %v2229
    %v2231 = vperm.slane %v2225, %v2230
    %v2233 = vunpack.c.l.s4 1934713408
    %v2234 = vunpack.c.0.s8 %v2233
    %v2235 = vperm.slane %v2227, %v2234
    %v2236 = vrot.slane %v2219, 4
    %v2237 = vsel %vm1580, %v2236, %v2195
    %v2238 = vrot.slane %v2195, 4
    %v2239 = vsel %vm1580, %v2219, %v2238
    %v2240 = vrot.slane %v2223, 4
    %v2241 = vsel %vm1580, %v2240, %v2199
    %v2242 = vrot.slane %v2199, 4
    %v2243 = vsel %vm1580, %v2223, %v2242
    %v2244 = vrot.slane %v2231, 4
    %v2245 = vsel %vm1580, %v2244, %v2207
    %v2246 = vrot.slane %v2207, 4
    %v2247 = vsel %vm1580, %v2231, %v2246
    %v2248 = vrot.slane %v2235, 4
    %v2249 = vsel %vm1580, %v2248, %v2211
    %v2250 = vrot.slane %v2211, 4
    %v2251 = vsel %vm1580, %v2235, %v2250
    %v2252 = vrot.slane %v245, 4
    %v2253 = vsel %vm1580, %v2252, %v51
    %v2254 = vrot.slane %v51, 4
    %v2255 = vsel %vm1580, %v245, %v2254
    %v2257 = vunpack.c.l.s4 1983009808
    %v2258 = vunpack.c.0.s8 %v2257
    %v2259 = vperm.slane %v2253, %v2258
    %v2261 = vunpack.c.l.s4 1983009808
    %v2262 = vunpack.c.0.s8 %v2261
    %v2263 = vperm.slane %v2255, %v2262
    %v2264 = vrot.slane %v342, 4
    %v2265 = vsel %vm1580, %v2264, %v148
    %v2266 = vrot.slane %v148, 4
    %v2267 = vsel %vm1580, %v342, %v2266
    %v2269 = vunpack.c.l.s4 1983009808
    %v2270 = vunpack.c.0.s8 %v2269
    %v2271 = vperm.slane %v2265, %v2270
    %v2273 = vunpack.c.l.s4 1983009808
    %v2274 = vunpack.c.0.s8 %v2273
    %v2275 = vperm.slane %v2267, %v2274
    %v2276 = vrot.slane %v633, 4
    %v2277 = vsel %vm1580, %v2276, %v439
    %v2278 = vrot.slane %v439, 4
    %v2279 = vsel %vm1580, %v633, %v2278
    %v2281 = vunpack.c.l.s4 1983009808
    %v2282 = vunpack.c.0.s8 %v2281
    %v2283 = vperm.slane %v2277, %v2282
    %v2285 = vunpack.c.l.s4 1983009808
    %v2286 = vunpack.c.0.s8 %v2285
    %v2287 = vperm.slane %v2279, %v2286
    %v2288 = vrot.slane %v730, 4
    %v2289 = vsel %vm1580, %v2288, %v536
    %v2290 = vrot.slane %v536, 4
    %v2291 = vsel %vm1580, %v730, %v2290
    %v2293 = vunpack.c.l.s4 1983009808
    %v2294 = vunpack.c.0.s8 %v2293
    %v2295 = vperm.slane %v2289, %v2294
    %v2297 = vunpack.c.l.s4 1983009808
    %v2298 = vunpack.c.0.s8 %v2297
    %v2299 = vperm.slane %v2291, %v2298
    %v2300 = vrot.slane %v2271, 4
    %v2301 = vsel %vm1580, %v2300, %v2259
    %v2302 = vrot.slane %v2259, 4
    %v2303 = vsel %vm1580, %v2271, %v2302
    %v2305 = vunpack.c.l.s4 1934713408
    %v2306 = vunpack.c.0.s8 %v2305
    %v2307 = vperm.slane %v2301, %v2306
    %v2309 = vunpack.c.l.s4 1934713408
    %v2310 = vunpack.c.0.s8 %v2309
    %v2311 = vperm.slane %v2303, %v2310
    %v2312 = vrot.slane %v2275, 4
    %v2313 = vsel %vm1580, %v2312, %v2263
    %v2314 = vrot.slane %v2263, 4
    %v2315 = vsel %vm1580, %v2275, %v2314
    %v2317 = vunpack.c.l.s4 1934713408
    %v2318 = vunpack.c.0.s8 %v2317
    %v2319 = vperm.slane %v2313, %v2318
    %v2321 = vunpack.c.l.s4 1934713408
    %v2322 = vunpack.c.0.s8 %v2321
    %v2323 = vperm.slane %v2315, %v2322
    %v2324 = vrot.slane %v2295, 4
    %v2325 = vsel %vm1580, %v2324, %v2283
    %v2326 = vrot.slane %v2283, 4
    %v2327 = vsel %vm1580, %v2295, %v2326
    %v2329 = vunpack.c.l.s4 1934713408
    %v2330 = vunpack.c.0.s8 %v2329
    %v2331 = vperm.slane %v2325, %v2330
    %v2333 = vunpack.c.l.s4 1934713408
    %v2334 = vunpack.c.0.s8 %v2333
    %v2335 = vperm.slane %v2327, %v2334
    %v2336 = vrot.slane %v2299, 4
    %v2337 = vsel %vm1580, %v2336, %v2287
    %v2338 = vrot.slane %v2287, 4
    %v2339 = vsel %vm1580, %v2299, %v2338
    %v2341 = vunpack.c.l.s4 1934713408
    %v2342 = vunpack.c.0.s8 %v2341
    %v2343 = vperm.slane %v2337, %v2342
    %v2345 = vunpack.c.l.s4 1934713408
    %v2346 = vunpack.c.0.s8 %v2345
    %v2347 = vperm.slane %v2339, %v2346
    %v2348 = vrot.slane %v2331, 4
    %v2349 = vsel %vm1580, %v2348, %v2307
    %v2350 = vrot.slane %v2307, 4
    %v2351 = vsel %vm1580, %v2331, %v2350
    %v2352 = vrot.slane %v2335, 4
    %v2353 = vsel %vm1580, %v2352, %v2311
    %v2354 = vrot.slane %v2311, 4
    %v2355 = vsel %vm1580, %v2335, %v2354
    %v2356 = vrot.slane %v2343, 4
    %v2357 = vsel %vm1580, %v2356, %v2319
    %v2358 = vrot.slane %v2319, 4
    %v2359 = vsel %vm1580, %v2343, %v2358
    %v2360 = vrot.slane %v2347, 4
    %v2361 = vsel %vm1580, %v2360, %v2323
    %v2362 = vrot.slane %v2323, 4
    %v2363 = vsel %vm1580, %v2347, %v2362
    %v2364 = vrot.slane %v1021, 4
    %v2365 = vsel %vm1580, %v2364, %v827
    %v2366 = vrot.slane %v827, 4
    %v2367 = vsel %vm1580, %v1021, %v2366
    %v2369 = vunpack.c.l.s4 1983009808
    %v2370 = vunpack.c.0.s8 %v2369
    %v2371 = vperm.slane %v2365, %v2370
    %v2373 = vunpack.c.l.s4 1983009808
    %v2374 = vunpack.c.0.s8 %v2373
    %v2375 = vperm.slane %v2367, %v2374
    %v2376 = vrot.slane %v1118, 4
    %v2377 = vsel %vm1580, %v2376, %v924
    %v2378 = vrot.slane %v924, 4
    %v2379 = vsel %vm1580, %v1118, %v2378
    %v2381 = vunpack.c.l.s4 1983009808
    %v2382 = vunpack.c.0.s8 %v2381
    %v2383 = vperm.slane %v2377, %v2382
    %v2385 = vunpack.c.l.s4 1983009808
    %v2386 = vunpack.c.0.s8 %v2385
    %v2387 = vperm.slane %v2379, %v2386
    %v2388 = vrot.slane %v1409, 4
    %v2389 = vsel %vm1580, %v2388, %v1215
    %v2390 = vrot.slane %v1215, 4
    %v2391 = vsel %vm1580, %v1409, %v2390
    %v2393 = vunpack.c.l.s4 1983009808
    %v2394 = vunpack.c.0.s8 %v2393
    %v2395 = vperm.slane %v2389, %v2394
    %v2397 = vunpack.c.l.s4 1983009808
    %v2398 = vunpack.c.0.s8 %v2397
    %v2399 = vperm.slane %v2391, %v2398
    %v2400 = vrot.slane %v1506, 4
    %v2401 = vsel %vm1580, %v2400, %v1312
    %v2402 = vrot.slane %v1312, 4
    %v2403 = vsel %vm1580, %v1506, %v2402
    %v2405 = vunpack.c.l.s4 1983009808
    %v2406 = vunpack.c.0.s8 %v2405
    %v2407 = vperm.slane %v2401, %v2406
    %v2409 = vunpack.c.l.s4 1983009808
    %v2410 = vunpack.c.0.s8 %v2409
    %v2411 = vperm.slane %v2403, %v2410
    %v2412 = vrot.slane %v2383, 4
    %v2413 = vsel %vm1580, %v2412, %v2371
    %v2414 = vrot.slane %v2371, 4
    %v2415 = vsel %vm1580, %v2383, %v2414
    %v2417 = vunpack.c.l.s4 1934713408
    %v2418 = vunpack.c.0.s8 %v2417
    %v2419 = vperm.slane %v2413, %v2418
    %v2421 = vunpack.c.l.s4 1934713408
    %v2422 = vunpack.c.0.s8 %v2421
    %v2423 = vperm.slane %v2415, %v2422
    %v2424 = vrot.slane %v2387, 4
    %v2425 = vsel %vm1580, %v2424, %v2375
    %v2426 = vrot.slane %v2375, 4
    %v2427 = vsel %vm1580, %v2387, %v2426
    %v2429 = vunpack.c.l.s4 1934713408
    %v2430 = vunpack.c.0.s8 %v2429
    %v2431 = vperm.slane %v2425, %v2430
    %v2433 = vunpack.c.l.s4 1934713408
    %v2434 = vunpack.c.0.s8 %v2433
    %v2435 = vperm.slane %v2427, %v2434
    %v2436 = vrot.slane %v2407, 4
    %v2437 = vsel %vm1580, %v2436, %v2395
    %v2438 = vrot.slane %v2395, 4
    %v2439 = vsel %vm1580, %v2407, %v2438
    %v2441 = vunpack.c.l.s4 1934713408
    %v2442 = vunpack.c.0.s8 %v2441
    %v2443 = vperm.slane %v2437, %v2442
    %v2445 = vunpack.c.l.s4 1934713408
    %v2446 = vunpack.c.0.s8 %v2445
    %v2447 = vperm.slane %v2439, %v2446
    %v2448 = vrot.slane %v2411, 4
    %v2449 = vsel %vm1580, %v2448, %v2399
    %v2450 = vrot.slane %v2399, 4
    %v2451 = vsel %vm1580, %v2411, %v2450
    %v2453 = vunpack.c.l.s4 1934713408
    %v2454 = vunpack.c.0.s8 %v2453
    %v2455 = vperm.slane %v2449, %v2454
    %v2457 = vunpack.c.l.s4 1934713408
    %v2458 = vunpack.c.0.s8 %v2457
    %v2459 = vperm.slane %v2451, %v2458
    %v2460 = vrot.slane %v2443, 4
    %v2461 = vsel %vm1580, %v2460, %v2419
    %v2462 = vrot.slane %v2419, 4
    %v2463 = vsel %vm1580, %v2443, %v2462
    %v2464 = vrot.slane %v2447, 4
    %v2465 = vsel %vm1580, %v2464, %v2423
    %v2466 = vrot.slane %v2423, 4
    %v2467 = vsel %vm1580, %v2447, %v2466
    %v2468 = vrot.slane %v2455, 4
    %v2469 = vsel %vm1580, %v2468, %v2431
    %v2470 = vrot.slane %v2431, 4
    %v2471 = vsel %vm1580, %v2455, %v2470
    %v2472 = vrot.slane %v2459, 4
    %v2473 = vsel %vm1580, %v2472, %v2435
    %v2474 = vrot.slane %v2435, 4
    %v2475 = vsel %vm1580, %v2459, %v2474
    %v2476 = vrot.slane %v251, 4
    %v2477 = vsel %vm1580, %v2476, %v57
    %v2478 = vrot.slane %v57, 4
    %v2479 = vsel %vm1580, %v251, %v2478
    %v2481 = vunpack.c.l.s4 1983009808
    %v2482 = vunpack.c.0.s8 %v2481
    %v2483 = vperm.slane %v2477, %v2482
    %v2485 = vunpack.c.l.s4 1983009808
    %v2486 = vunpack.c.0.s8 %v2485
    %v2487 = vperm.slane %v2479, %v2486
    %v2488 = vrot.slane %v348, 4
    %v2489 = vsel %vm1580, %v2488, %v154
    %v2490 = vrot.slane %v154, 4
    %v2491 = vsel %vm1580, %v348, %v2490
    %v2493 = vunpack.c.l.s4 1983009808
    %v2494 = vunpack.c.0.s8 %v2493
    %v2495 = vperm.slane %v2489, %v2494
    %v2497 = vunpack.c.l.s4 1983009808
    %v2498 = vunpack.c.0.s8 %v2497
    %v2499 = vperm.slane %v2491, %v2498
    %v2500 = vrot.slane %v639, 4
    %v2501 = vsel %vm1580, %v2500, %v445
    %v2502 = vrot.slane %v445, 4
    %v2503 = vsel %vm1580, %v639, %v2502
    %v2505 = vunpack.c.l.s4 1983009808
    %v2506 = vunpack.c.0.s8 %v2505
    %v2507 = vperm.slane %v2501, %v2506
    %v2509 = vunpack.c.l.s4 1983009808
    %v2510 = vunpack.c.0.s8 %v2509
    %v2511 = vperm.slane %v2503, %v2510
    %v2512 = vrot.slane %v736, 4
    %v2513 = vsel %vm1580, %v2512, %v542
    %v2514 = vrot.slane %v542, 4
    %v2515 = vsel %vm1580, %v736, %v2514
    %v2517 = vunpack.c.l.s4 1983009808
    %v2518 = vunpack.c.0.s8 %v2517
    %v2519 = vperm.slane %v2513, %v2518
    %v2521 = vunpack.c.l.s4 1983009808
    %v2522 = vunpack.c.0.s8 %v2521
    %v2523 = vperm.slane %v2515, %v2522
    %v2524 = vrot.slane %v2495, 4
    %v2525 = vsel %vm1580, %v2524, %v2483
    %v2526 = vrot.slane %v2483, 4
    %v2527 = vsel %vm1580, %v2495, %v2526
    %v2529 = vunpack.c.l.s4 1934713408
    %v2530 = vunpack.c.0.s8 %v2529
    %v2531 = vperm.slane %v2525, %v2530
    %v2533 = vunpack.c.l.s4 1934713408
    %v2534 = vunpack.c.0.s8 %v2533
    %v2535 = vperm.slane %v2527, %v2534
    %v2536 = vrot.slane %v2499, 4
    %v2537 = vsel %vm1580, %v2536, %v2487
    %v2538 = vrot.slane %v2487, 4
    %v2539 = vsel %vm1580, %v2499, %v2538
    %v2541 = vunpack.c.l.s4 1934713408
    %v2542 = vunpack.c.0.s8 %v2541
    %v2543 = vperm.slane %v2537, %v2542
    %v2545 = vunpack.c.l.s4 1934713408
    %v2546 = vunpack.c.0.s8 %v2545
    %v2547 = vperm.slane %v2539, %v2546
    %v2548 = vrot.slane %v2519, 4
    %v2549 = vsel %vm1580, %v2548, %v2507
    %v2550 = vrot.slane %v2507, 4
    %v2551 = vsel %vm1580, %v2519, %v2550
    %v2553 = vunpack.c.l.s4 1934713408
    %v2554 = vunpack.c.0.s8 %v2553
    %v2555 = vperm.slane %v2549, %v2554
    %v2557 = vunpack.c.l.s4 1934713408
    %v2558 = vunpack.c.0.s8 %v2557
    %v2559 = vperm.slane %v2551, %v2558
    %v2560 = vrot.slane %v2523, 4
    %v2561 = vsel %vm1580, %v2560, %v2511
    %v2562 = vrot.slane %v2511, 4
    %v2563 = vsel %vm1580, %v2523, %v2562
    %v2565 = vunpack.c.l.s4 1934713408
    %v2566 = vunpack.c.0.s8 %v2565
    %v2567 = vperm.slane %v2561, %v2566
    %v2569 = vunpack.c.l.s4 1934713408
    %v2570 = vunpack.c.0.s8 %v2569
    %v2571 = vperm.slane %v2563, %v2570
    %v2572 = vrot.slane %v2555, 4
    %v2573 = vsel %vm1580, %v2572, %v2531
    %v2574 = vrot.slane %v2531, 4
    %v2575 = vsel %vm1580, %v2555, %v2574
    %v2576 = vrot.slane %v2559, 4
    %v2577 = vsel %vm1580, %v2576, %v2535
    %v2578 = vrot.slane %v2535, 4
    %v2579 = vsel %vm1580, %v2559, %v2578
    %v2580 = vrot.slane %v2567, 4
    %v2581 = vsel %vm1580, %v2580, %v2543
    %v2582 = vrot.slane %v2543, 4
    %v2583 = vsel %vm1580, %v2567, %v2582
    %v2584 = vrot.slane %v2571, 4
    %v2585 = vsel %vm1580, %v2584, %v2547
    %v2586 = vrot.slane %v2547, 4
    %v2587 = vsel %vm1580, %v2571, %v2586
    %v2588 = vrot.slane %v1027, 4
    %v2589 = vsel %vm1580, %v2588, %v833
    %v2590 = vrot.slane %v833, 4
    %v2591 = vsel %vm1580, %v1027, %v2590
    %v2593 = vunpack.c.l.s4 1983009808
    %v2594 = vunpack.c.0.s8 %v2593
    %v2595 = vperm.slane %v2589, %v2594
    %v2597 = vunpack.c.l.s4 1983009808
    %v2598 = vunpack.c.0.s8 %v2597
    %v2599 = vperm.slane %v2591, %v2598
    %v2600 = vrot.slane %v1124, 4
    %v2601 = vsel %vm1580, %v2600, %v930
    %v2602 = vrot.slane %v930, 4
    %v2603 = vsel %vm1580, %v1124, %v2602
    %v2605 = vunpack.c.l.s4 1983009808
    %v2606 = vunpack.c.0.s8 %v2605
    %v2607 = vperm.slane %v2601, %v2606
    %v2609 = vunpack.c.l.s4 1983009808
    %v2610 = vunpack.c.0.s8 %v2609
    %v2611 = vperm.slane %v2603, %v2610
    %v2612 = vrot.slane %v1415, 4
    %v2613 = vsel %vm1580, %v2612, %v1221
    %v2614 = vrot.slane %v1221, 4
    %v2615 = vsel %vm1580, %v1415, %v2614
    %v2617 = vunpack.c.l.s4 1983009808
    %v2618 = vunpack.c.0.s8 %v2617
    %v2619 = vperm.slane %v2613, %v2618
    %v2621 = vunpack.c.l.s4 1983009808
    %v2622 = vunpack.c.0.s8 %v2621
    %v2623 = vperm.slane %v2615, %v2622
    %v2624 = vrot.slane %v1512, 4
    %v2625 = vsel %vm1580, %v2624, %v1318
    %v2626 = vrot.slane %v1318, 4
    %v2627 = vsel %vm1580, %v1512, %v2626
    %v2629 = vunpack.c.l.s4 1983009808
    %v2630 = vunpack.c.0.s8 %v2629
    %v2631 = vperm.slane %v2625, %v2630
    %v2633 = vunpack.c.l.s4 1983009808
    %v2634 = vunpack.c.0.s8 %v2633
    %v2635 = vperm.slane %v2627, %v2634
    %v2636 = vrot.slane %v2607, 4
    %v2637 = vsel %vm1580, %v2636, %v2595
    %v2638 = vrot.slane %v2595, 4
    %v2639 = vsel %vm1580, %v2607, %v2638
    %v2641 = vunpack.c.l.s4 1934713408
    %v2642 = vunpack.c.0.s8 %v2641
    %v2643 = vperm.slane %v2637, %v2642
    %v2645 = vunpack.c.l.s4 1934713408
    %v2646 = vunpack.c.0.s8 %v2645
    %v2647 = vperm.slane %v2639, %v2646
    %v2648 = vrot.slane %v2611, 4
    %v2649 = vsel %vm1580, %v2648, %v2599
    %v2650 = vrot.slane %v2599, 4
    %v2651 = vsel %vm1580, %v2611, %v2650
    %v2653 = vunpack.c.l.s4 1934713408
    %v2654 = vunpack.c.0.s8 %v2653
    %v2655 = vperm.slane %v2649, %v2654
    %v2657 = vunpack.c.l.s4 1934713408
    %v2658 = vunpack.c.0.s8 %v2657
    %v2659 = vperm.slane %v2651, %v2658
    %v2660 = vrot.slane %v2631, 4
    %v2661 = vsel %vm1580, %v2660, %v2619
    %v2662 = vrot.slane %v2619, 4
    %v2663 = vsel %vm1580, %v2631, %v2662
    %v2665 = vunpack.c.l.s4 1934713408
    %v2666 = vunpack.c.0.s8 %v2665
    %v2667 = vperm.slane %v2661, %v2666
    %v2669 = vunpack.c.l.s4 1934713408
    %v2670 = vunpack.c.0.s8 %v2669
    %v2671 = vperm.slane %v2663, %v2670
    %v2672 = vrot.slane %v2635, 4
    %v2673 = vsel %vm1580, %v2672, %v2623
    %v2674 = vrot.slane %v2623, 4
    %v2675 = vsel %vm1580, %v2635, %v2674
    %v2677 = vunpack.c.l.s4 1934713408
    %v2678 = vunpack.c.0.s8 %v2677
    %v2679 = vperm.slane %v2673, %v2678
    %v2681 = vunpack.c.l.s4 1934713408
    %v2682 = vunpack.c.0.s8 %v2681
    %v2683 = vperm.slane %v2675, %v2682
    %v2684 = vrot.slane %v2667, 4
    %v2685 = vsel %vm1580, %v2684, %v2643
    %v2686 = vrot.slane %v2643, 4
    %v2687 = vsel %vm1580, %v2667, %v2686
    %v2688 = vrot.slane %v2671, 4
    %v2689 = vsel %vm1580, %v2688, %v2647
    %v2690 = vrot.slane %v2647, 4
    %v2691 = vsel %vm1580, %v2671, %v2690
    %v2692 = vrot.slane %v2679, 4
    %v2693 = vsel %vm1580, %v2692, %v2655
    %v2694 = vrot.slane %v2655, 4
    %v2695 = vsel %vm1580, %v2679, %v2694
    %v2696 = vrot.slane %v2683, 4
    %v2697 = vsel %vm1580, %v2696, %v2659
    %v2698 = vrot.slane %v2659, 4
    %v2699 = vsel %vm1580, %v2683, %v2698
    %v2700 = vrot.slane %v257, 4
    %v2701 = vsel %vm1580, %v2700, %v63
    %v2702 = vrot.slane %v63, 4
    %v2703 = vsel %vm1580, %v257, %v2702
    %v2705 = vunpack.c.l.s4 1983009808
    %v2706 = vunpack.c.0.s8 %v2705
    %v2707 = vperm.slane %v2701, %v2706
    %v2709 = vunpack.c.l.s4 1983009808
    %v2710 = vunpack.c.0.s8 %v2709
    %v2711 = vperm.slane %v2703, %v2710
    %v2712 = vrot.slane %v354, 4
    %v2713 = vsel %vm1580, %v2712, %v160
    %v2714 = vrot.slane %v160, 4
    %v2715 = vsel %vm1580, %v354, %v2714
    %v2717 = vunpack.c.l.s4 1983009808
    %v2718 = vunpack.c.0.s8 %v2717
    %v2719 = vperm.slane %v2713, %v2718
    %v2721 = vunpack.c.l.s4 1983009808
    %v2722 = vunpack.c.0.s8 %v2721
    %v2723 = vperm.slane %v2715, %v2722
    %v2724 = vrot.slane %v645, 4
    %v2725 = vsel %vm1580, %v2724, %v451
    %v2726 = vrot.slane %v451, 4
    %v2727 = vsel %vm1580, %v645, %v2726
    %v2729 = vunpack.c.l.s4 1983009808
    %v2730 = vunpack.c.0.s8 %v2729
    %v2731 = vperm.slane %v2725, %v2730
    %v2733 = vunpack.c.l.s4 1983009808
    %v2734 = vunpack.c.0.s8 %v2733
    %v2735 = vperm.slane %v2727, %v2734
    %v2736 = vrot.slane %v742, 4
    %v2737 = vsel %vm1580, %v2736, %v548
    %v2738 = vrot.slane %v548, 4
    %v2739 = vsel %vm1580, %v742, %v2738
    %v2741 = vunpack.c.l.s4 1983009808
    %v2742 = vunpack.c.0.s8 %v2741
    %v2743 = vperm.slane %v2737, %v2742
    %v2745 = vunpack.c.l.s4 1983009808
    %v2746 = vunpack.c.0.s8 %v2745
    %v2747 = vperm.slane %v2739, %v2746
    %v2748 = vrot.slane %v2719, 4
    %v2749 = vsel %vm1580, %v2748, %v2707
    %v2750 = vrot.slane %v2707, 4
    %v2751 = vsel %vm1580, %v2719, %v2750
    %v2753 = vunpack.c.l.s4 1934713408
    %v2754 = vunpack.c.0.s8 %v2753
    %v2755 = vperm.slane %v2749, %v2754
    %v2757 = vunpack.c.l.s4 1934713408
    %v2758 = vunpack.c.0.s8 %v2757
    %v2759 = vperm.slane %v2751, %v2758
    %v2760 = vrot.slane %v2723, 4
    %v2761 = vsel %vm1580, %v2760, %v2711
    %v2762 = vrot.slane %v2711, 4
    %v2763 = vsel %vm1580, %v2723, %v2762
    %v2765 = vunpack.c.l.s4 1934713408
    %v2766 = vunpack.c.0.s8 %v2765
    %v2767 = vperm.slane %v2761, %v2766
    %v2769 = vunpack.c.l.s4 1934713408
    %v2770 = vunpack.c.0.s8 %v2769
    %v2771 = vperm.slane %v2763, %v2770
    %v2772 = vrot.slane %v2743, 4
    %v2773 = vsel %vm1580, %v2772, %v2731
    %v2774 = vrot.slane %v2731, 4
    %v2775 = vsel %vm1580, %v2743, %v2774
    %v2777 = vunpack.c.l.s4 1934713408
    %v2778 = vunpack.c.0.s8 %v2777
    %v2779 = vperm.slane %v2773, %v2778
    %v2781 = vunpack.c.l.s4 1934713408
    %v2782 = vunpack.c.0.s8 %v2781
    %v2783 = vperm.slane %v2775, %v2782
    %v2784 = vrot.slane %v2747, 4
    %v2785 = vsel %vm1580, %v2784, %v2735
    %v2786 = vrot.slane %v2735, 4
    %v2787 = vsel %vm1580, %v2747, %v2786
    %v2789 = vunpack.c.l.s4 1934713408
    %v2790 = vunpack.c.0.s8 %v2789
    %v2791 = vperm.slane %v2785, %v2790
    %v2793 = vunpack.c.l.s4 1934713408
    %v2794 = vunpack.c.0.s8 %v2793
    %v2795 = vperm.slane %v2787, %v2794
    %v2796 = vrot.slane %v2779, 4
    %v2797 = vsel %vm1580, %v2796, %v2755
    %v2798 = vrot.slane %v2755, 4
    %v2799 = vsel %vm1580, %v2779, %v2798
    %v2800 = vrot.slane %v2783, 4
    %v2801 = vsel %vm1580, %v2800, %v2759
    %v2802 = vrot.slane %v2759, 4
    %v2803 = vsel %vm1580, %v2783, %v2802
    %v2804 = vrot.slane %v2791, 4
    %v2805 = vsel %vm1580, %v2804, %v2767
    %v2806 = vrot.slane %v2767, 4
    %v2807 = vsel %vm1580, %v2791, %v2806
    %v2808 = vrot.slane %v2795, 4
    %v2809 = vsel %vm1580, %v2808, %v2771
    %v2810 = vrot.slane %v2771, 4
    %v2811 = vsel %vm1580, %v2795, %v2810
    %v2812 = vrot.slane %v1033, 4
    %v2813 = vsel %vm1580, %v2812, %v839
    %v2814 = vrot.slane %v839, 4
    %v2815 = vsel %vm1580, %v1033, %v2814
    %v2817 = vunpack.c.l.s4 1983009808
    %v2818 = vunpack.c.0.s8 %v2817
    %v2819 = vperm.slane %v2813, %v2818
    %v2821 = vunpack.c.l.s4 1983009808
    %v2822 = vunpack.c.0.s8 %v2821
    %v2823 = vperm.slane %v2815, %v2822
    %v2824 = vrot.slane %v1130, 4
    %v2825 = vsel %vm1580, %v2824, %v936
    %v2826 = vrot.slane %v936, 4
    %v2827 = vsel %vm1580, %v1130, %v2826
    %v2829 = vunpack.c.l.s4 1983009808
    %v2830 = vunpack.c.0.s8 %v2829
    %v2831 = vperm.slane %v2825, %v2830
    %v2833 = vunpack.c.l.s4 1983009808
    %v2834 = vunpack.c.0.s8 %v2833
    %v2835 = vperm.slane %v2827, %v2834
    %v2836 = vrot.slane %v1421, 4
    %v2837 = vsel %vm1580, %v2836, %v1227
    %v2838 = vrot.slane %v1227, 4
    %v2839 = vsel %vm1580, %v1421, %v2838
    %v2841 = vunpack.c.l.s4 1983009808
    %v2842 = vunpack.c.0.s8 %v2841
    %v2843 = vperm.slane %v2837, %v2842
    %v2845 = vunpack.c.l.s4 1983009808
    %v2846 = vunpack.c.0.s8 %v2845
    %v2847 = vperm.slane %v2839, %v2846
    %v2848 = vrot.slane %v1518, 4
    %v2849 = vsel %vm1580, %v2848, %v1324
    %v2850 = vrot.slane %v1324, 4
    %v2851 = vsel %vm1580, %v1518, %v2850
    %v2853 = vunpack.c.l.s4 1983009808
    %v2854 = vunpack.c.0.s8 %v2853
    %v2855 = vperm.slane %v2849, %v2854
    %v2857 = vunpack.c.l.s4 1983009808
    %v2858 = vunpack.c.0.s8 %v2857
    %v2859 = vperm.slane %v2851, %v2858
    %v2860 = vrot.slane %v2831, 4
    %v2861 = vsel %vm1580, %v2860, %v2819
    %v2862 = vrot.slane %v2819, 4
    %v2863 = vsel %vm1580, %v2831, %v2862
    %v2865 = vunpack.c.l.s4 1934713408
    %v2866 = vunpack.c.0.s8 %v2865
    %v2867 = vperm.slane %v2861, %v2866
    %v2869 = vunpack.c.l.s4 1934713408
    %v2870 = vunpack.c.0.s8 %v2869
    %v2871 = vperm.slane %v2863, %v2870
    %v2872 = vrot.slane %v2835, 4
    %v2873 = vsel %vm1580, %v2872, %v2823
    %v2874 = vrot.slane %v2823, 4
    %v2875 = vsel %vm1580, %v2835, %v2874
    %v2877 = vunpack.c.l.s4 1934713408
    %v2878 = vunpack.c.0.s8 %v2877
    %v2879 = vperm.slane %v2873, %v2878
    %v2881 = vunpack.c.l.s4 1934713408
    %v2882 = vunpack.c.0.s8 %v2881
    %v2883 = vperm.slane %v2875, %v2882
    %v2884 = vrot.slane %v2855, 4
    %v2885 = vsel %vm1580, %v2884, %v2843
    %v2886 = vrot.slane %v2843, 4
    %v2887 = vsel %vm1580, %v2855, %v2886
    %v2889 = vunpack.c.l.s4 1934713408
    %v2890 = vunpack.c.0.s8 %v2889
    %v2891 = vperm.slane %v2885, %v2890
    %v2893 = vunpack.c.l.s4 1934713408
    %v2894 = vunpack.c.0.s8 %v2893
    %v2895 = vperm.slane %v2887, %v2894
    %v2896 = vrot.slane %v2859, 4
    %v2897 = vsel %vm1580, %v2896, %v2847
    %v2898 = vrot.slane %v2847, 4
    %v2899 = vsel %vm1580, %v2859, %v2898
    %v2901 = vunpack.c.l.s4 1934713408
    %v2902 = vunpack.c.0.s8 %v2901
    %v2903 = vperm.slane %v2897, %v2902
    %v2905 = vunpack.c.l.s4 1934713408
    %v2906 = vunpack.c.0.s8 %v2905
    %v2907 = vperm.slane %v2899, %v2906
    %v2908 = vrot.slane %v2891, 4
    %v2909 = vsel %vm1580, %v2908, %v2867
    %v2910 = vrot.slane %v2867, 4
    %v2911 = vsel %vm1580, %v2891, %v2910
    %v2912 = vrot.slane %v2895, 4
    %v2913 = vsel %vm1580, %v2912, %v2871
    %v2914 = vrot.slane %v2871, 4
    %v2915 = vsel %vm1580, %v2895, %v2914
    %v2916 = vrot.slane %v2903, 4
    %v2917 = vsel %vm1580, %v2916, %v2879
    %v2918 = vrot.slane %v2879, 4
    %v2919 = vsel %vm1580, %v2903, %v2918
    %v2920 = vrot.slane %v2907, 4
    %v2921 = vsel %vm1580, %v2920, %v2883
    %v2922 = vrot.slane %v2883, 4
    %v2923 = vsel %vm1580, %v2907, %v2922
    %v2924 = vrot.slane %v263, 4
    %v2925 = vsel %vm1580, %v2924, %v69
    %v2926 = vrot.slane %v69, 4
    %v2927 = vsel %vm1580, %v263, %v2926
    %v2929 = vunpack.c.l.s4 1983009808
    %v2930 = vunpack.c.0.s8 %v2929
    %v2931 = vperm.slane %v2925, %v2930
    %v2933 = vunpack.c.l.s4 1983009808
    %v2934 = vunpack.c.0.s8 %v2933
    %v2935 = vperm.slane %v2927, %v2934
    %v2936 = vrot.slane %v360, 4
    %v2937 = vsel %vm1580, %v2936, %v166
    %v2938 = vrot.slane %v166, 4
    %v2939 = vsel %vm1580, %v360, %v2938
    %v2941 = vunpack.c.l.s4 1983009808
    %v2942 = vunpack.c.0.s8 %v2941
    %v2943 = vperm.slane %v2937, %v2942
    %v2945 = vunpack.c.l.s4 1983009808
    %v2946 = vunpack.c.0.s8 %v2945
    %v2947 = vperm.slane %v2939, %v2946
    %v2948 = vrot.slane %v651, 4
    %v2949 = vsel %vm1580, %v2948, %v457
    %v2950 = vrot.slane %v457, 4
    %v2951 = vsel %vm1580, %v651, %v2950
    %v2953 = vunpack.c.l.s4 1983009808
    %v2954 = vunpack.c.0.s8 %v2953
    %v2955 = vperm.slane %v2949, %v2954
    %v2957 = vunpack.c.l.s4 1983009808
    %v2958 = vunpack.c.0.s8 %v2957
    %v2959 = vperm.slane %v2951, %v2958
    %v2960 = vrot.slane %v748, 4
    %v2961 = vsel %vm1580, %v2960, %v554
    %v2962 = vrot.slane %v554, 4
    %v2963 = vsel %vm1580, %v748, %v2962
    %v2965 = vunpack.c.l.s4 1983009808
    %v2966 = vunpack.c.0.s8 %v2965
    %v2967 = vperm.slane %v2961, %v2966
    %v2969 = vunpack.c.l.s4 1983009808
    %v2970 = vunpack.c.0.s8 %v2969
    %v2971 = vperm.slane %v2963, %v2970
    %v2972 = vrot.slane %v2943, 4
    %v2973 = vsel %vm1580, %v2972, %v2931
    %v2974 = vrot.slane %v2931, 4
    %v2975 = vsel %vm1580, %v2943, %v2974
    %v2977 = vunpack.c.l.s4 1934713408
    %v2978 = vunpack.c.0.s8 %v2977
    %v2979 = vperm.slane %v2973, %v2978
    %v2981 = vunpack.c.l.s4 1934713408
    %v2982 = vunpack.c.0.s8 %v2981
    %v2983 = vperm.slane %v2975, %v2982
    %v2984 = vrot.slane %v2947, 4
    %v2985 = vsel %vm1580, %v2984, %v2935
    %v2986 = vrot.slane %v2935, 4
    %v2987 = vsel %vm1580, %v2947, %v2986
    %v2989 = vunpack.c.l.s4 1934713408
    %v2990 = vunpack.c.0.s8 %v2989
    %v2991 = vperm.slane %v2985, %v2990
    %v2993 = vunpack.c.l.s4 1934713408
    %v2994 = vunpack.c.0.s8 %v2993
    %v2995 = vperm.slane %v2987, %v2994
    %v2996 = vrot.slane %v2967, 4
    %v2997 = vsel %vm1580, %v2996, %v2955
    %v2998 = vrot.slane %v2955, 4
    %v2999 = vsel %vm1580, %v2967, %v2998
    %v3001 = vunpack.c.l.s4 1934713408
    %v3002 = vunpack.c.0.s8 %v3001
    %v3003 = vperm.slane %v2997, %v3002
    %v3005 = vunpack.c.l.s4 1934713408
    %v3006 = vunpack.c.0.s8 %v3005
    %v3007 = vperm.slane %v2999, %v3006
    %v3008 = vrot.slane %v2971, 4
    %v3009 = vsel %vm1580, %v3008, %v2959
    %v3010 = vrot.slane %v2959, 4
    %v3011 = vsel %vm1580, %v2971, %v3010
    %v3013 = vunpack.c.l.s4 1934713408
    %v3014 = vunpack.c.0.s8 %v3013
    %v3015 = vperm.slane %v3009, %v3014
    %v3017 = vunpack.c.l.s4 1934713408
    %v3018 = vunpack.c.0.s8 %v3017
    %v3019 = vperm.slane %v3011, %v3018
    %v3020 = vrot.slane %v3003, 4
    %v3021 = vsel %vm1580, %v3020, %v2979
    %v3022 = vrot.slane %v2979, 4
    %v3023 = vsel %vm1580, %v3003, %v3022
    %v3024 = vrot.slane %v3007, 4
    %v3025 = vsel %vm1580, %v3024, %v2983
    %v3026 = vrot.slane %v2983, 4
    %v3027 = vsel %vm1580, %v3007, %v3026
    %v3028 = vrot.slane %v3015, 4
    %v3029 = vsel %vm1580, %v3028, %v2991
    %v3030 = vrot.slane %v2991, 4
    %v3031 = vsel %vm1580, %v3015, %v3030
    %v3032 = vrot.slane %v3019, 4
    %v3033 = vsel %vm1580, %v3032, %v2995
    %v3034 = vrot.slane %v2995, 4
    %v3035 = vsel %vm1580, %v3019, %v3034
    %v3036 = vrot.slane %v1039, 4
    %v3037 = vsel %vm1580, %v3036, %v845
    %v3038 = vrot.slane %v845, 4
    %v3039 = vsel %vm1580, %v1039, %v3038
    %v3041 = vunpack.c.l.s4 1983009808
    %v3042 = vunpack.c.0.s8 %v3041
    %v3043 = vperm.slane %v3037, %v3042
    %v3045 = vunpack.c.l.s4 1983009808
    %v3046 = vunpack.c.0.s8 %v3045
    %v3047 = vperm.slane %v3039, %v3046
    %v3048 = vrot.slane %v1136, 4
    %v3049 = vsel %vm1580, %v3048, %v942
    %v3050 = vrot.slane %v942, 4
    %v3051 = vsel %vm1580, %v1136, %v3050
    %v3053 = vunpack.c.l.s4 1983009808
    %v3054 = vunpack.c.0.s8 %v3053
    %v3055 = vperm.slane %v3049, %v3054
    %v3057 = vunpack.c.l.s4 1983009808
    %v3058 = vunpack.c.0.s8 %v3057
    %v3059 = vperm.slane %v3051, %v3058
    %v3060 = vrot.slane %v1427, 4
    %v3061 = vsel %vm1580, %v3060, %v1233
    %v3062 = vrot.slane %v1233, 4
    %v3063 = vsel %vm1580, %v1427, %v3062
    %v3065 = vunpack.c.l.s4 1983009808
    %v3066 = vunpack.c.0.s8 %v3065
    %v3067 = vperm.slane %v3061, %v3066
    %v3069 = vunpack.c.l.s4 1983009808
    %v3070 = vunpack.c.0.s8 %v3069
    %v3071 = vperm.slane %v3063, %v3070
    %v3072 = vrot.slane %v1524, 4
    %v3073 = vsel %vm1580, %v3072, %v1330
    %v3074 = vrot.slane %v1330, 4
    %v3075 = vsel %vm1580, %v1524, %v3074
    %v3077 = vunpack.c.l.s4 1983009808
    %v3078 = vunpack.c.0.s8 %v3077
    %v3079 = vperm.slane %v3073, %v3078
    %v3081 = vunpack.c.l.s4 1983009808
    %v3082 = vunpack.c.0.s8 %v3081
    %v3083 = vperm.slane %v3075, %v3082
    %v3084 = vrot.slane %v3055, 4
    %v3085 = vsel %vm1580, %v3084, %v3043
    %v3086 = vrot.slane %v3043, 4
    %v3087 = vsel %vm1580, %v3055, %v3086
    %v3089 = vunpack.c.l.s4 1934713408
    %v3090 = vunpack.c.0.s8 %v3089
    %v3091 = vperm.slane %v3085, %v3090
    %v3093 = vunpack.c.l.s4 1934713408
    %v3094 = vunpack.c.0.s8 %v3093
    %v3095 = vperm.slane %v3087, %v3094
    %v3096 = vrot.slane %v3059, 4
    %v3097 = vsel %vm1580, %v3096, %v3047
    %v3098 = vrot.slane %v3047, 4
    %v3099 = vsel %vm1580, %v3059, %v3098
    %v3101 = vunpack.c.l.s4 1934713408
    %v3102 = vunpack.c.0.s8 %v3101
    %v3103 = vperm.slane %v3097, %v3102
    %v3105 = vunpack.c.l.s4 1934713408
    %v3106 = vunpack.c.0.s8 %v3105
    %v3107 = vperm.slane %v3099, %v3106
    %v3108 = vrot.slane %v3079, 4
    %v3109 = vsel %vm1580, %v3108, %v3067
    %v3110 = vrot.slane %v3067, 4
    %v3111 = vsel %vm1580, %v3079, %v3110
    %v3113 = vunpack.c.l.s4 1934713408
    %v3114 = vunpack.c.0.s8 %v3113
    %v3115 = vperm.slane %v3109, %v3114
    %v3117 = vunpack.c.l.s4 1934713408
    %v3118 = vunpack.c.0.s8 %v3117
    %v3119 = vperm.slane %v3111, %v3118
    %v3120 = vrot.slane %v3083, 4
    %v3121 = vsel %vm1580, %v3120, %v3071
    %v3122 = vrot.slane %v3071, 4
    %v3123 = vsel %vm1580, %v3083, %v3122
    %v3125 = vunpack.c.l.s4 1934713408
    %v3126 = vunpack.c.0.s8 %v3125
    %v3127 = vperm.slane %v3121, %v3126
    %v3129 = vunpack.c.l.s4 1934713408
    %v3130 = vunpack.c.0.s8 %v3129
    %v3131 = vperm.slane %v3123, %v3130
    %v3132 = vrot.slane %v3115, 4
    %v3133 = vsel %vm1580, %v3132, %v3091
    %v3134 = vrot.slane %v3091, 4
    %v3135 = vsel %vm1580, %v3115, %v3134
    %v3136 = vrot.slane %v3119, 4
    %v3137 = vsel %vm1580, %v3136, %v3095
    %v3138 = vrot.slane %v3095, 4
    %v3139 = vsel %vm1580, %v3119, %v3138
    %v3140 = vrot.slane %v3127, 4
    %v3141 = vsel %vm1580, %v3140, %v3103
    %v3142 = vrot.slane %v3103, 4
    %v3143 = vsel %vm1580, %v3127, %v3142
    %v3144 = vrot.slane %v3131, 4
    %v3145 = vsel %vm1580, %v3144, %v3107
    %v3146 = vrot.slane %v3107, 4
    %v3147 = vsel %vm1580, %v3131, %v3146
    %v3148 = vrot.slane %v269, 4
    %v3149 = vsel %vm1580, %v3148, %v75
    %v3150 = vrot.slane %v75, 4
    %v3151 = vsel %vm1580, %v269, %v3150
    %v3153 = vunpack.c.l.s4 1983009808
    %v3154 = vunpack.c.0.s8 %v3153
    %v3155 = vperm.slane %v3149, %v3154
    %v3157 = vunpack.c.l.s4 1983009808
    %v3158 = vunpack.c.0.s8 %v3157
    %v3159 = vperm.slane %v3151, %v3158
    %v3160 = vrot.slane %v366, 4
    %v3161 = vsel %vm1580, %v3160, %v172
    %v3162 = vrot.slane %v172, 4
    %v3163 = vsel %vm1580, %v366, %v3162
    %v3165 = vunpack.c.l.s4 1983009808
    %v3166 = vunpack.c.0.s8 %v3165
    %v3167 = vperm.slane %v3161, %v3166
    %v3169 = vunpack.c.l.s4 1983009808
    %v3170 = vunpack.c.0.s8 %v3169
    %v3171 = vperm.slane %v3163, %v3170
    %v3172 = vrot.slane %v657, 4
    %v3173 = vsel %vm1580, %v3172, %v463
    %v3174 = vrot.slane %v463, 4
    %v3175 = vsel %vm1580, %v657, %v3174
    %v3177 = vunpack.c.l.s4 1983009808
    %v3178 = vunpack.c.0.s8 %v3177
    %v3179 = vperm.slane %v3173, %v3178
    %v3181 = vunpack.c.l.s4 1983009808
    %v3182 = vunpack.c.0.s8 %v3181
    %v3183 = vperm.slane %v3175, %v3182
    %v3184 = vrot.slane %v754, 4
    %v3185 = vsel %vm1580, %v3184, %v560
    %v3186 = vrot.slane %v560, 4
    %v3187 = vsel %vm1580, %v754, %v3186
    %v3189 = vunpack.c.l.s4 1983009808
    %v3190 = vunpack.c.0.s8 %v3189
    %v3191 = vperm.slane %v3185, %v3190
    %v3193 = vunpack.c.l.s4 1983009808
    %v3194 = vunpack.c.0.s8 %v3193
    %v3195 = vperm.slane %v3187, %v3194
    %v3196 = vrot.slane %v3167, 4
    %v3197 = vsel %vm1580, %v3196, %v3155
    %v3198 = vrot.slane %v3155, 4
    %v3199 = vsel %vm1580, %v3167, %v3198
    %v3201 = vunpack.c.l.s4 1934713408
    %v3202 = vunpack.c.0.s8 %v3201
    %v3203 = vperm.slane %v3197, %v3202
    %v3205 = vunpack.c.l.s4 1934713408
    %v3206 = vunpack.c.0.s8 %v3205
    %v3207 = vperm.slane %v3199, %v3206
    %v3208 = vrot.slane %v3171, 4
    %v3209 = vsel %vm1580, %v3208, %v3159
    %v3210 = vrot.slane %v3159, 4
    %v3211 = vsel %vm1580, %v3171, %v3210
    %v3213 = vunpack.c.l.s4 1934713408
    %v3214 = vunpack.c.0.s8 %v3213
    %v3215 = vperm.slane %v3209, %v3214
    %v3217 = vunpack.c.l.s4 1934713408
    %v3218 = vunpack.c.0.s8 %v3217
    %v3219 = vperm.slane %v3211, %v3218
    %v3220 = vrot.slane %v3191, 4
    %v3221 = vsel %vm1580, %v3220, %v3179
    %v3222 = vrot.slane %v3179, 4
    %v3223 = vsel %vm1580, %v3191, %v3222
    %v3225 = vunpack.c.l.s4 1934713408
    %v3226 = vunpack.c.0.s8 %v3225
    %v3227 = vperm.slane %v3221, %v3226
    %v3229 = vunpack.c.l.s4 1934713408
    %v3230 = vunpack.c.0.s8 %v3229
    %v3231 = vperm.slane %v3223, %v3230
    %v3232 = vrot.slane %v3195, 4
    %v3233 = vsel %vm1580, %v3232, %v3183
    %v3234 = vrot.slane %v3183, 4
    %v3235 = vsel %vm1580, %v3195, %v3234
    %v3237 = vunpack.c.l.s4 1934713408
    %v3238 = vunpack.c.0.s8 %v3237
    %v3239 = vperm.slane %v3233, %v3238
    %v3241 = vunpack.c.l.s4 1934713408
    %v3242 = vunpack.c.0.s8 %v3241
    %v3243 = vperm.slane %v3235, %v3242
    %v3244 = vrot.slane %v3227, 4
    %v3245 = vsel %vm1580, %v3244, %v3203
    %v3246 = vrot.slane %v3203, 4
    %v3247 = vsel %vm1580, %v3227, %v3246
    %v3248 = vrot.slane %v3231, 4
    %v3249 = vsel %vm1580, %v3248, %v3207
    %v3250 = vrot.slane %v3207, 4
    %v3251 = vsel %vm1580, %v3231, %v3250
    %v3252 = vrot.slane %v3239, 4
    %v3253 = vsel %vm1580, %v3252, %v3215
    %v3254 = vrot.slane %v3215, 4
    %v3255 = vsel %vm1580, %v3239, %v3254
    %v3256 = vrot.slane %v3243, 4
    %v3257 = vsel %vm1580, %v3256, %v3219
    %v3258 = vrot.slane %v3219, 4
    %v3259 = vsel %vm1580, %v3243, %v3258
    %v3260 = vrot.slane %v1045, 4
    %v3261 = vsel %vm1580, %v3260, %v851
    %v3262 = vrot.slane %v851, 4
    %v3263 = vsel %vm1580, %v1045, %v3262
    %v3265 = vunpack.c.l.s4 1983009808
    %v3266 = vunpack.c.0.s8 %v3265
    %v3267 = vperm.slane %v3261, %v3266
    %v3269 = vunpack.c.l.s4 1983009808
    %v3270 = vunpack.c.0.s8 %v3269
    %v3271 = vperm.slane %v3263, %v3270
    %v3272 = vrot.slane %v1142, 4
    %v3273 = vsel %vm1580, %v3272, %v948
    %v3274 = vrot.slane %v948, 4
    %v3275 = vsel %vm1580, %v1142, %v3274
    %v3277 = vunpack.c.l.s4 1983009808
    %v3278 = vunpack.c.0.s8 %v3277
    %v3279 = vperm.slane %v3273, %v3278
    %v3281 = vunpack.c.l.s4 1983009808
    %v3282 = vunpack.c.0.s8 %v3281
    %v3283 = vperm.slane %v3275, %v3282
    %v3284 = vrot.slane %v1433, 4
    %v3285 = vsel %vm1580, %v3284, %v1239
    %v3286 = vrot.slane %v1239, 4
    %v3287 = vsel %vm1580, %v1433, %v3286
    %v3289 = vunpack.c.l.s4 1983009808
    %v3290 = vunpack.c.0.s8 %v3289
    %v3291 = vperm.slane %v3285, %v3290
    %v3293 = vunpack.c.l.s4 1983009808
    %v3294 = vunpack.c.0.s8 %v3293
    %v3295 = vperm.slane %v3287, %v3294
    %v3296 = vrot.slane %v1530, 4
    %v3297 = vsel %vm1580, %v3296, %v1336
    %v3298 = vrot.slane %v1336, 4
    %v3299 = vsel %vm1580, %v1530, %v3298
    %v3301 = vunpack.c.l.s4 1983009808
    %v3302 = vunpack.c.0.s8 %v3301
    %v3303 = vperm.slane %v3297, %v3302
    %v3305 = vunpack.c.l.s4 1983009808
    %v3306 = vunpack.c.0.s8 %v3305
    %v3307 = vperm.slane %v3299, %v3306
    %v3308 = vrot.slane %v3279, 4
    %v3309 = vsel %vm1580, %v3308, %v3267
    %v3310 = vrot.slane %v3267, 4
    %v3311 = vsel %vm1580, %v3279, %v3310
    %v3313 = vunpack.c.l.s4 1934713408
    %v3314 = vunpack.c.0.s8 %v3313
    %v3315 = vperm.slane %v3309, %v3314
    %v3317 = vunpack.c.l.s4 1934713408
    %v3318 = vunpack.c.0.s8 %v3317
    %v3319 = vperm.slane %v3311, %v3318
    %v3320 = vrot.slane %v3283, 4
    %v3321 = vsel %vm1580, %v3320, %v3271
    %v3322 = vrot.slane %v3271, 4
    %v3323 = vsel %vm1580, %v3283, %v3322
    %v3325 = vunpack.c.l.s4 1934713408
    %v3326 = vunpack.c.0.s8 %v3325
    %v3327 = vperm.slane %v3321, %v3326
    %v3329 = vunpack.c.l.s4 1934713408
    %v3330 = vunpack.c.0.s8 %v3329
    %v3331 = vperm.slane %v3323, %v3330
    %v3332 = vrot.slane %v3303, 4
    %v3333 = vsel %vm1580, %v3332, %v3291
    %v3334 = vrot.slane %v3291, 4
    %v3335 = vsel %vm1580, %v3303, %v3334
    %v3337 = vunpack.c.l.s4 1934713408
    %v3338 = vunpack.c.0.s8 %v3337
    %v3339 = vperm.slane %v3333, %v3338
    %v3341 = vunpack.c.l.s4 1934713408
    %v3342 = vunpack.c.0.s8 %v3341
    %v3343 = vperm.slane %v3335, %v3342
    %v3344 = vrot.slane %v3307, 4
    %v3345 = vsel %vm1580, %v3344, %v3295
    %v3346 = vrot.slane %v3295, 4
    %v3347 = vsel %vm1580, %v3307, %v3346
    %v3349 = vunpack.c.l.s4 1934713408
    %v3350 = vunpack.c.0.s8 %v3349
    %v3351 = vperm.slane %v3345, %v3350
    %v3353 = vunpack.c.l.s4 1934713408
    %v3354 = vunpack.c.0.s8 %v3353
    %v3355 = vperm.slane %v3347, %v3354
    %v3356 = vrot.slane %v3339, 4
    %v3357 = vsel %vm1580, %v3356, %v3315
    %v3358 = vrot.slane %v3315, 4
    %v3359 = vsel %vm1580, %v3339, %v3358
    %v3360 = vrot.slane %v3343, 4
    %v3361 = vsel %vm1580, %v3360, %v3319
    %v3362 = vrot.slane %v3319, 4
    %v3363 = vsel %vm1580, %v3343, %v3362
    %v3364 = vrot.slane %v3351, 4
    %v3365 = vsel %vm1580, %v3364, %v3327
    %v3366 = vrot.slane %v3327, 4
    %v3367 = vsel %vm1580, %v3351, %v3366
    %v3368 = vrot.slane %v3355, 4
    %v3369 = vsel %vm1580, %v3368, %v3331
    %v3370 = vrot.slane %v3331, 4
    %v3371 = vsel %vm1580, %v3355, %v3370
    %v3372 = vrot.slane %v275, 4
    %v3373 = vsel %vm1580, %v3372, %v81
    %v3374 = vrot.slane %v81, 4
    %v3375 = vsel %vm1580, %v275, %v3374
    %v3377 = vunpack.c.l.s4 1983009808
    %v3378 = vunpack.c.0.s8 %v3377
    %v3379 = vperm.slane %v3373, %v3378
    %v3381 = vunpack.c.l.s4 1983009808
    %v3382 = vunpack.c.0.s8 %v3381
    %v3383 = vperm.slane %v3375, %v3382
    %v3384 = vrot.slane %v372, 4
    %v3385 = vsel %vm1580, %v3384, %v178
    %v3386 = vrot.slane %v178, 4
    %v3387 = vsel %vm1580, %v372, %v3386
    %v3389 = vunpack.c.l.s4 1983009808
    %v3390 = vunpack.c.0.s8 %v3389
    %v3391 = vperm.slane %v3385, %v3390
    %v3393 = vunpack.c.l.s4 1983009808
    %v3394 = vunpack.c.0.s8 %v3393
    %v3395 = vperm.slane %v3387, %v3394
    %v3396 = vrot.slane %v663, 4
    %v3397 = vsel %vm1580, %v3396, %v469
    %v3398 = vrot.slane %v469, 4
    %v3399 = vsel %vm1580, %v663, %v3398
    %v3401 = vunpack.c.l.s4 1983009808
    %v3402 = vunpack.c.0.s8 %v3401
    %v3403 = vperm.slane %v3397, %v3402
    %v3405 = vunpack.c.l.s4 1983009808
    %v3406 = vunpack.c.0.s8 %v3405
    %v3407 = vperm.slane %v3399, %v3406
    %v3408 = vrot.slane %v760, 4
    %v3409 = vsel %vm1580, %v3408, %v566
    %v3410 = vrot.slane %v566, 4
    %v3411 = vsel %vm1580, %v760, %v3410
    %v3413 = vunpack.c.l.s4 1983009808
    %v3414 = vunpack.c.0.s8 %v3413
    %v3415 = vperm.slane %v3409, %v3414
    %v3417 = vunpack.c.l.s4 1983009808
    %v3418 = vunpack.c.0.s8 %v3417
    %v3419 = vperm.slane %v3411, %v3418
    %v3420 = vrot.slane %v3391, 4
    %v3421 = vsel %vm1580, %v3420, %v3379
    %v3422 = vrot.slane %v3379, 4
    %v3423 = vsel %vm1580, %v3391, %v3422
    %v3425 = vunpack.c.l.s4 1934713408
    %v3426 = vunpack.c.0.s8 %v3425
    %v3427 = vperm.slane %v3421, %v3426
    %v3429 = vunpack.c.l.s4 1934713408
    %v3430 = vunpack.c.0.s8 %v3429
    %v3431 = vperm.slane %v3423, %v3430
    %v3432 = vrot.slane %v3395, 4
    %v3433 = vsel %vm1580, %v3432, %v3383
    %v3434 = vrot.slane %v3383, 4
    %v3435 = vsel %vm1580, %v3395, %v3434
    %v3437 = vunpack.c.l.s4 1934713408
    %v3438 = vunpack.c.0.s8 %v3437
    %v3439 = vperm.slane %v3433, %v3438
    %v3441 = vunpack.c.l.s4 1934713408
    %v3442 = vunpack.c.0.s8 %v3441
    %v3443 = vperm.slane %v3435, %v3442
    %v3444 = vrot.slane %v3415, 4
    %v3445 = vsel %vm1580, %v3444, %v3403
    %v3446 = vrot.slane %v3403, 4
    %v3447 = vsel %vm1580, %v3415, %v3446
    %v3449 = vunpack.c.l.s4 1934713408
    %v3450 = vunpack.c.0.s8 %v3449
    %v3451 = vperm.slane %v3445, %v3450
    %v3453 = vunpack.c.l.s4 1934713408
    %v3454 = vunpack.c.0.s8 %v3453
    %v3455 = vperm.slane %v3447, %v3454
    %v3456 = vrot.slane %v3419, 4
    %v3457 = vsel %vm1580, %v3456, %v3407
    %v3458 = vrot.slane %v3407, 4
    %v3459 = vsel %vm1580, %v3419, %v3458
    %v3461 = vunpack.c.l.s4 1934713408
    %v3462 = vunpack.c.0.s8 %v3461
    %v3463 = vperm.slane %v3457, %v3462
    %v3465 = vunpack.c.l.s4 1934713408
    %v3466 = vunpack.c.0.s8 %v3465
    %v3467 = vperm.slane %v3459, %v3466
    %v3468 = vrot.slane %v3451, 4
    %v3469 = vsel %vm1580, %v3468, %v3427
    %v3470 = vrot.slane %v3427, 4
    %v3471 = vsel %vm1580, %v3451, %v3470
    %v3472 = vrot.slane %v3455, 4
    %v3473 = vsel %vm1580, %v3472, %v3431
    %v3474 = vrot.slane %v3431, 4
    %v3475 = vsel %vm1580, %v3455, %v3474
    %v3476 = vrot.slane %v3463, 4
    %v3477 = vsel %vm1580, %v3476, %v3439
    %v3478 = vrot.slane %v3439, 4
    %v3479 = vsel %vm1580, %v3463, %v3478
    %v3480 = vrot.slane %v3467, 4
    %v3481 = vsel %vm1580, %v3480, %v3443
    %v3482 = vrot.slane %v3443, 4
    %v3483 = vsel %vm1580, %v3467, %v3482
    %v3484 = vrot.slane %v1051, 4
    %v3485 = vsel %vm1580, %v3484, %v857
    %v3486 = vrot.slane %v857, 4
    %v3487 = vsel %vm1580, %v1051, %v3486
    %v3489 = vunpack.c.l.s4 1983009808
    %v3490 = vunpack.c.0.s8 %v3489
    %v3491 = vperm.slane %v3485, %v3490
    %v3493 = vunpack.c.l.s4 1983009808
    %v3494 = vunpack.c.0.s8 %v3493
    %v3495 = vperm.slane %v3487, %v3494
    %v3496 = vrot.slane %v1148, 4
    %v3497 = vsel %vm1580, %v3496, %v954
    %v3498 = vrot.slane %v954, 4
    %v3499 = vsel %vm1580, %v1148, %v3498
    %v3501 = vunpack.c.l.s4 1983009808
    %v3502 = vunpack.c.0.s8 %v3501
    %v3503 = vperm.slane %v3497, %v3502
    %v3505 = vunpack.c.l.s4 1983009808
    %v3506 = vunpack.c.0.s8 %v3505
    %v3507 = vperm.slane %v3499, %v3506
    %v3508 = vrot.slane %v1439, 4
    %v3509 = vsel %vm1580, %v3508, %v1245
    %v3510 = vrot.slane %v1245, 4
    %v3511 = vsel %vm1580, %v1439, %v3510
    %v3513 = vunpack.c.l.s4 1983009808
    %v3514 = vunpack.c.0.s8 %v3513
    %v3515 = vperm.slane %v3509, %v3514
    %v3517 = vunpack.c.l.s4 1983009808
    %v3518 = vunpack.c.0.s8 %v3517
    %v3519 = vperm.slane %v3511, %v3518
    %v3520 = vrot.slane %v1536, 4
    %v3521 = vsel %vm1580, %v3520, %v1342
    %v3522 = vrot.slane %v1342, 4
    %v3523 = vsel %vm1580, %v1536, %v3522
    %v3525 = vunpack.c.l.s4 1983009808
    %v3526 = vunpack.c.0.s8 %v3525
    %v3527 = vperm.slane %v3521, %v3526
    %v3529 = vunpack.c.l.s4 1983009808
    %v3530 = vunpack.c.0.s8 %v3529
    %v3531 = vperm.slane %v3523, %v3530
    %v3532 = vrot.slane %v3503, 4
    %v3533 = vsel %vm1580, %v3532, %v3491
    %v3534 = vrot.slane %v3491, 4
    %v3535 = vsel %vm1580, %v3503, %v3534
    %v3537 = vunpack.c.l.s4 1934713408
    %v3538 = vunpack.c.0.s8 %v3537
    %v3539 = vperm.slane %v3533, %v3538
    %v3541 = vunpack.c.l.s4 1934713408
    %v3542 = vunpack.c.0.s8 %v3541
    %v3543 = vperm.slane %v3535, %v3542
    %v3544 = vrot.slane %v3507, 4
    %v3545 = vsel %vm1580, %v3544, %v3495
    %v3546 = vrot.slane %v3495, 4
    %v3547 = vsel %vm1580, %v3507, %v3546
    %v3549 = vunpack.c.l.s4 1934713408
    %v3550 = vunpack.c.0.s8 %v3549
    %v3551 = vperm.slane %v3545, %v3550
    %v3553 = vunpack.c.l.s4 1934713408
    %v3554 = vunpack.c.0.s8 %v3553
    %v3555 = vperm.slane %v3547, %v3554
    %v3556 = vrot.slane %v3527, 4
    %v3557 = vsel %vm1580, %v3556, %v3515
    %v3558 = vrot.slane %v3515, 4
    %v3559 = vsel %vm1580, %v3527, %v3558
    %v3561 = vunpack.c.l.s4 1934713408
    %v3562 = vunpack.c.0.s8 %v3561
    %v3563 = vperm.slane %v3557, %v3562
    %v3565 = vunpack.c.l.s4 1934713408
    %v3566 = vunpack.c.0.s8 %v3565
    %v3567 = vperm.slane %v3559, %v3566
    %v3568 = vrot.slane %v3531, 4
    %v3569 = vsel %vm1580, %v3568, %v3519
    %v3570 = vrot.slane %v3519, 4
    %v3571 = vsel %vm1580, %v3531, %v3570
    %v3573 = vunpack.c.l.s4 1934713408
    %v3574 = vunpack.c.0.s8 %v3573
    %v3575 = vperm.slane %v3569, %v3574
    %v3577 = vunpack.c.l.s4 1934713408
    %v3578 = vunpack.c.0.s8 %v3577
    %v3579 = vperm.slane %v3571, %v3578
    %v3580 = vrot.slane %v3563, 4
    %v3581 = vsel %vm1580, %v3580, %v3539
    %v3582 = vrot.slane %v3539, 4
    %v3583 = vsel %vm1580, %v3563, %v3582
    %v3584 = vrot.slane %v3567, 4
    %v3585 = vsel %vm1580, %v3584, %v3543
    %v3586 = vrot.slane %v3543, 4
    %v3587 = vsel %vm1580, %v3567, %v3586
    %v3588 = vrot.slane %v3575, 4
    %v3589 = vsel %vm1580, %v3588, %v3551
    %v3590 = vrot.slane %v3551, 4
    %v3591 = vsel %vm1580, %v3575, %v3590
    %v3592 = vrot.slane %v3579, 4
    %v3593 = vsel %vm1580, %v3592, %v3555
    %v3594 = vrot.slane %v3555, 4
    %v3595 = vsel %vm1580, %v3579, %v3594
    %v3596 = vrot.slane %v281, 4
    %v3597 = vsel %vm1580, %v3596, %v87
    %v3598 = vrot.slane %v87, 4
    %v3599 = vsel %vm1580, %v281, %v3598
    %v3601 = vunpack.c.l.s4 1983009808
    %v3602 = vunpack.c.0.s8 %v3601
    %v3603 = vperm.slane %v3597, %v3602
    %v3605 = vunpack.c.l.s4 1983009808
    %v3606 = vunpack.c.0.s8 %v3605
    %v3607 = vperm.slane %v3599, %v3606
    %v3608 = vrot.slane %v378, 4
    %v3609 = vsel %vm1580, %v3608, %v184
    %v3610 = vrot.slane %v184, 4
    %v3611 = vsel %vm1580, %v378, %v3610
    %v3613 = vunpack.c.l.s4 1983009808
    %v3614 = vunpack.c.0.s8 %v3613
    %v3615 = vperm.slane %v3609, %v3614
    %v3617 = vunpack.c.l.s4 1983009808
    %v3618 = vunpack.c.0.s8 %v3617
    %v3619 = vperm.slane %v3611, %v3618
    %v3620 = vrot.slane %v669, 4
    %v3621 = vsel %vm1580, %v3620, %v475
    %v3622 = vrot.slane %v475, 4
    %v3623 = vsel %vm1580, %v669, %v3622
    %v3625 = vunpack.c.l.s4 1983009808
    %v3626 = vunpack.c.0.s8 %v3625
    %v3627 = vperm.slane %v3621, %v3626
    %v3629 = vunpack.c.l.s4 1983009808
    %v3630 = vunpack.c.0.s8 %v3629
    %v3631 = vperm.slane %v3623, %v3630
    %v3632 = vrot.slane %v766, 4
    %v3633 = vsel %vm1580, %v3632, %v572
    %v3634 = vrot.slane %v572, 4
    %v3635 = vsel %vm1580, %v766, %v3634
    %v3637 = vunpack.c.l.s4 1983009808
    %v3638 = vunpack.c.0.s8 %v3637
    %v3639 = vperm.slane %v3633, %v3638
    %v3641 = vunpack.c.l.s4 1983009808
    %v3642 = vunpack.c.0.s8 %v3641
    %v3643 = vperm.slane %v3635, %v3642
    %v3644 = vrot.slane %v3615, 4
    %v3645 = vsel %vm1580, %v3644, %v3603
    %v3646 = vrot.slane %v3603, 4
    %v3647 = vsel %vm1580, %v3615, %v3646
    %v3649 = vunpack.c.l.s4 1934713408
    %v3650 = vunpack.c.0.s8 %v3649
    %v3651 = vperm.slane %v3645, %v3650
    %v3653 = vunpack.c.l.s4 1934713408
    %v3654 = vunpack.c.0.s8 %v3653
    %v3655 = vperm.slane %v3647, %v3654
    %v3656 = vrot.slane %v3619, 4
    %v3657 = vsel %vm1580, %v3656, %v3607
    %v3658 = vrot.slane %v3607, 4
    %v3659 = vsel %vm1580, %v3619, %v3658
    %v3661 = vunpack.c.l.s4 1934713408
    %v3662 = vunpack.c.0.s8 %v3661
    %v3663 = vperm.slane %v3657, %v3662
    %v3665 = vunpack.c.l.s4 1934713408
    %v3666 = vunpack.c.0.s8 %v3665
    %v3667 = vperm.slane %v3659, %v3666
    %v3668 = vrot.slane %v3639, 4
    %v3669 = vsel %vm1580, %v3668, %v3627
    %v3670 = vrot.slane %v3627, 4
    %v3671 = vsel %vm1580, %v3639, %v3670
    %v3673 = vunpack.c.l.s4 1934713408
    %v3674 = vunpack.c.0.s8 %v3673
    %v3675 = vperm.slane %v3669, %v3674
    %v3677 = vunpack.c.l.s4 1934713408
    %v3678 = vunpack.c.0.s8 %v3677
    %v3679 = vperm.slane %v3671, %v3678
    %v3680 = vrot.slane %v3643, 4
    %v3681 = vsel %vm1580, %v3680, %v3631
    %v3682 = vrot.slane %v3631, 4
    %v3683 = vsel %vm1580, %v3643, %v3682
    %v3685 = vunpack.c.l.s4 1934713408
    %v3686 = vunpack.c.0.s8 %v3685
    %v3687 = vperm.slane %v3681, %v3686
    %v3689 = vunpack.c.l.s4 1934713408
    %v3690 = vunpack.c.0.s8 %v3689
    %v3691 = vperm.slane %v3683, %v3690
    %v3692 = vrot.slane %v3675, 4
    %v3693 = vsel %vm1580, %v3692, %v3651
    %v3694 = vrot.slane %v3651, 4
    %v3695 = vsel %vm1580, %v3675, %v3694
    %v3696 = vrot.slane %v3679, 4
    %v3697 = vsel %vm1580, %v3696, %v3655
    %v3698 = vrot.slane %v3655, 4
    %v3699 = vsel %vm1580, %v3679, %v3698
    %v3700 = vrot.slane %v3687, 4
    %v3701 = vsel %vm1580, %v3700, %v3663
    %v3702 = vrot.slane %v3663, 4
    %v3703 = vsel %vm1580, %v3687, %v3702
    %v3704 = vrot.slane %v3691, 4
    %v3705 = vsel %vm1580, %v3704, %v3667
    %v3706 = vrot.slane %v3667, 4
    %v3707 = vsel %vm1580, %v3691, %v3706
    %v3708 = vrot.slane %v1057, 4
    %v3709 = vsel %vm1580, %v3708, %v863
    %v3710 = vrot.slane %v863, 4
    %v3711 = vsel %vm1580, %v1057, %v3710
    %v3713 = vunpack.c.l.s4 1983009808
    %v3714 = vunpack.c.0.s8 %v3713
    %v3715 = vperm.slane %v3709, %v3714
    %v3717 = vunpack.c.l.s4 1983009808
    %v3718 = vunpack.c.0.s8 %v3717
    %v3719 = vperm.slane %v3711, %v3718
    %v3720 = vrot.slane %v1154, 4
    %v3721 = vsel %vm1580, %v3720, %v960
    %v3722 = vrot.slane %v960, 4
    %v3723 = vsel %vm1580, %v1154, %v3722
    %v3725 = vunpack.c.l.s4 1983009808
    %v3726 = vunpack.c.0.s8 %v3725
    %v3727 = vperm.slane %v3721, %v3726
    %v3729 = vunpack.c.l.s4 1983009808
    %v3730 = vunpack.c.0.s8 %v3729
    %v3731 = vperm.slane %v3723, %v3730
    %v3732 = vrot.slane %v1445, 4
    %v3733 = vsel %vm1580, %v3732, %v1251
    %v3734 = vrot.slane %v1251, 4
    %v3735 = vsel %vm1580, %v1445, %v3734
    %v3737 = vunpack.c.l.s4 1983009808
    %v3738 = vunpack.c.0.s8 %v3737
    %v3739 = vperm.slane %v3733, %v3738
    %v3741 = vunpack.c.l.s4 1983009808
    %v3742 = vunpack.c.0.s8 %v3741
    %v3743 = vperm.slane %v3735, %v3742
    %v3744 = vrot.slane %v1542, 4
    %v3745 = vsel %vm1580, %v3744, %v1348
    %v3746 = vrot.slane %v1348, 4
    %v3747 = vsel %vm1580, %v1542, %v3746
    %v3749 = vunpack.c.l.s4 1983009808
    %v3750 = vunpack.c.0.s8 %v3749
    %v3751 = vperm.slane %v3745, %v3750
    %v3753 = vunpack.c.l.s4 1983009808
    %v3754 = vunpack.c.0.s8 %v3753
    %v3755 = vperm.slane %v3747, %v3754
    %v3756 = vrot.slane %v3727, 4
    %v3757 = vsel %vm1580, %v3756, %v3715
    %v3758 = vrot.slane %v3715, 4
    %v3759 = vsel %vm1580, %v3727, %v3758
    %v3761 = vunpack.c.l.s4 1934713408
    %v3762 = vunpack.c.0.s8 %v3761
    %v3763 = vperm.slane %v3757, %v3762
    %v3765 = vunpack.c.l.s4 1934713408
    %v3766 = vunpack.c.0.s8 %v3765
    %v3767 = vperm.slane %v3759, %v3766
    %v3768 = vrot.slane %v3731, 4
    %v3769 = vsel %vm1580, %v3768, %v3719
    %v3770 = vrot.slane %v3719, 4
    %v3771 = vsel %vm1580, %v3731, %v3770
    %v3773 = vunpack.c.l.s4 1934713408
    %v3774 = vunpack.c.0.s8 %v3773
    %v3775 = vperm.slane %v3769, %v3774
    %v3777 = vunpack.c.l.s4 1934713408
    %v3778 = vunpack.c.0.s8 %v3777
    %v3779 = vperm.slane %v3771, %v3778
    %v3780 = vrot.slane %v3751, 4
    %v3781 = vsel %vm1580, %v3780, %v3739
    %v3782 = vrot.slane %v3739, 4
    %v3783 = vsel %vm1580, %v3751, %v3782
    %v3785 = vunpack.c.l.s4 1934713408
    %v3786 = vunpack.c.0.s8 %v3785
    %v3787 = vperm.slane %v3781, %v3786
    %v3789 = vunpack.c.l.s4 1934713408
    %v3790 = vunpack.c.0.s8 %v3789
    %v3791 = vperm.slane %v3783, %v3790
    %v3792 = vrot.slane %v3755, 4
    %v3793 = vsel %vm1580, %v3792, %v3743
    %v3794 = vrot.slane %v3743, 4
    %v3795 = vsel %vm1580, %v3755, %v3794
    %v3797 = vunpack.c.l.s4 1934713408
    %v3798 = vunpack.c.0.s8 %v3797
    %v3799 = vperm.slane %v3793, %v3798
    %v3801 = vunpack.c.l.s4 1934713408
    %v3802 = vunpack.c.0.s8 %v3801
    %v3803 = vperm.slane %v3795, %v3802
    %v3804 = vrot.slane %v3787, 4
    %v3805 = vsel %vm1580, %v3804, %v3763
    %v3806 = vrot.slane %v3763, 4
    %v3807 = vsel %vm1580, %v3787, %v3806
    %v3808 = vrot.slane %v3791, 4
    %v3809 = vsel %vm1580, %v3808, %v3767
    %v3810 = vrot.slane %v3767, 4
    %v3811 = vsel %vm1580, %v3791, %v3810
    %v3812 = vrot.slane %v3799, 4
    %v3813 = vsel %vm1580, %v3812, %v3775
    %v3814 = vrot.slane %v3775, 4
    %v3815 = vsel %vm1580, %v3799, %v3814
    %v3816 = vrot.slane %v3803, 4
    %v3817 = vsel %vm1580, %v3816, %v3779
    %v3818 = vrot.slane %v3779, 4
    %v3819 = vsel %vm1580, %v3803, %v3818
    %v3820 = vrot.slane %v287, 4
    %v3821 = vsel %vm1580, %v3820, %v93
    %v3822 = vrot.slane %v93, 4
    %v3823 = vsel %vm1580, %v287, %v3822
    %v3825 = vunpack.c.l.s4 1983009808
    %v3826 = vunpack.c.0.s8 %v3825
    %v3827 = vperm.slane %v3821, %v3826
    %v3829 = vunpack.c.l.s4 1983009808
    %v3830 = vunpack.c.0.s8 %v3829
    %v3831 = vperm.slane %v3823, %v3830
    %v3832 = vrot.slane %v384, 4
    %v3833 = vsel %vm1580, %v3832, %v190
    %v3834 = vrot.slane %v190, 4
    %v3835 = vsel %vm1580, %v384, %v3834
    %v3837 = vunpack.c.l.s4 1983009808
    %v3838 = vunpack.c.0.s8 %v3837
    %v3839 = vperm.slane %v3833, %v3838
    %v3841 = vunpack.c.l.s4 1983009808
    %v3842 = vunpack.c.0.s8 %v3841
    %v3843 = vperm.slane %v3835, %v3842
    %v3844 = vrot.slane %v675, 4
    %v3845 = vsel %vm1580, %v3844, %v481
    %v3846 = vrot.slane %v481, 4
    %v3847 = vsel %vm1580, %v675, %v3846
    %v3849 = vunpack.c.l.s4 1983009808
    %v3850 = vunpack.c.0.s8 %v3849
    %v3851 = vperm.slane %v3845, %v3850
    %v3853 = vunpack.c.l.s4 1983009808
    %v3854 = vunpack.c.0.s8 %v3853
    %v3855 = vperm.slane %v3847, %v3854
    %v3856 = vrot.slane %v772, 4
    %v3857 = vsel %vm1580, %v3856, %v578
    %v3858 = vrot.slane %v578, 4
    %v3859 = vsel %vm1580, %v772, %v3858
    %v3861 = vunpack.c.l.s4 1983009808
    %v3862 = vunpack.c.0.s8 %v3861
    %v3863 = vperm.slane %v3857, %v3862
    %v3865 = vunpack.c.l.s4 1983009808
    %v3866 = vunpack.c.0.s8 %v3865
    %v3867 = vperm.slane %v3859, %v3866
    %v3868 = vrot.slane %v3839, 4
    %v3869 = vsel %vm1580, %v3868, %v3827
    %v3870 = vrot.slane %v3827, 4
    %v3871 = vsel %vm1580, %v3839, %v3870
    %v3873 = vunpack.c.l.s4 1934713408
    %v3874 = vunpack.c.0.s8 %v3873
    %v3875 = vperm.slane %v3869, %v3874
    %v3877 = vunpack.c.l.s4 1934713408
    %v3878 = vunpack.c.0.s8 %v3877
    %v3879 = vperm.slane %v3871, %v3878
    %v3880 = vrot.slane %v3843, 4
    %v3881 = vsel %vm1580, %v3880, %v3831
    %v3882 = vrot.slane %v3831, 4
    %v3883 = vsel %vm1580, %v3843, %v3882
    %v3885 = vunpack.c.l.s4 1934713408
    %v3886 = vunpack.c.0.s8 %v3885
    %v3887 = vperm.slane %v3881, %v3886
    %v3889 = vunpack.c.l.s4 1934713408
    %v3890 = vunpack.c.0.s8 %v3889
    %v3891 = vperm.slane %v3883, %v3890
    %v3892 = vrot.slane %v3863, 4
    %v3893 = vsel %vm1580, %v3892, %v3851
    %v3894 = vrot.slane %v3851, 4
    %v3895 = vsel %vm1580, %v3863, %v3894
    %v3897 = vunpack.c.l.s4 1934713408
    %v3898 = vunpack.c.0.s8 %v3897
    %v3899 = vperm.slane %v3893, %v3898
    %v3901 = vunpack.c.l.s4 1934713408
    %v3902 = vunpack.c.0.s8 %v3901
    %v3903 = vperm.slane %v3895, %v3902
    %v3904 = vrot.slane %v3867, 4
    %v3905 = vsel %vm1580, %v3904, %v3855
    %v3906 = vrot.slane %v3855, 4
    %v3907 = vsel %vm1580, %v3867, %v3906
    %v3909 = vunpack.c.l.s4 1934713408
    %v3910 = vunpack.c.0.s8 %v3909
    %v3911 = vperm.slane %v3905, %v3910
    %v3913 = vunpack.c.l.s4 1934713408
    %v3914 = vunpack.c.0.s8 %v3913
    %v3915 = vperm.slane %v3907, %v3914
    %v3916 = vrot.slane %v3899, 4
    %v3917 = vsel %vm1580, %v3916, %v3875
    %v3918 = vrot.slane %v3875, 4
    %v3919 = vsel %vm1580, %v3899, %v3918
    %v3920 = vrot.slane %v3903, 4
    %v3921 = vsel %vm1580, %v3920, %v3879
    %v3922 = vrot.slane %v3879, 4
    %v3923 = vsel %vm1580, %v3903, %v3922
    %v3924 = vrot.slane %v3911, 4
    %v3925 = vsel %vm1580, %v3924, %v3887
    %v3926 = vrot.slane %v3887, 4
    %v3927 = vsel %vm1580, %v3911, %v3926
    %v3928 = vrot.slane %v3915, 4
    %v3929 = vsel %vm1580, %v3928, %v3891
    %v3930 = vrot.slane %v3891, 4
    %v3931 = vsel %vm1580, %v3915, %v3930
    %v3932 = vrot.slane %v1063, 4
    %v3933 = vsel %vm1580, %v3932, %v869
    %v3934 = vrot.slane %v869, 4
    %v3935 = vsel %vm1580, %v1063, %v3934
    %v3937 = vunpack.c.l.s4 1983009808
    %v3938 = vunpack.c.0.s8 %v3937
    %v3939 = vperm.slane %v3933, %v3938
    %v3941 = vunpack.c.l.s4 1983009808
    %v3942 = vunpack.c.0.s8 %v3941
    %v3943 = vperm.slane %v3935, %v3942
    %v3944 = vrot.slane %v1160, 4
    %v3945 = vsel %vm1580, %v3944, %v966
    %v3946 = vrot.slane %v966, 4
    %v3947 = vsel %vm1580, %v1160, %v3946
    %v3949 = vunpack.c.l.s4 1983009808
    %v3950 = vunpack.c.0.s8 %v3949
    %v3951 = vperm.slane %v3945, %v3950
    %v3953 = vunpack.c.l.s4 1983009808
    %v3954 = vunpack.c.0.s8 %v3953
    %v3955 = vperm.slane %v3947, %v3954
    %v3956 = vrot.slane %v1451, 4
    %v3957 = vsel %vm1580, %v3956, %v1257
    %v3958 = vrot.slane %v1257, 4
    %v3959 = vsel %vm1580, %v1451, %v3958
    %v3961 = vunpack.c.l.s4 1983009808
    %v3962 = vunpack.c.0.s8 %v3961
    %v3963 = vperm.slane %v3957, %v3962
    %v3965 = vunpack.c.l.s4 1983009808
    %v3966 = vunpack.c.0.s8 %v3965
    %v3967 = vperm.slane %v3959, %v3966
    %v3968 = vrot.slane %v1548, 4
    %v3969 = vsel %vm1580, %v3968, %v1354
    %v3970 = vrot.slane %v1354, 4
    %v3971 = vsel %vm1580, %v1548, %v3970
    %v3973 = vunpack.c.l.s4 1983009808
    %v3974 = vunpack.c.0.s8 %v3973
    %v3975 = vperm.slane %v3969, %v3974
    %v3977 = vunpack.c.l.s4 1983009808
    %v3978 = vunpack.c.0.s8 %v3977
    %v3979 = vperm.slane %v3971, %v3978
    %v3980 = vrot.slane %v3951, 4
    %v3981 = vsel %vm1580, %v3980, %v3939
    %v3982 = vrot.slane %v3939, 4
    %v3983 = vsel %vm1580, %v3951, %v3982
    %v3985 = vunpack.c.l.s4 1934713408
    %v3986 = vunpack.c.0.s8 %v3985
    %v3987 = vperm.slane %v3981, %v3986
    %v3989 = vunpack.c.l.s4 1934713408
    %v3990 = vunpack.c.0.s8 %v3989
    %v3991 = vperm.slane %v3983, %v3990
    %v3992 = vrot.slane %v3955, 4
    %v3993 = vsel %vm1580, %v3992, %v3943
    %v3994 = vrot.slane %v3943, 4
    %v3995 = vsel %vm1580, %v3955, %v3994
    %v3997 = vunpack.c.l.s4 1934713408
    %v3998 = vunpack.c.0.s8 %v3997
    %v3999 = vperm.slane %v3993, %v3998
    %v4001 = vunpack.c.l.s4 1934713408
    %v4002 = vunpack.c.0.s8 %v4001
    %v4003 = vperm.slane %v3995, %v4002
    %v4004 = vrot.slane %v3975, 4
    %v4005 = vsel %vm1580, %v4004, %v3963
    %v4006 = vrot.slane %v3963, 4
    %v4007 = vsel %vm1580, %v3975, %v4006
    %v4009 = vunpack.c.l.s4 1934713408
    %v4010 = vunpack.c.0.s8 %v4009
    %v4011 = vperm.slane %v4005, %v4010
    %v4013 = vunpack.c.l.s4 1934713408
    %v4014 = vunpack.c.0.s8 %v4013
    %v4015 = vperm.slane %v4007, %v4014
    %v4016 = vrot.slane %v3979, 4
    %v4017 = vsel %vm1580, %v4016, %v3967
    %v4018 = vrot.slane %v3967, 4
    %v4019 = vsel %vm1580, %v3979, %v4018
    %v4021 = vunpack.c.l.s4 1934713408
    %v4022 = vunpack.c.0.s8 %v4021
    %v4023 = vperm.slane %v4017, %v4022
    %v4025 = vunpack.c.l.s4 1934713408
    %v4026 = vunpack.c.0.s8 %v4025
    %v4027 = vperm.slane %v4019, %v4026
    %v4028 = vrot.slane %v4011, 4
    %v4029 = vsel %vm1580, %v4028, %v3987
    %v4030 = vrot.slane %v3987, 4
    %v4031 = vsel %vm1580, %v4011, %v4030
    %v4032 = vrot.slane %v4015, 4
    %v4033 = vsel %vm1580, %v4032, %v3991
    %v4034 = vrot.slane %v3991, 4
    %v4035 = vsel %vm1580, %v4015, %v4034
    %v4036 = vrot.slane %v4023, 4
    %v4037 = vsel %vm1580, %v4036, %v3999
    %v4038 = vrot.slane %v3999, 4
    %v4039 = vsel %vm1580, %v4023, %v4038
    %v4040 = vrot.slane %v4027, 4
    %v4041 = vsel %vm1580, %v4040, %v4003
    %v4042 = vrot.slane %v4003, 4
    %v4043 = vsel %vm1580, %v4027, %v4042
    %v4044 = vrot.slane %v293, 4
    %v4045 = vsel %vm1580, %v4044, %v99
    %v4046 = vrot.slane %v99, 4
    %v4047 = vsel %vm1580, %v293, %v4046
    %v4049 = vunpack.c.l.s4 1983009808
    %v4050 = vunpack.c.0.s8 %v4049
    %v4051 = vperm.slane %v4045, %v4050
    %v4053 = vunpack.c.l.s4 1983009808
    %v4054 = vunpack.c.0.s8 %v4053
    %v4055 = vperm.slane %v4047, %v4054
    %v4056 = vrot.slane %v390, 4
    %v4057 = vsel %vm1580, %v4056, %v196
    %v4058 = vrot.slane %v196, 4
    %v4059 = vsel %vm1580, %v390, %v4058
    %v4061 = vunpack.c.l.s4 1983009808
    %v4062 = vunpack.c.0.s8 %v4061
    %v4063 = vperm.slane %v4057, %v4062
    %v4065 = vunpack.c.l.s4 1983009808
    %v4066 = vunpack.c.0.s8 %v4065
    %v4067 = vperm.slane %v4059, %v4066
    %v4068 = vrot.slane %v681, 4
    %v4069 = vsel %vm1580, %v4068, %v487
    %v4070 = vrot.slane %v487, 4
    %v4071 = vsel %vm1580, %v681, %v4070
    %v4073 = vunpack.c.l.s4 1983009808
    %v4074 = vunpack.c.0.s8 %v4073
    %v4075 = vperm.slane %v4069, %v4074
    %v4077 = vunpack.c.l.s4 1983009808
    %v4078 = vunpack.c.0.s8 %v4077
    %v4079 = vperm.slane %v4071, %v4078
    %v4080 = vrot.slane %v778, 4
    %v4081 = vsel %vm1580, %v4080, %v584
    %v4082 = vrot.slane %v584, 4
    %v4083 = vsel %vm1580, %v778, %v4082
    %v4085 = vunpack.c.l.s4 1983009808
    %v4086 = vunpack.c.0.s8 %v4085
    %v4087 = vperm.slane %v4081, %v4086
    %v4089 = vunpack.c.l.s4 1983009808
    %v4090 = vunpack.c.0.s8 %v4089
    %v4091 = vperm.slane %v4083, %v4090
    %v4092 = vrot.slane %v4063, 4
    %v4093 = vsel %vm1580, %v4092, %v4051
    %v4094 = vrot.slane %v4051, 4
    %v4095 = vsel %vm1580, %v4063, %v4094
    %v4097 = vunpack.c.l.s4 1934713408
    %v4098 = vunpack.c.0.s8 %v4097
    %v4099 = vperm.slane %v4093, %v4098
    %v4101 = vunpack.c.l.s4 1934713408
    %v4102 = vunpack.c.0.s8 %v4101
    %v4103 = vperm.slane %v4095, %v4102
    %v4104 = vrot.slane %v4067, 4
    %v4105 = vsel %vm1580, %v4104, %v4055
    %v4106 = vrot.slane %v4055, 4
    %v4107 = vsel %vm1580, %v4067, %v4106
    %v4109 = vunpack.c.l.s4 1934713408
    %v4110 = vunpack.c.0.s8 %v4109
    %v4111 = vperm.slane %v4105, %v4110
    %v4113 = vunpack.c.l.s4 1934713408
    %v4114 = vunpack.c.0.s8 %v4113
    %v4115 = vperm.slane %v4107, %v4114
    %v4116 = vrot.slane %v4087, 4
    %v4117 = vsel %vm1580, %v4116, %v4075
    %v4118 = vrot.slane %v4075, 4
    %v4119 = vsel %vm1580, %v4087, %v4118
    %v4121 = vunpack.c.l.s4 1934713408
    %v4122 = vunpack.c.0.s8 %v4121
    %v4123 = vperm.slane %v4117, %v4122
    %v4125 = vunpack.c.l.s4 1934713408
    %v4126 = vunpack.c.0.s8 %v4125
    %v4127 = vperm.slane %v4119, %v4126
    %v4128 = vrot.slane %v4091, 4
    %v4129 = vsel %vm1580, %v4128, %v4079
    %v4130 = vrot.slane %v4079, 4
    %v4131 = vsel %vm1580, %v4091, %v4130
    %v4133 = vunpack.c.l.s4 1934713408
    %v4134 = vunpack.c.0.s8 %v4133
    %v4135 = vperm.slane %v4129, %v4134
    %v4137 = vunpack.c.l.s4 1934713408
    %v4138 = vunpack.c.0.s8 %v4137
    %v4139 = vperm.slane %v4131, %v4138
    %v4140 = vrot.slane %v4123, 4
    %v4141 = vsel %vm1580, %v4140, %v4099
    %v4142 = vrot.slane %v4099, 4
    %v4143 = vsel %vm1580, %v4123, %v4142
    %v4144 = vrot.slane %v4127, 4
    %v4145 = vsel %vm1580, %v4144, %v4103
    %v4146 = vrot.slane %v4103, 4
    %v4147 = vsel %vm1580, %v4127, %v4146
    %v4148 = vrot.slane %v4135, 4
    %v4149 = vsel %vm1580, %v4148, %v4111
    %v4150 = vrot.slane %v4111, 4
    %v4151 = vsel %vm1580, %v4135, %v4150
    %v4152 = vrot.slane %v4139, 4
    %v4153 = vsel %vm1580, %v4152, %v4115
    %v4154 = vrot.slane %v4115, 4
    %v4155 = vsel %vm1580, %v4139, %v4154
    %v4156 = vrot.slane %v1069, 4
    %v4157 = vsel %vm1580, %v4156, %v875
    %v4158 = vrot.slane %v875, 4
    %v4159 = vsel %vm1580, %v1069, %v4158
    %v4161 = vunpack.c.l.s4 1983009808
    %v4162 = vunpack.c.0.s8 %v4161
    %v4163 = vperm.slane %v4157, %v4162
    %v4165 = vunpack.c.l.s4 1983009808
    %v4166 = vunpack.c.0.s8 %v4165
    %v4167 = vperm.slane %v4159, %v4166
    %v4168 = vrot.slane %v1166, 4
    %v4169 = vsel %vm1580, %v4168, %v972
    %v4170 = vrot.slane %v972, 4
    %v4171 = vsel %vm1580, %v1166, %v4170
    %v4173 = vunpack.c.l.s4 1983009808
    %v4174 = vunpack.c.0.s8 %v4173
    %v4175 = vperm.slane %v4169, %v4174
    %v4177 = vunpack.c.l.s4 1983009808
    %v4178 = vunpack.c.0.s8 %v4177
    %v4179 = vperm.slane %v4171, %v4178
    %v4180 = vrot.slane %v1457, 4
    %v4181 = vsel %vm1580, %v4180, %v1263
    %v4182 = vrot.slane %v1263, 4
    %v4183 = vsel %vm1580, %v1457, %v4182
    %v4185 = vunpack.c.l.s4 1983009808
    %v4186 = vunpack.c.0.s8 %v4185
    %v4187 = vperm.slane %v4181, %v4186
    %v4189 = vunpack.c.l.s4 1983009808
    %v4190 = vunpack.c.0.s8 %v4189
    %v4191 = vperm.slane %v4183, %v4190
    %v4192 = vrot.slane %v1554, 4
    %v4193 = vsel %vm1580, %v4192, %v1360
    %v4194 = vrot.slane %v1360, 4
    %v4195 = vsel %vm1580, %v1554, %v4194
    %v4197 = vunpack.c.l.s4 1983009808
    %v4198 = vunpack.c.0.s8 %v4197
    %v4199 = vperm.slane %v4193, %v4198
    %v4201 = vunpack.c.l.s4 1983009808
    %v4202 = vunpack.c.0.s8 %v4201
    %v4203 = vperm.slane %v4195, %v4202
    %v4204 = vrot.slane %v4175, 4
    %v4205 = vsel %vm1580, %v4204, %v4163
    %v4206 = vrot.slane %v4163, 4
    %v4207 = vsel %vm1580, %v4175, %v4206
    %v4209 = vunpack.c.l.s4 1934713408
    %v4210 = vunpack.c.0.s8 %v4209
    %v4211 = vperm.slane %v4205, %v4210
    %v4213 = vunpack.c.l.s4 1934713408
    %v4214 = vunpack.c.0.s8 %v4213
    %v4215 = vperm.slane %v4207, %v4214
    %v4216 = vrot.slane %v4179, 4
    %v4217 = vsel %vm1580, %v4216, %v4167
    %v4218 = vrot.slane %v4167, 4
    %v4219 = vsel %vm1580, %v4179, %v4218
    %v4221 = vunpack.c.l.s4 1934713408
    %v4222 = vunpack.c.0.s8 %v4221
    %v4223 = vperm.slane %v4217, %v4222
    %v4225 = vunpack.c.l.s4 1934713408
    %v4226 = vunpack.c.0.s8 %v4225
    %v4227 = vperm.slane %v4219, %v4226
    %v4228 = vrot.slane %v4199, 4
    %v4229 = vsel %vm1580, %v4228, %v4187
    %v4230 = vrot.slane %v4187, 4
    %v4231 = vsel %vm1580, %v4199, %v4230
    %v4233 = vunpack.c.l.s4 1934713408
    %v4234 = vunpack.c.0.s8 %v4233
    %v4235 = vperm.slane %v4229, %v4234
    %v4237 = vunpack.c.l.s4 1934713408
    %v4238 = vunpack.c.0.s8 %v4237
    %v4239 = vperm.slane %v4231, %v4238
    %v4240 = vrot.slane %v4203, 4
    %v4241 = vsel %vm1580, %v4240, %v4191
    %v4242 = vrot.slane %v4191, 4
    %v4243 = vsel %vm1580, %v4203, %v4242
    %v4245 = vunpack.c.l.s4 1934713408
    %v4246 = vunpack.c.0.s8 %v4245
    %v4247 = vperm.slane %v4241, %v4246
    %v4249 = vunpack.c.l.s4 1934713408
    %v4250 = vunpack.c.0.s8 %v4249
    %v4251 = vperm.slane %v4243, %v4250
    %v4252 = vrot.slane %v4235, 4
    %v4253 = vsel %vm1580, %v4252, %v4211
    %v4254 = vrot.slane %v4211, 4
    %v4255 = vsel %vm1580, %v4235, %v4254
    %v4256 = vrot.slane %v4239, 4
    %v4257 = vsel %vm1580, %v4256, %v4215
    %v4258 = vrot.slane %v4215, 4
    %v4259 = vsel %vm1580, %v4239, %v4258
    %v4260 = vrot.slane %v4247, 4
    %v4261 = vsel %vm1580, %v4260, %v4223
    %v4262 = vrot.slane %v4223, 4
    %v4263 = vsel %vm1580, %v4247, %v4262
    %v4264 = vrot.slane %v4251, 4
    %v4265 = vsel %vm1580, %v4264, %v4227
    %v4266 = vrot.slane %v4227, 4
    %v4267 = vsel %vm1580, %v4251, %v4266
    %v4268 = vrot.slane %v299, 4
    %v4269 = vsel %vm1580, %v4268, %v105
    %v4270 = vrot.slane %v105, 4
    %v4271 = vsel %vm1580, %v299, %v4270
    %v4273 = vunpack.c.l.s4 1983009808
    %v4274 = vunpack.c.0.s8 %v4273
    %v4275 = vperm.slane %v4269, %v4274
    %v4277 = vunpack.c.l.s4 1983009808
    %v4278 = vunpack.c.0.s8 %v4277
    %v4279 = vperm.slane %v4271, %v4278
    %v4280 = vrot.slane %v396, 4
    %v4281 = vsel %vm1580, %v4280, %v202
    %v4282 = vrot.slane %v202, 4
    %v4283 = vsel %vm1580, %v396, %v4282
    %v4285 = vunpack.c.l.s4 1983009808
    %v4286 = vunpack.c.0.s8 %v4285
    %v4287 = vperm.slane %v4281, %v4286
    %v4289 = vunpack.c.l.s4 1983009808
    %v4290 = vunpack.c.0.s8 %v4289
    %v4291 = vperm.slane %v4283, %v4290
    %v4292 = vrot.slane %v687, 4
    %v4293 = vsel %vm1580, %v4292, %v493
    %v4294 = vrot.slane %v493, 4
    %v4295 = vsel %vm1580, %v687, %v4294
    %v4297 = vunpack.c.l.s4 1983009808
    %v4298 = vunpack.c.0.s8 %v4297
    %v4299 = vperm.slane %v4293, %v4298
    %v4301 = vunpack.c.l.s4 1983009808
    %v4302 = vunpack.c.0.s8 %v4301
    %v4303 = vperm.slane %v4295, %v4302
    %v4304 = vrot.slane %v784, 4
    %v4305 = vsel %vm1580, %v4304, %v590
    %v4306 = vrot.slane %v590, 4
    %v4307 = vsel %vm1580, %v784, %v4306
    %v4309 = vunpack.c.l.s4 1983009808
    %v4310 = vunpack.c.0.s8 %v4309
    %v4311 = vperm.slane %v4305, %v4310
    %v4313 = vunpack.c.l.s4 1983009808
    %v4314 = vunpack.c.0.s8 %v4313
    %v4315 = vperm.slane %v4307, %v4314
    %v4316 = vrot.slane %v4287, 4
    %v4317 = vsel %vm1580, %v4316, %v4275
    %v4318 = vrot.slane %v4275, 4
    %v4319 = vsel %vm1580, %v4287, %v4318
    %v4321 = vunpack.c.l.s4 1934713408
    %v4322 = vunpack.c.0.s8 %v4321
    %v4323 = vperm.slane %v4317, %v4322
    %v4325 = vunpack.c.l.s4 1934713408
    %v4326 = vunpack.c.0.s8 %v4325
    %v4327 = vperm.slane %v4319, %v4326
    %v4328 = vrot.slane %v4291, 4
    %v4329 = vsel %vm1580, %v4328, %v4279
    %v4330 = vrot.slane %v4279, 4
    %v4331 = vsel %vm1580, %v4291, %v4330
    %v4333 = vunpack.c.l.s4 1934713408
    %v4334 = vunpack.c.0.s8 %v4333
    %v4335 = vperm.slane %v4329, %v4334
    %v4337 = vunpack.c.l.s4 1934713408
    %v4338 = vunpack.c.0.s8 %v4337
    %v4339 = vperm.slane %v4331, %v4338
    %v4340 = vrot.slane %v4311, 4
    %v4341 = vsel %vm1580, %v4340, %v4299
    %v4342 = vrot.slane %v4299, 4
    %v4343 = vsel %vm1580, %v4311, %v4342
    %v4345 = vunpack.c.l.s4 1934713408
    %v4346 = vunpack.c.0.s8 %v4345
    %v4347 = vperm.slane %v4341, %v4346
    %v4349 = vunpack.c.l.s4 1934713408
    %v4350 = vunpack.c.0.s8 %v4349
    %v4351 = vperm.slane %v4343, %v4350
    %v4352 = vrot.slane %v4315, 4
    %v4353 = vsel %vm1580, %v4352, %v4303
    %v4354 = vrot.slane %v4303, 4
    %v4355 = vsel %vm1580, %v4315, %v4354
    %v4357 = vunpack.c.l.s4 1934713408
    %v4358 = vunpack.c.0.s8 %v4357
    %v4359 = vperm.slane %v4353, %v4358
    %v4361 = vunpack.c.l.s4 1934713408
    %v4362 = vunpack.c.0.s8 %v4361
    %v4363 = vperm.slane %v4355, %v4362
    %v4364 = vrot.slane %v4347, 4
    %v4365 = vsel %vm1580, %v4364, %v4323
    %v4366 = vrot.slane %v4323, 4
    %v4367 = vsel %vm1580, %v4347, %v4366
    %v4368 = vrot.slane %v4351, 4
    %v4369 = vsel %vm1580, %v4368, %v4327
    %v4370 = vrot.slane %v4327, 4
    %v4371 = vsel %vm1580, %v4351, %v4370
    %v4372 = vrot.slane %v4359, 4
    %v4373 = vsel %vm1580, %v4372, %v4335
    %v4374 = vrot.slane %v4335, 4
    %v4375 = vsel %vm1580, %v4359, %v4374
    %v4376 = vrot.slane %v4363, 4
    %v4377 = vsel %vm1580, %v4376, %v4339
    %v4378 = vrot.slane %v4339, 4
    %v4379 = vsel %vm1580, %v4363, %v4378
    %v4380 = vrot.slane %v1075, 4
    %v4381 = vsel %vm1580, %v4380, %v881
    %v4382 = vrot.slane %v881, 4
    %v4383 = vsel %vm1580, %v1075, %v4382
    %v4385 = vunpack.c.l.s4 1983009808
    %v4386 = vunpack.c.0.s8 %v4385
    %v4387 = vperm.slane %v4381, %v4386
    %v4389 = vunpack.c.l.s4 1983009808
    %v4390 = vunpack.c.0.s8 %v4389
    %v4391 = vperm.slane %v4383, %v4390
    %v4392 = vrot.slane %v1172, 4
    %v4393 = vsel %vm1580, %v4392, %v978
    %v4394 = vrot.slane %v978, 4
    %v4395 = vsel %vm1580, %v1172, %v4394
    %v4397 = vunpack.c.l.s4 1983009808
    %v4398 = vunpack.c.0.s8 %v4397
    %v4399 = vperm.slane %v4393, %v4398
    %v4401 = vunpack.c.l.s4 1983009808
    %v4402 = vunpack.c.0.s8 %v4401
    %v4403 = vperm.slane %v4395, %v4402
    %v4404 = vrot.slane %v1463, 4
    %v4405 = vsel %vm1580, %v4404, %v1269
    %v4406 = vrot.slane %v1269, 4
    %v4407 = vsel %vm1580, %v1463, %v4406
    %v4409 = vunpack.c.l.s4 1983009808
    %v4410 = vunpack.c.0.s8 %v4409
    %v4411 = vperm.slane %v4405, %v4410
    %v4413 = vunpack.c.l.s4 1983009808
    %v4414 = vunpack.c.0.s8 %v4413
    %v4415 = vperm.slane %v4407, %v4414
    %v4416 = vrot.slane %v1560, 4
    %v4417 = vsel %vm1580, %v4416, %v1366
    %v4418 = vrot.slane %v1366, 4
    %v4419 = vsel %vm1580, %v1560, %v4418
    %v4421 = vunpack.c.l.s4 1983009808
    %v4422 = vunpack.c.0.s8 %v4421
    %v4423 = vperm.slane %v4417, %v4422
    %v4425 = vunpack.c.l.s4 1983009808
    %v4426 = vunpack.c.0.s8 %v4425
    %v4427 = vperm.slane %v4419, %v4426
    %v4428 = vrot.slane %v4399, 4
    %v4429 = vsel %vm1580, %v4428, %v4387
    %v4430 = vrot.slane %v4387, 4
    %v4431 = vsel %vm1580, %v4399, %v4430
    %v4433 = vunpack.c.l.s4 1934713408
    %v4434 = vunpack.c.0.s8 %v4433
    %v4435 = vperm.slane %v4429, %v4434
    %v4437 = vunpack.c.l.s4 1934713408
    %v4438 = vunpack.c.0.s8 %v4437
    %v4439 = vperm.slane %v4431, %v4438
    %v4440 = vrot.slane %v4403, 4
    %v4441 = vsel %vm1580, %v4440, %v4391
    %v4442 = vrot.slane %v4391, 4
    %v4443 = vsel %vm1580, %v4403, %v4442
    %v4445 = vunpack.c.l.s4 1934713408
    %v4446 = vunpack.c.0.s8 %v4445
    %v4447 = vperm.slane %v4441, %v4446
    %v4449 = vunpack.c.l.s4 1934713408
    %v4450 = vunpack.c.0.s8 %v4449
    %v4451 = vperm.slane %v4443, %v4450
    %v4452 = vrot.slane %v4423, 4
    %v4453 = vsel %vm1580, %v4452, %v4411
    %v4454 = vrot.slane %v4411, 4
    %v4455 = vsel %vm1580, %v4423, %v4454
    %v4457 = vunpack.c.l.s4 1934713408
    %v4458 = vunpack.c.0.s8 %v4457
    %v4459 = vperm.slane %v4453, %v4458
    %v4461 = vunpack.c.l.s4 1934713408
    %v4462 = vunpack.c.0.s8 %v4461
    %v4463 = vperm.slane %v4455, %v4462
    %v4464 = vrot.slane %v4427, 4
    %v4465 = vsel %vm1580, %v4464, %v4415
    %v4466 = vrot.slane %v4415, 4
    %v4467 = vsel %vm1580, %v4427, %v4466
    %v4469 = vunpack.c.l.s4 1934713408
    %v4470 = vunpack.c.0.s8 %v4469
    %v4471 = vperm.slane %v4465, %v4470
    %v4473 = vunpack.c.l.s4 1934713408
    %v4474 = vunpack.c.0.s8 %v4473
    %v4475 = vperm.slane %v4467, %v4474
    %v4476 = vrot.slane %v4459, 4
    %v4477 = vsel %vm1580, %v4476, %v4435
    %v4478 = vrot.slane %v4435, 4
    %v4479 = vsel %vm1580, %v4459, %v4478
    %v4480 = vrot.slane %v4463, 4
    %v4481 = vsel %vm1580, %v4480, %v4439
    %v4482 = vrot.slane %v4439, 4
    %v4483 = vsel %vm1580, %v4463, %v4482
    %v4484 = vrot.slane %v4471, 4
    %v4485 = vsel %vm1580, %v4484, %v4447
    %v4486 = vrot.slane %v4447, 4
    %v4487 = vsel %vm1580, %v4471, %v4486
    %v4488 = vrot.slane %v4475, 4
    %v4489 = vsel %vm1580, %v4488, %v4451
    %v4490 = vrot.slane %v4451, 4
    %v4491 = vsel %vm1580, %v4475, %v4490
    %v4492 = vrot.slane %v305, 4
    %v4493 = vsel %vm1580, %v4492, %v111
    %v4494 = vrot.slane %v111, 4
    %v4495 = vsel %vm1580, %v305, %v4494
    %v4497 = vunpack.c.l.s4 1983009808
    %v4498 = vunpack.c.0.s8 %v4497
    %v4499 = vperm.slane %v4493, %v4498
    %v4501 = vunpack.c.l.s4 1983009808
    %v4502 = vunpack.c.0.s8 %v4501
    %v4503 = vperm.slane %v4495, %v4502
    %v4504 = vrot.slane %v402, 4
    %v4505 = vsel %vm1580, %v4504, %v208
    %v4506 = vrot.slane %v208, 4
    %v4507 = vsel %vm1580, %v402, %v4506
    %v4509 = vunpack.c.l.s4 1983009808
    %v4510 = vunpack.c.0.s8 %v4509
    %v4511 = vperm.slane %v4505, %v4510
    %v4513 = vunpack.c.l.s4 1983009808
    %v4514 = vunpack.c.0.s8 %v4513
    %v4515 = vperm.slane %v4507, %v4514
    %v4516 = vrot.slane %v693, 4
    %v4517 = vsel %vm1580, %v4516, %v499
    %v4518 = vrot.slane %v499, 4
    %v4519 = vsel %vm1580, %v693, %v4518
    %v4521 = vunpack.c.l.s4 1983009808
    %v4522 = vunpack.c.0.s8 %v4521
    %v4523 = vperm.slane %v4517, %v4522
    %v4525 = vunpack.c.l.s4 1983009808
    %v4526 = vunpack.c.0.s8 %v4525
    %v4527 = vperm.slane %v4519, %v4526
    %v4528 = vrot.slane %v790, 4
    %v4529 = vsel %vm1580, %v4528, %v596
    %v4530 = vrot.slane %v596, 4
    %v4531 = vsel %vm1580, %v790, %v4530
    %v4533 = vunpack.c.l.s4 1983009808
    %v4534 = vunpack.c.0.s8 %v4533
    %v4535 = vperm.slane %v4529, %v4534
    %v4537 = vunpack.c.l.s4 1983009808
    %v4538 = vunpack.c.0.s8 %v4537
    %v4539 = vperm.slane %v4531, %v4538
    %v4540 = vrot.slane %v4511, 4
    %v4541 = vsel %vm1580, %v4540, %v4499
    %v4542 = vrot.slane %v4499, 4
    %v4543 = vsel %vm1580, %v4511, %v4542
    %v4545 = vunpack.c.l.s4 1934713408
    %v4546 = vunpack.c.0.s8 %v4545
    %v4547 = vperm.slane %v4541, %v4546
    %v4549 = vunpack.c.l.s4 1934713408
    %v4550 = vunpack.c.0.s8 %v4549
    %v4551 = vperm.slane %v4543, %v4550
    %v4552 = vrot.slane %v4515, 4
    %v4553 = vsel %vm1580, %v4552, %v4503
    %v4554 = vrot.slane %v4503, 4
    %v4555 = vsel %vm1580, %v4515, %v4554
    %v4557 = vunpack.c.l.s4 1934713408
    %v4558 = vunpack.c.0.s8 %v4557
    %v4559 = vperm.slane %v4553, %v4558
    %v4561 = vunpack.c.l.s4 1934713408
    %v4562 = vunpack.c.0.s8 %v4561
    %v4563 = vperm.slane %v4555, %v4562
    %v4564 = vrot.slane %v4535, 4
    %v4565 = vsel %vm1580, %v4564, %v4523
    %v4566 = vrot.slane %v4523, 4
    %v4567 = vsel %vm1580, %v4535, %v4566
    %v4569 = vunpack.c.l.s4 1934713408
    %v4570 = vunpack.c.0.s8 %v4569
    %v4571 = vperm.slane %v4565, %v4570
    %v4573 = vunpack.c.l.s4 1934713408
    %v4574 = vunpack.c.0.s8 %v4573
    %v4575 = vperm.slane %v4567, %v4574
    %v4576 = vrot.slane %v4539, 4
    %v4577 = vsel %vm1580, %v4576, %v4527
    %v4578 = vrot.slane %v4527, 4
    %v4579 = vsel %vm1580, %v4539, %v4578
    %v4581 = vunpack.c.l.s4 1934713408
    %v4582 = vunpack.c.0.s8 %v4581
    %v4583 = vperm.slane %v4577, %v4582
    %v4585 = vunpack.c.l.s4 1934713408
    %v4586 = vunpack.c.0.s8 %v4585
    %v4587 = vperm.slane %v4579, %v4586
    %v4588 = vrot.slane %v4571, 4
    %v4589 = vsel %vm1580, %v4588, %v4547
    %v4590 = vrot.slane %v4547, 4
    %v4591 = vsel %vm1580, %v4571, %v4590
    %v4592 = vrot.slane %v4575, 4
    %v4593 = vsel %vm1580, %v4592, %v4551
    %v4594 = vrot.slane %v4551, 4
    %v4595 = vsel %vm1580, %v4575, %v4594
    %v4596 = vrot.slane %v4583, 4
    %v4597 = vsel %vm1580, %v4596, %v4559
    %v4598 = vrot.slane %v4559, 4
    %v4599 = vsel %vm1580, %v4583, %v4598
    %v4600 = vrot.slane %v4587, 4
    %v4601 = vsel %vm1580, %v4600, %v4563
    %v4602 = vrot.slane %v4563, 4
    %v4603 = vsel %vm1580, %v4587, %v4602
    %v4604 = vrot.slane %v1081, 4
    %v4605 = vsel %vm1580, %v4604, %v887
    %v4606 = vrot.slane %v887, 4
    %v4607 = vsel %vm1580, %v1081, %v4606
    %v4609 = vunpack.c.l.s4 1983009808
    %v4610 = vunpack.c.0.s8 %v4609
    %v4611 = vperm.slane %v4605, %v4610
    %v4613 = vunpack.c.l.s4 1983009808
    %v4614 = vunpack.c.0.s8 %v4613
    %v4615 = vperm.slane %v4607, %v4614
    %v4616 = vrot.slane %v1178, 4
    %v4617 = vsel %vm1580, %v4616, %v984
    %v4618 = vrot.slane %v984, 4
    %v4619 = vsel %vm1580, %v1178, %v4618
    %v4621 = vunpack.c.l.s4 1983009808
    %v4622 = vunpack.c.0.s8 %v4621
    %v4623 = vperm.slane %v4617, %v4622
    %v4625 = vunpack.c.l.s4 1983009808
    %v4626 = vunpack.c.0.s8 %v4625
    %v4627 = vperm.slane %v4619, %v4626
    %v4628 = vrot.slane %v1469, 4
    %v4629 = vsel %vm1580, %v4628, %v1275
    %v4630 = vrot.slane %v1275, 4
    %v4631 = vsel %vm1580, %v1469, %v4630
    %v4633 = vunpack.c.l.s4 1983009808
    %v4634 = vunpack.c.0.s8 %v4633
    %v4635 = vperm.slane %v4629, %v4634
    %v4637 = vunpack.c.l.s4 1983009808
    %v4638 = vunpack.c.0.s8 %v4637
    %v4639 = vperm.slane %v4631, %v4638
    %v4640 = vrot.slane %v1566, 4
    %v4641 = vsel %vm1580, %v4640, %v1372
    %v4642 = vrot.slane %v1372, 4
    %v4643 = vsel %vm1580, %v1566, %v4642
    %v4645 = vunpack.c.l.s4 1983009808
    %v4646 = vunpack.c.0.s8 %v4645
    %v4647 = vperm.slane %v4641, %v4646
    %v4649 = vunpack.c.l.s4 1983009808
    %v4650 = vunpack.c.0.s8 %v4649
    %v4651 = vperm.slane %v4643, %v4650
    %v4652 = vrot.slane %v4623, 4
    %v4653 = vsel %vm1580, %v4652, %v4611
    %v4654 = vrot.slane %v4611, 4
    %v4655 = vsel %vm1580, %v4623, %v4654
    %v4657 = vunpack.c.l.s4 1934713408
    %v4658 = vunpack.c.0.s8 %v4657
    %v4659 = vperm.slane %v4653, %v4658
    %v4661 = vunpack.c.l.s4 1934713408
    %v4662 = vunpack.c.0.s8 %v4661
    %v4663 = vperm.slane %v4655, %v4662
    %v4664 = vrot.slane %v4627, 4
    %v4665 = vsel %vm1580, %v4664, %v4615
    %v4666 = vrot.slane %v4615, 4
    %v4667 = vsel %vm1580, %v4627, %v4666
    %v4669 = vunpack.c.l.s4 1934713408
    %v4670 = vunpack.c.0.s8 %v4669
    %v4671 = vperm.slane %v4665, %v4670
    %v4673 = vunpack.c.l.s4 1934713408
    %v4674 = vunpack.c.0.s8 %v4673
    %v4675 = vperm.slane %v4667, %v4674
    %v4676 = vrot.slane %v4647, 4
    %v4677 = vsel %vm1580, %v4676, %v4635
    %v4678 = vrot.slane %v4635, 4
    %v4679 = vsel %vm1580, %v4647, %v4678
    %v4681 = vunpack.c.l.s4 1934713408
    %v4682 = vunpack.c.0.s8 %v4681
    %v4683 = vperm.slane %v4677, %v4682
    %v4685 = vunpack.c.l.s4 1934713408
    %v4686 = vunpack.c.0.s8 %v4685
    %v4687 = vperm.slane %v4679, %v4686
    %v4688 = vrot.slane %v4651, 4
    %v4689 = vsel %vm1580, %v4688, %v4639
    %v4690 = vrot.slane %v4639, 4
    %v4691 = vsel %vm1580, %v4651, %v4690
    %v4693 = vunpack.c.l.s4 1934713408
    %v4694 = vunpack.c.0.s8 %v4693
    %v4695 = vperm.slane %v4689, %v4694
    %v4697 = vunpack.c.l.s4 1934713408
    %v4698 = vunpack.c.0.s8 %v4697
    %v4699 = vperm.slane %v4691, %v4698
    %v4700 = vrot.slane %v4683, 4
    %v4701 = vsel %vm1580, %v4700, %v4659
    %v4702 = vrot.slane %v4659, 4
    %v4703 = vsel %vm1580, %v4683, %v4702
    %v4704 = vrot.slane %v4687, 4
    %v4705 = vsel %vm1580, %v4704, %v4663
    %v4706 = vrot.slane %v4663, 4
    %v4707 = vsel %vm1580, %v4687, %v4706
    %v4708 = vrot.slane %v4695, 4
    %v4709 = vsel %vm1580, %v4708, %v4671
    %v4710 = vrot.slane %v4671, 4
    %v4711 = vsel %vm1580, %v4695, %v4710
    %v4712 = vrot.slane %v4699, 4
    %v4713 = vsel %vm1580, %v4712, %v4675
    %v4714 = vrot.slane %v4675, 4
    %v4715 = vsel %vm1580, %v4699, %v4714
    %v4716 = vrot.slane %v311, 4
    %v4717 = vsel %vm1580, %v4716, %v117
    %v4718 = vrot.slane %v117, 4
    %v4719 = vsel %vm1580, %v311, %v4718
    %v4721 = vunpack.c.l.s4 1983009808
    %v4722 = vunpack.c.0.s8 %v4721
    %v4723 = vperm.slane %v4717, %v4722
    %v4725 = vunpack.c.l.s4 1983009808
    %v4726 = vunpack.c.0.s8 %v4725
    %v4727 = vperm.slane %v4719, %v4726
    %v4728 = vrot.slane %v408, 4
    %v4729 = vsel %vm1580, %v4728, %v214
    %v4730 = vrot.slane %v214, 4
    %v4731 = vsel %vm1580, %v408, %v4730
    %v4733 = vunpack.c.l.s4 1983009808
    %v4734 = vunpack.c.0.s8 %v4733
    %v4735 = vperm.slane %v4729, %v4734
    %v4737 = vunpack.c.l.s4 1983009808
    %v4738 = vunpack.c.0.s8 %v4737
    %v4739 = vperm.slane %v4731, %v4738
    %v4740 = vrot.slane %v699, 4
    %v4741 = vsel %vm1580, %v4740, %v505
    %v4742 = vrot.slane %v505, 4
    %v4743 = vsel %vm1580, %v699, %v4742
    %v4745 = vunpack.c.l.s4 1983009808
    %v4746 = vunpack.c.0.s8 %v4745
    %v4747 = vperm.slane %v4741, %v4746
    %v4749 = vunpack.c.l.s4 1983009808
    %v4750 = vunpack.c.0.s8 %v4749
    %v4751 = vperm.slane %v4743, %v4750
    %v4752 = vrot.slane %v796, 4
    %v4753 = vsel %vm1580, %v4752, %v602
    %v4754 = vrot.slane %v602, 4
    %v4755 = vsel %vm1580, %v796, %v4754
    %v4757 = vunpack.c.l.s4 1983009808
    %v4758 = vunpack.c.0.s8 %v4757
    %v4759 = vperm.slane %v4753, %v4758
    %v4761 = vunpack.c.l.s4 1983009808
    %v4762 = vunpack.c.0.s8 %v4761
    %v4763 = vperm.slane %v4755, %v4762
    %v4764 = vrot.slane %v4735, 4
    %v4765 = vsel %vm1580, %v4764, %v4723
    %v4766 = vrot.slane %v4723, 4
    %v4767 = vsel %vm1580, %v4735, %v4766
    %v4769 = vunpack.c.l.s4 1934713408
    %v4770 = vunpack.c.0.s8 %v4769
    %v4771 = vperm.slane %v4765, %v4770
    %v4773 = vunpack.c.l.s4 1934713408
    %v4774 = vunpack.c.0.s8 %v4773
    %v4775 = vperm.slane %v4767, %v4774
    %v4776 = vrot.slane %v4739, 4
    %v4777 = vsel %vm1580, %v4776, %v4727
    %v4778 = vrot.slane %v4727, 4
    %v4779 = vsel %vm1580, %v4739, %v4778
    %v4781 = vunpack.c.l.s4 1934713408
    %v4782 = vunpack.c.0.s8 %v4781
    %v4783 = vperm.slane %v4777, %v4782
    %v4785 = vunpack.c.l.s4 1934713408
    %v4786 = vunpack.c.0.s8 %v4785
    %v4787 = vperm.slane %v4779, %v4786
    %v4788 = vrot.slane %v4759, 4
    %v4789 = vsel %vm1580, %v4788, %v4747
    %v4790 = vrot.slane %v4747, 4
    %v4791 = vsel %vm1580, %v4759, %v4790
    %v4793 = vunpack.c.l.s4 1934713408
    %v4794 = vunpack.c.0.s8 %v4793
    %v4795 = vperm.slane %v4789, %v4794
    %v4797 = vunpack.c.l.s4 1934713408
    %v4798 = vunpack.c.0.s8 %v4797
    %v4799 = vperm.slane %v4791, %v4798
    %v4800 = vrot.slane %v4763, 4
    %v4801 = vsel %vm1580, %v4800, %v4751
    %v4802 = vrot.slane %v4751, 4
    %v4803 = vsel %vm1580, %v4763, %v4802
    %v4805 = vunpack.c.l.s4 1934713408
    %v4806 = vunpack.c.0.s8 %v4805
    %v4807 = vperm.slane %v4801, %v4806
    %v4809 = vunpack.c.l.s4 1934713408
    %v4810 = vunpack.c.0.s8 %v4809
    %v4811 = vperm.slane %v4803, %v4810
    %v4812 = vrot.slane %v4795, 4
    %v4813 = vsel %vm1580, %v4812, %v4771
    %v4814 = vrot.slane %v4771, 4
    %v4815 = vsel %vm1580, %v4795, %v4814
    %v4816 = vrot.slane %v4799, 4
    %v4817 = vsel %vm1580, %v4816, %v4775
    %v4818 = vrot.slane %v4775, 4
    %v4819 = vsel %vm1580, %v4799, %v4818
    %v4820 = vrot.slane %v4807, 4
    %v4821 = vsel %vm1580, %v4820, %v4783
    %v4822 = vrot.slane %v4783, 4
    %v4823 = vsel %vm1580, %v4807, %v4822
    %v4824 = vrot.slane %v4811, 4
    %v4825 = vsel %vm1580, %v4824, %v4787
    %v4826 = vrot.slane %v4787, 4
    %v4827 = vsel %vm1580, %v4811, %v4826
    %v4828 = vrot.slane %v1087, 4
    %v4829 = vsel %vm1580, %v4828, %v893
    %v4830 = vrot.slane %v893, 4
    %v4831 = vsel %vm1580, %v1087, %v4830
    %v4833 = vunpack.c.l.s4 1983009808
    %v4834 = vunpack.c.0.s8 %v4833
    %v4835 = vperm.slane %v4829, %v4834
    %v4837 = vunpack.c.l.s4 1983009808
    %v4838 = vunpack.c.0.s8 %v4837
    %v4839 = vperm.slane %v4831, %v4838
    %v4840 = vrot.slane %v1184, 4
    %v4841 = vsel %vm1580, %v4840, %v990
    %v4842 = vrot.slane %v990, 4
    %v4843 = vsel %vm1580, %v1184, %v4842
    %v4845 = vunpack.c.l.s4 1983009808
    %v4846 = vunpack.c.0.s8 %v4845
    %v4847 = vperm.slane %v4841, %v4846
    %v4849 = vunpack.c.l.s4 1983009808
    %v4850 = vunpack.c.0.s8 %v4849
    %v4851 = vperm.slane %v4843, %v4850
    %v4852 = vrot.slane %v1475, 4
    %v4853 = vsel %vm1580, %v4852, %v1281
    %v4854 = vrot.slane %v1281, 4
    %v4855 = vsel %vm1580, %v1475, %v4854
    %v4857 = vunpack.c.l.s4 1983009808
    %v4858 = vunpack.c.0.s8 %v4857
    %v4859 = vperm.slane %v4853, %v4858
    %v4861 = vunpack.c.l.s4 1983009808
    %v4862 = vunpack.c.0.s8 %v4861
    %v4863 = vperm.slane %v4855, %v4862
    %v4864 = vrot.slane %v1572, 4
    %v4865 = vsel %vm1580, %v4864, %v1378
    %v4866 = vrot.slane %v1378, 4
    %v4867 = vsel %vm1580, %v1572, %v4866
    %v4869 = vunpack.c.l.s4 1983009808
    %v4870 = vunpack.c.0.s8 %v4869
    %v4871 = vperm.slane %v4865, %v4870
    %v4873 = vunpack.c.l.s4 1983009808
    %v4874 = vunpack.c.0.s8 %v4873
    %v4875 = vperm.slane %v4867, %v4874
    %v4876 = vrot.slane %v4847, 4
    %v4877 = vsel %vm1580, %v4876, %v4835
    %v4878 = vrot.slane %v4835, 4
    %v4879 = vsel %vm1580, %v4847, %v4878
    %v4881 = vunpack.c.l.s4 1934713408
    %v4882 = vunpack.c.0.s8 %v4881
    %v4883 = vperm.slane %v4877, %v4882
    %v4885 = vunpack.c.l.s4 1934713408
    %v4886 = vunpack.c.0.s8 %v4885
    %v4887 = vperm.slane %v4879, %v4886
    %v4888 = vrot.slane %v4851, 4
    %v4889 = vsel %vm1580, %v4888, %v4839
    %v4890 = vrot.slane %v4839, 4
    %v4891 = vsel %vm1580, %v4851, %v4890
    %v4893 = vunpack.c.l.s4 1934713408
    %v4894 = vunpack.c.0.s8 %v4893
    %v4895 = vperm.slane %v4889, %v4894
    %v4897 = vunpack.c.l.s4 1934713408
    %v4898 = vunpack.c.0.s8 %v4897
    %v4899 = vperm.slane %v4891, %v4898
    %v4900 = vrot.slane %v4871, 4
    %v4901 = vsel %vm1580, %v4900, %v4859
    %v4902 = vrot.slane %v4859, 4
    %v4903 = vsel %vm1580, %v4871, %v4902
    %v4905 = vunpack.c.l.s4 1934713408
    %v4906 = vunpack.c.0.s8 %v4905
    %v4907 = vperm.slane %v4901, %v4906
    %v4909 = vunpack.c.l.s4 1934713408
    %v4910 = vunpack.c.0.s8 %v4909
    %v4911 = vperm.slane %v4903, %v4910
    %v4912 = vrot.slane %v4875, 4
    %v4913 = vsel %vm1580, %v4912, %v4863
    %v4914 = vrot.slane %v4863, 4
    %v4915 = vsel %vm1580, %v4875, %v4914
    %v4917 = vunpack.c.l.s4 1934713408
    %v4918 = vunpack.c.0.s8 %v4917
    %v4919 = vperm.slane %v4913, %v4918
    %v4921 = vunpack.c.l.s4 1934713408
    %v4922 = vunpack.c.0.s8 %v4921
    %v4923 = vperm.slane %v4915, %v4922
    %v4924 = vrot.slane %v4907, 4
    %v4925 = vsel %vm1580, %v4924, %v4883
    %v4926 = vrot.slane %v4883, 4
    %v4927 = vsel %vm1580, %v4907, %v4926
    %v4928 = vrot.slane %v4911, 4
    %v4929 = vsel %vm1580, %v4928, %v4887
    %v4930 = vrot.slane %v4887, 4
    %v4931 = vsel %vm1580, %v4911, %v4930
    %v4932 = vrot.slane %v4919, 4
    %v4933 = vsel %vm1580, %v4932, %v4895
    %v4934 = vrot.slane %v4895, 4
    %v4935 = vsel %vm1580, %v4919, %v4934
    %v4936 = vrot.slane %v4923, 4
    %v4937 = vsel %vm1580, %v4936, %v4899
    %v4938 = vrot.slane %v4899, 4
    %v4939 = vsel %vm1580, %v4923, %v4938
    %v4940 = vrot.slane %v317, 4
    %v4941 = vsel %vm1580, %v4940, %v123
    %v4942 = vrot.slane %v123, 4
    %v4943 = vsel %vm1580, %v317, %v4942
    %v4945 = vunpack.c.l.s4 1983009808
    %v4946 = vunpack.c.0.s8 %v4945
    %v4947 = vperm.slane %v4941, %v4946
    %v4949 = vunpack.c.l.s4 1983009808
    %v4950 = vunpack.c.0.s8 %v4949
    %v4951 = vperm.slane %v4943, %v4950
    %v4952 = vrot.slane %v414, 4
    %v4953 = vsel %vm1580, %v4952, %v220
    %v4954 = vrot.slane %v220, 4
    %v4955 = vsel %vm1580, %v414, %v4954
    %v4957 = vunpack.c.l.s4 1983009808
    %v4958 = vunpack.c.0.s8 %v4957
    %v4959 = vperm.slane %v4953, %v4958
    %v4961 = vunpack.c.l.s4 1983009808
    %v4962 = vunpack.c.0.s8 %v4961
    %v4963 = vperm.slane %v4955, %v4962
    %v4964 = vrot.slane %v705, 4
    %v4965 = vsel %vm1580, %v4964, %v511
    %v4966 = vrot.slane %v511, 4
    %v4967 = vsel %vm1580, %v705, %v4966
    %v4969 = vunpack.c.l.s4 1983009808
    %v4970 = vunpack.c.0.s8 %v4969
    %v4971 = vperm.slane %v4965, %v4970
    %v4973 = vunpack.c.l.s4 1983009808
    %v4974 = vunpack.c.0.s8 %v4973
    %v4975 = vperm.slane %v4967, %v4974
    %v4976 = vrot.slane %v802, 4
    %v4977 = vsel %vm1580, %v4976, %v608
    %v4978 = vrot.slane %v608, 4
    %v4979 = vsel %vm1580, %v802, %v4978
    %v4981 = vunpack.c.l.s4 1983009808
    %v4982 = vunpack.c.0.s8 %v4981
    %v4983 = vperm.slane %v4977, %v4982
    %v4985 = vunpack.c.l.s4 1983009808
    %v4986 = vunpack.c.0.s8 %v4985
    %v4987 = vperm.slane %v4979, %v4986
    %v4988 = vrot.slane %v4959, 4
    %v4989 = vsel %vm1580, %v4988, %v4947
    %v4990 = vrot.slane %v4947, 4
    %v4991 = vsel %vm1580, %v4959, %v4990
    %v4993 = vunpack.c.l.s4 1934713408
    %v4994 = vunpack.c.0.s8 %v4993
    %v4995 = vperm.slane %v4989, %v4994
    %v4997 = vunpack.c.l.s4 1934713408
    %v4998 = vunpack.c.0.s8 %v4997
    %v4999 = vperm.slane %v4991, %v4998
    %v5000 = vrot.slane %v4963, 4
    %v5001 = vsel %vm1580, %v5000, %v4951
    %v5002 = vrot.slane %v4951, 4
    %v5003 = vsel %vm1580, %v4963, %v5002
    %v5005 = vunpack.c.l.s4 1934713408
    %v5006 = vunpack.c.0.s8 %v5005
    %v5007 = vperm.slane %v5001, %v5006
    %v5009 = vunpack.c.l.s4 1934713408
    %v5010 = vunpack.c.0.s8 %v5009
    %v5011 = vperm.slane %v5003, %v5010
    %v5012 = vrot.slane %v4983, 4
    %v5013 = vsel %vm1580, %v5012, %v4971
    %v5014 = vrot.slane %v4971, 4
    %v5015 = vsel %vm1580, %v4983, %v5014
    %v5017 = vunpack.c.l.s4 1934713408
    %v5018 = vunpack.c.0.s8 %v5017
    %v5019 = vperm.slane %v5013, %v5018
    %v5021 = vunpack.c.l.s4 1934713408
    %v5022 = vunpack.c.0.s8 %v5021
    %v5023 = vperm.slane %v5015, %v5022
    %v5024 = vrot.slane %v4987, 4
    %v5025 = vsel %vm1580, %v5024, %v4975
    %v5026 = vrot.slane %v4975, 4
    %v5027 = vsel %vm1580, %v4987, %v5026
    %v5029 = vunpack.c.l.s4 1934713408
    %v5030 = vunpack.c.0.s8 %v5029
    %v5031 = vperm.slane %v5025, %v5030
    %v5033 = vunpack.c.l.s4 1934713408
    %v5034 = vunpack.c.0.s8 %v5033
    %v5035 = vperm.slane %v5027, %v5034
    %v5036 = vrot.slane %v5019, 4
    %v5037 = vsel %vm1580, %v5036, %v4995
    %v5038 = vrot.slane %v4995, 4
    %v5039 = vsel %vm1580, %v5019, %v5038
    %v5040 = vrot.slane %v5023, 4
    %v5041 = vsel %vm1580, %v5040, %v4999
    %v5042 = vrot.slane %v4999, 4
    %v5043 = vsel %vm1580, %v5023, %v5042
    %v5044 = vrot.slane %v5031, 4
    %v5045 = vsel %vm1580, %v5044, %v5007
    %v5046 = vrot.slane %v5007, 4
    %v5047 = vsel %vm1580, %v5031, %v5046
    %v5048 = vrot.slane %v5035, 4
    %v5049 = vsel %vm1580, %v5048, %v5011
    %v5050 = vrot.slane %v5011, 4
    %v5051 = vsel %vm1580, %v5035, %v5050
    %v5052 = vrot.slane %v1093, 4
    %v5053 = vsel %vm1580, %v5052, %v899
    %v5054 = vrot.slane %v899, 4
    %v5055 = vsel %vm1580, %v1093, %v5054
    %v5057 = vunpack.c.l.s4 1983009808
    %v5058 = vunpack.c.0.s8 %v5057
    %v5059 = vperm.slane %v5053, %v5058
    %v5061 = vunpack.c.l.s4 1983009808
    %v5062 = vunpack.c.0.s8 %v5061
    %v5063 = vperm.slane %v5055, %v5062
    %v5064 = vrot.slane %v1190, 4
    %v5065 = vsel %vm1580, %v5064, %v996
    %v5066 = vrot.slane %v996, 4
    %v5067 = vsel %vm1580, %v1190, %v5066
    %v5069 = vunpack.c.l.s4 1983009808
    %v5070 = vunpack.c.0.s8 %v5069
    %v5071 = vperm.slane %v5065, %v5070
    %v5073 = vunpack.c.l.s4 1983009808
    %v5074 = vunpack.c.0.s8 %v5073
    %v5075 = vperm.slane %v5067, %v5074
    %v5076 = vrot.slane %v1481, 4
    %v5077 = vsel %vm1580, %v5076, %v1287
    %v5078 = vrot.slane %v1287, 4
    %v5079 = vsel %vm1580, %v1481, %v5078
    %v5081 = vunpack.c.l.s4 1983009808
    %v5082 = vunpack.c.0.s8 %v5081
    %v5083 = vperm.slane %v5077, %v5082
    %v5085 = vunpack.c.l.s4 1983009808
    %v5086 = vunpack.c.0.s8 %v5085
    %v5087 = vperm.slane %v5079, %v5086
    %v5088 = vrot.slane %v1578, 4
    %v5089 = vsel %vm1580, %v5088, %v1384
    %v5090 = vrot.slane %v1384, 4
    %v5091 = vsel %vm1580, %v1578, %v5090
    %v5093 = vunpack.c.l.s4 1983009808
    %v5094 = vunpack.c.0.s8 %v5093
    %v5095 = vperm.slane %v5089, %v5094
    %v5097 = vunpack.c.l.s4 1983009808
    %v5098 = vunpack.c.0.s8 %v5097
    %v5099 = vperm.slane %v5091, %v5098
    %v5100 = vrot.slane %v5071, 4
    %v5101 = vsel %vm1580, %v5100, %v5059
    %v5102 = vrot.slane %v5059, 4
    %v5103 = vsel %vm1580, %v5071, %v5102
    %v5105 = vunpack.c.l.s4 1934713408
    %v5106 = vunpack.c.0.s8 %v5105
    %v5107 = vperm.slane %v5101, %v5106
    %v5109 = vunpack.c.l.s4 1934713408
    %v5110 = vunpack.c.0.s8 %v5109
    %v5111 = vperm.slane %v5103, %v5110
    %v5112 = vrot.slane %v5075, 4
    %v5113 = vsel %vm1580, %v5112, %v5063
    %v5114 = vrot.slane %v5063, 4
    %v5115 = vsel %vm1580, %v5075, %v5114
    %v5117 = vunpack.c.l.s4 1934713408
    %v5118 = vunpack.c.0.s8 %v5117
    %v5119 = vperm.slane %v5113, %v5118
    %v5121 = vunpack.c.l.s4 1934713408
    %v5122 = vunpack.c.0.s8 %v5121
    %v5123 = vperm.slane %v5115, %v5122
    %v5124 = vrot.slane %v5095, 4
    %v5125 = vsel %vm1580, %v5124, %v5083
    %v5126 = vrot.slane %v5083, 4
    %v5127 = vsel %vm1580, %v5095, %v5126
    %v5129 = vunpack.c.l.s4 1934713408
    %v5130 = vunpack.c.0.s8 %v5129
    %v5131 = vperm.slane %v5125, %v5130
    %v5133 = vunpack.c.l.s4 1934713408
    %v5134 = vunpack.c.0.s8 %v5133
    %v5135 = vperm.slane %v5127, %v5134
    %v5136 = vrot.slane %v5099, 4
    %v5137 = vsel %vm1580, %v5136, %v5087
    %v5138 = vrot.slane %v5087, 4
    %v5139 = vsel %vm1580, %v5099, %v5138
    %v5141 = vunpack.c.l.s4 1934713408
    %v5142 = vunpack.c.0.s8 %v5141
    %v5143 = vperm.slane %v5137, %v5142
    %v5145 = vunpack.c.l.s4 1934713408
    %v5146 = vunpack.c.0.s8 %v5145
    %v5147 = vperm.slane %v5139, %v5146
    %v5148 = vrot.slane %v5131, 4
    %v5149 = vsel %vm1580, %v5148, %v5107
    %v5150 = vrot.slane %v5107, 4
    %v5151 = vsel %vm1580, %v5131, %v5150
    %v5152 = vrot.slane %v5135, 4
    %v5153 = vsel %vm1580, %v5152, %v5111
    %v5154 = vrot.slane %v5111, 4
    %v5155 = vsel %vm1580, %v5135, %v5154
    %v5156 = vrot.slane %v5143, 4
    %v5157 = vsel %vm1580, %v5156, %v5119
    %v5158 = vrot.slane %v5119, 4
    %v5159 = vsel %vm1580, %v5143, %v5158
    %v5160 = vrot.slane %v5147, 4
    %v5161 = vsel %vm1580, %v5160, %v5123
    %v5162 = vrot.slane %v5123, 4
    %v5163 = vsel %vm1580, %v5147, %v5162
    %5166 = vrot.lane.b32.xlu0 %v1679, 2
    %v5167 = vpop.permute.xlu0 %5166
    %5168 = vrot.lane.b32.xlu0 %v1791, 2
    %v5169 = vpop.permute.xlu0 %5168
    %5174 = vrot.lane.b32.xlu0 %v1681, 4
    %v5175 = vpop.permute.xlu0 %5174
    %5176 = vrot.lane.b32.xlu0 %v1793, 4
    %v5177 = vpop.permute.xlu0 %5176
    %5182 = vrot.lane.b32.xlu0 %v1683, 6
    %v5183 = vpop.permute.xlu0 %5182
    %5184 = vrot.lane.b32.xlu0 %v1795, 6
    %v5185 = vpop.permute.xlu0 %5184
    %5190 = vrot.lane.b32.xlu0 %v1685, 8
    %v5191 = vpop.permute.xlu0 %5190
    %5192 = vrot.lane.b32.xlu0 %v1797, 8
    %v5193 = vpop.permute.xlu0 %5192
    %5198 = vrot.lane.b32.xlu0 %v1687, 10
    %v5199 = vpop.permute.xlu0 %5198
    %5200 = vrot.lane.b32.xlu0 %v1799, 10
    %v5201 = vpop.permute.xlu0 %5200
    %5206 = vrot.lane.b32.xlu0 %v1689, 12
    %v5207 = vpop.permute.xlu0 %5206
    %5208 = vrot.lane.b32.xlu0 %v1801, 12
    %v5209 = vpop.permute.xlu0 %5208
    %5214 = vrot.lane.b32.xlu0 %v1691, 14
    %v5215 = vpop.permute.xlu0 %5214
    %5216 = vrot.lane.b32.xlu0 %v1803, 14
    %v5217 = vpop.permute.xlu0 %5216
    %5222 = vrot.lane.b32.xlu0 %v1901, 16
    %v5223 = vpop.permute.xlu0 %5222
    %5224 = vrot.lane.b32.xlu0 %v2013, 16
    %v5225 = vpop.permute.xlu0 %5224
    %5230 = vrot.lane.b32.xlu0 %v1903, 18
    %v5231 = vpop.permute.xlu0 %5230
    %5232 = vrot.lane.b32.xlu0 %v2015, 18
    %v5233 = vpop.permute.xlu0 %5232
    %5238 = vrot.lane.b32.xlu0 %v1905, 20
    %v5239 = vpop.permute.xlu0 %5238
    %5240 = vrot.lane.b32.xlu0 %v2017, 20
    %v5241 = vpop.permute.xlu0 %5240
    %5246 = vrot.lane.b32.xlu0 %v1907, 22
    %v5247 = vpop.permute.xlu0 %5246
    %5248 = vrot.lane.b32.xlu0 %v2019, 22
    %v5249 = vpop.permute.xlu0 %5248
    %5254 = vrot.lane.b32.xlu0 %v1909, 24
    %v5255 = vpop.permute.xlu0 %5254
    %5256 = vrot.lane.b32.xlu0 %v2021, 24
    %v5257 = vpop.permute.xlu0 %5256
    %5262 = vrot.lane.b32.xlu0 %v1911, 26
    %v5263 = vpop.permute.xlu0 %5262
    %5264 = vrot.lane.b32.xlu0 %v2023, 26
    %v5265 = vpop.permute.xlu0 %5264
    %5270 = vrot.lane.b32.xlu0 %v1913, 28
    %v5271 = vpop.permute.xlu0 %5270
    %5272 = vrot.lane.b32.xlu0 %v2025, 28
    %v5273 = vpop.permute.xlu0 %5272
    %5278 = vrot.lane.b32.xlu0 %v1915, 30
    %v5279 = vpop.permute.xlu0 %5278
    %5280 = vrot.lane.b32.xlu0 %v2027, 30
    %v5281 = vpop.permute.xlu0 %5280
    %5286 = vrot.lane.b32.xlu0 %v2125, 32
    %v5287 = vpop.permute.xlu0 %5286
    %5288 = vrot.lane.b32.xlu0 %v2237, 32
    %v5289 = vpop.permute.xlu0 %5288
    %5294 = vrot.lane.b32.xlu0 %v2127, 34
    %v5295 = vpop.permute.xlu0 %5294
    %5296 = vrot.lane.b32.xlu0 %v2239, 34
    %v5297 = vpop.permute.xlu0 %5296
    %5302 = vrot.lane.b32.xlu0 %v2129, 36
    %v5303 = vpop.permute.xlu0 %5302
    %5304 = vrot.lane.b32.xlu0 %v2241, 36
    %v5305 = vpop.permute.xlu0 %5304
    %5310 = vrot.lane.b32.xlu0 %v2131, 38
    %v5311 = vpop.permute.xlu0 %5310
    %5312 = vrot.lane.b32.xlu0 %v2243, 38
    %v5313 = vpop.permute.xlu0 %5312
    %5318 = vrot.lane.b32.xlu0 %v2133, 40
    %v5319 = vpop.permute.xlu0 %5318
    %5320 = vrot.lane.b32.xlu0 %v2245, 40
    %v5321 = vpop.permute.xlu0 %5320
    %5326 = vrot.lane.b32.xlu0 %v2135, 42
    %v5327 = vpop.permute.xlu0 %5326
    %5328 = vrot.lane.b32.xlu0 %v2247, 42
    %v5329 = vpop.permute.xlu0 %5328
    %5334 = vrot.lane.b32.xlu0 %v2137, 44
    %v5335 = vpop.permute.xlu0 %5334
    %5336 = vrot.lane.b32.xlu0 %v2249, 44
    %v5337 = vpop.permute.xlu0 %5336
    %5342 = vrot.lane.b32.xlu0 %v2139, 46
    %v5343 = vpop.permute.xlu0 %5342
    %5344 = vrot.lane.b32.xlu0 %v2251, 46
    %v5345 = vpop.permute.xlu0 %5344
    %5350 = vrot.lane.b32.xlu0 %v2349, 48
    %v5351 = vpop.permute.xlu0 %5350
    %5352 = vrot.lane.b32.xlu0 %v2461, 48
    %v5353 = vpop.permute.xlu0 %5352
    %5358 = vrot.lane.b32.xlu0 %v2351, 50
    %v5359 = vpop.permute.xlu0 %5358
    %5360 = vrot.lane.b32.xlu0 %v2463, 50
    %v5361 = vpop.permute.xlu0 %5360
    %5366 = vrot.lane.b32.xlu0 %v2353, 52
    %v5367 = vpop.permute.xlu0 %5366
    %5368 = vrot.lane.b32.xlu0 %v2465, 52
    %v5369 = vpop.permute.xlu0 %5368
    %5374 = vrot.lane.b32.xlu0 %v2355, 54
    %v5375 = vpop.permute.xlu0 %5374
    %5376 = vrot.lane.b32.xlu0 %v2467, 54
    %v5377 = vpop.permute.xlu0 %5376
    %5382 = vrot.lane.b32.xlu0 %v2357, 56
    %v5383 = vpop.permute.xlu0 %5382
    %5384 = vrot.lane.b32.xlu0 %v2469, 56
    %v5385 = vpop.permute.xlu0 %5384
    %5390 = vrot.lane.b32.xlu0 %v2359, 58
    %v5391 = vpop.permute.xlu0 %5390
    %5392 = vrot.lane.b32.xlu0 %v2471, 58
    %v5393 = vpop.permute.xlu0 %5392
    %5398 = vrot.lane.b32.xlu0 %v2361, 60
    %v5399 = vpop.permute.xlu0 %5398
    %5400 = vrot.lane.b32.xlu0 %v2473, 60
    %v5401 = vpop.permute.xlu0 %5400
    %5406 = vrot.lane.b32.xlu0 %v2363, 62
    %v5407 = vpop.permute.xlu0 %5406
    %5408 = vrot.lane.b32.xlu0 %v2475, 62
    %v5409 = vpop.permute.xlu0 %5408
    %5414 = vrot.lane.b32.xlu0 %v2573, 64
    %v5415 = vpop.permute.xlu0 %5414
    %5416 = vrot.lane.b32.xlu0 %v2685, 64
    %v5417 = vpop.permute.xlu0 %5416
    %5422 = vrot.lane.b32.xlu0 %v2575, 66
    %v5423 = vpop.permute.xlu0 %5422
    %5424 = vrot.lane.b32.xlu0 %v2687, 66
    %v5425 = vpop.permute.xlu0 %5424
    %5430 = vrot.lane.b32.xlu0 %v2577, 68
    %v5431 = vpop.permute.xlu0 %5430
    %5432 = vrot.lane.b32.xlu0 %v2689, 68
    %v5433 = vpop.permute.xlu0 %5432
    %5438 = vrot.lane.b32.xlu0 %v2579, 70
    %v5439 = vpop.permute.xlu0 %5438
    %5440 = vrot.lane.b32.xlu0 %v2691, 70
    %v5441 = vpop.permute.xlu0 %5440
    %5446 = vrot.lane.b32.xlu0 %v2581, 72
    %v5447 = vpop.permute.xlu0 %5446
    %5448 = vrot.lane.b32.xlu0 %v2693, 72
    %v5449 = vpop.permute.xlu0 %5448
    %5454 = vrot.lane.b32.xlu0 %v2583, 74
    %v5455 = vpop.permute.xlu0 %5454
    %5456 = vrot.lane.b32.xlu0 %v2695, 74
    %v5457 = vpop.permute.xlu0 %5456
    %5462 = vrot.lane.b32.xlu0 %v2585, 76
    %v5463 = vpop.permute.xlu0 %5462
    %5464 = vrot.lane.b32.xlu0 %v2697, 76
    %v5465 = vpop.permute.xlu0 %5464
    %5470 = vrot.lane.b32.xlu0 %v2587, 78
    %v5471 = vpop.permute.xlu0 %5470
    %5472 = vrot.lane.b32.xlu0 %v2699, 78
    %v5473 = vpop.permute.xlu0 %5472
    %5478 = vrot.lane.b32.xlu0 %v2797, 80
    %v5479 = vpop.permute.xlu0 %5478
    %5480 = vrot.lane.b32.xlu0 %v2909, 80
    %v5481 = vpop.permute.xlu0 %5480
    %5486 = vrot.lane.b32.xlu0 %v2799, 82
    %v5487 = vpop.permute.xlu0 %5486
    %5488 = vrot.lane.b32.xlu0 %v2911, 82
    %v5489 = vpop.permute.xlu0 %5488
    %5494 = vrot.lane.b32.xlu0 %v2801, 84
    %v5495 = vpop.permute.xlu0 %5494
    %5496 = vrot.lane.b32.xlu0 %v2913, 84
    %v5497 = vpop.permute.xlu0 %5496
    %5502 = vrot.lane.b32.xlu0 %v2803, 86
    %v5503 = vpop.permute.xlu0 %5502
    %5504 = vrot.lane.b32.xlu0 %v2915, 86
    %v5505 = vpop.permute.xlu0 %5504
    %5510 = vrot.lane.b32.xlu0 %v2805, 88
    %v5511 = vpop.permute.xlu0 %5510
    %5512 = vrot.lane.b32.xlu0 %v2917, 88
    %v5513 = vpop.permute.xlu0 %5512
    %5518 = vrot.lane.b32.xlu0 %v2807, 90
    %v5519 = vpop.permute.xlu0 %5518
    %5520 = vrot.lane.b32.xlu0 %v2919, 90
    %v5521 = vpop.permute.xlu0 %5520
    %5526 = vrot.lane.b32.xlu0 %v2809, 92
    %v5527 = vpop.permute.xlu0 %5526
    %5528 = vrot.lane.b32.xlu0 %v2921, 92
    %v5529 = vpop.permute.xlu0 %5528
    %5534 = vrot.lane.b32.xlu0 %v2811, 94
    %v5535 = vpop.permute.xlu0 %5534
    %5536 = vrot.lane.b32.xlu0 %v2923, 94
    %v5537 = vpop.permute.xlu0 %5536
    %5542 = vrot.lane.b32.xlu0 %v3021, 96
    %v5543 = vpop.permute.xlu0 %5542
    %5544 = vrot.lane.b32.xlu0 %v3133, 96
    %v5545 = vpop.permute.xlu0 %5544
    %5550 = vrot.lane.b32.xlu0 %v3023, 98
    %v5551 = vpop.permute.xlu0 %5550
    %5552 = vrot.lane.b32.xlu0 %v3135, 98
    %v5553 = vpop.permute.xlu0 %5552
    %5558 = vrot.lane.b32.xlu0 %v3025, 100
    %v5559 = vpop.permute.xlu0 %5558
    %5560 = vrot.lane.b32.xlu0 %v3137, 100
    %v5561 = vpop.permute.xlu0 %5560
    %5566 = vrot.lane.b32.xlu0 %v3027, 102
    %v5567 = vpop.permute.xlu0 %5566
    %5568 = vrot.lane.b32.xlu0 %v3139, 102
    %v5569 = vpop.permute.xlu0 %5568
    %5574 = vrot.lane.b32.xlu0 %v3029, 104
    %v5575 = vpop.permute.xlu0 %5574
    %5576 = vrot.lane.b32.xlu0 %v3141, 104
    %v5577 = vpop.permute.xlu0 %5576
    %5582 = vrot.lane.b32.xlu0 %v3031, 106
    %v5583 = vpop.permute.xlu0 %5582
    %5584 = vrot.lane.b32.xlu0 %v3143, 106
    %v5585 = vpop.permute.xlu0 %5584
    %5590 = vrot.lane.b32.xlu0 %v3033, 108
    %v5591 = vpop.permute.xlu0 %5590
    %5592 = vrot.lane.b32.xlu0 %v3145, 108
    %v5593 = vpop.permute.xlu0 %5592
    %5598 = vrot.lane.b32.xlu0 %v3035, 110
    %v5599 = vpop.permute.xlu0 %5598
    %5600 = vrot.lane.b32.xlu0 %v3147, 110
    %v5601 = vpop.permute.xlu0 %5600
    %5606 = vrot.lane.b32.xlu0 %v3245, 112
    %v5607 = vpop.permute.xlu0 %5606
    %5608 = vrot.lane.b32.xlu0 %v3357, 112
    %v5609 = vpop.permute.xlu0 %5608
    %5614 = vrot.lane.b32.xlu0 %v3247, 114
    %v5615 = vpop.permute.xlu0 %5614
    %5616 = vrot.lane.b32.xlu0 %v3359, 114
    %v5617 = vpop.permute.xlu0 %5616
    %5622 = vrot.lane.b32.xlu0 %v3249, 116
    %v5623 = vpop.permute.xlu0 %5622
    %5624 = vrot.lane.b32.xlu0 %v3361, 116
    %v5625 = vpop.permute.xlu0 %5624
    %5630 = vrot.lane.b32.xlu0 %v3251, 118
    %v5631 = vpop.permute.xlu0 %5630
    %5632 = vrot.lane.b32.xlu0 %v3363, 118
    %v5633 = vpop.permute.xlu0 %5632
    %5638 = vrot.lane.b32.xlu0 %v3253, 120
    %v5639 = vpop.permute.xlu0 %5638
    %5640 = vrot.lane.b32.xlu0 %v3365, 120
    %v5641 = vpop.permute.xlu0 %5640
    %5646 = vrot.lane.b32.xlu0 %v3255, 122
    %v5647 = vpop.permute.xlu0 %5646
    %5648 = vrot.lane.b32.xlu0 %v3367, 122
    %v5649 = vpop.permute.xlu0 %5648
    %5654 = vrot.lane.b32.xlu0 %v3257, 124
    %v5655 = vpop.permute.xlu0 %5654
    %5656 = vrot.lane.b32.xlu0 %v3369, 124
    %v5657 = vpop.permute.xlu0 %5656
    %5662 = vrot.lane.b32.xlu0 %v3259, 126
    %v5663 = vpop.permute.xlu0 %5662
    %5664 = vrot.lane.b32.xlu0 %v3371, 126
    %v5665 = vpop.permute.xlu0 %5664
    %5670 = vrot.lane.b32.xlu0 %v3471, 2
    %v5671 = vpop.permute.xlu0 %5670
    %5672 = vrot.lane.b32.xlu0 %v3583, 2
    %v5673 = vpop.permute.xlu0 %5672
    %5678 = vrot.lane.b32.xlu0 %v3473, 4
    %v5679 = vpop.permute.xlu0 %5678
    %5680 = vrot.lane.b32.xlu0 %v3585, 4
    %v5681 = vpop.permute.xlu0 %5680
    %5686 = vrot.lane.b32.xlu0 %v3475, 6
    %v5687 = vpop.permute.xlu0 %5686
    %5688 = vrot.lane.b32.xlu0 %v3587, 6
    %v5689 = vpop.permute.xlu0 %5688
    %5694 = vrot.lane.b32.xlu0 %v3477, 8
    %v5695 = vpop.permute.xlu0 %5694
    %5696 = vrot.lane.b32.xlu0 %v3589, 8
    %v5697 = vpop.permute.xlu0 %5696
    %5702 = vrot.lane.b32.xlu0 %v3479, 10
    %v5703 = vpop.permute.xlu0 %5702
    %5704 = vrot.lane.b32.xlu0 %v3591, 10
    %v5705 = vpop.permute.xlu0 %5704
    %5710 = vrot.lane.b32.xlu0 %v3481, 12
    %v5711 = vpop.permute.xlu0 %5710
    %5712 = vrot.lane.b32.xlu0 %v3593, 12
    %v5713 = vpop.permute.xlu0 %5712
    %5718 = vrot.lane.b32.xlu0 %v3483, 14
    %v5719 = vpop.permute.xlu0 %5718
    %5720 = vrot.lane.b32.xlu0 %v3595, 14
    %v5721 = vpop.permute.xlu0 %5720
    %5726 = vrot.lane.b32.xlu0 %v3693, 16
    %v5727 = vpop.permute.xlu0 %5726
    %5728 = vrot.lane.b32.xlu0 %v3805, 16
    %v5729 = vpop.permute.xlu0 %5728
    %5734 = vrot.lane.b32.xlu0 %v3695, 18
    %v5735 = vpop.permute.xlu0 %5734
    %5736 = vrot.lane.b32.xlu0 %v3807, 18
    %v5737 = vpop.permute.xlu0 %5736
    %5742 = vrot.lane.b32.xlu0 %v3697, 20
    %v5743 = vpop.permute.xlu0 %5742
    %5744 = vrot.lane.b32.xlu0 %v3809, 20
    %v5745 = vpop.permute.xlu0 %5744
    %5750 = vrot.lane.b32.xlu0 %v3699, 22
    %v5751 = vpop.permute.xlu0 %5750
    %5752 = vrot.lane.b32.xlu0 %v3811, 22
    %v5753 = vpop.permute.xlu0 %5752
    %5758 = vrot.lane.b32.xlu0 %v3701, 24
    %v5759 = vpop.permute.xlu0 %5758
    %5760 = vrot.lane.b32.xlu0 %v3813, 24
    %v5761 = vpop.permute.xlu0 %5760
    %5766 = vrot.lane.b32.xlu0 %v3703, 26
    %v5767 = vpop.permute.xlu0 %5766
    %5768 = vrot.lane.b32.xlu0 %v3815, 26
    %v5769 = vpop.permute.xlu0 %5768
    %5774 = vrot.lane.b32.xlu0 %v3705, 28
    %v5775 = vpop.permute.xlu0 %5774
    %5776 = vrot.lane.b32.xlu0 %v3817, 28
    %v5777 = vpop.permute.xlu0 %5776
    %5782 = vrot.lane.b32.xlu0 %v3707, 30
    %v5783 = vpop.permute.xlu0 %5782
    %5784 = vrot.lane.b32.xlu0 %v3819, 30
    %v5785 = vpop.permute.xlu0 %5784
    %5790 = vrot.lane.b32.xlu0 %v3917, 32
    %v5791 = vpop.permute.xlu0 %5790
    %5792 = vrot.lane.b32.xlu0 %v4029, 32
    %v5793 = vpop.permute.xlu0 %5792
    %5798 = vrot.lane.b32.xlu0 %v3919, 34
    %v5799 = vpop.permute.xlu0 %5798
    %5800 = vrot.lane.b32.xlu0 %v4031, 34
    %v5801 = vpop.permute.xlu0 %5800
    %5806 = vrot.lane.b32.xlu0 %v3921, 36
    %v5807 = vpop.permute.xlu0 %5806
    %5808 = vrot.lane.b32.xlu0 %v4033, 36
    %v5809 = vpop.permute.xlu0 %5808
    %5814 = vrot.lane.b32.xlu0 %v3923, 38
    %v5815 = vpop.permute.xlu0 %5814
    %5816 = vrot.lane.b32.xlu0 %v4035, 38
    %v5817 = vpop.permute.xlu0 %5816
    %5822 = vrot.lane.b32.xlu0 %v3925, 40
    %v5823 = vpop.permute.xlu0 %5822
    %5824 = vrot.lane.b32.xlu0 %v4037, 40
    %v5825 = vpop.permute.xlu0 %5824
    %5830 = vrot.lane.b32.xlu0 %v3927, 42
    %v5831 = vpop.permute.xlu0 %5830
    %5832 = vrot.lane.b32.xlu0 %v4039, 42
    %v5833 = vpop.permute.xlu0 %5832
    %5838 = vrot.lane.b32.xlu0 %v3929, 44
    %v5839 = vpop.permute.xlu0 %5838
    %5840 = vrot.lane.b32.xlu0 %v4041, 44
    %v5841 = vpop.permute.xlu0 %5840
    %5846 = vrot.lane.b32.xlu0 %v3931, 46
    %v5847 = vpop.permute.xlu0 %5846
    %5848 = vrot.lane.b32.xlu0 %v4043, 46
    %v5849 = vpop.permute.xlu0 %5848
    %5854 = vrot.lane.b32.xlu0 %v4141, 48
    %v5855 = vpop.permute.xlu0 %5854
    %5856 = vrot.lane.b32.xlu0 %v4253, 48
    %v5857 = vpop.permute.xlu0 %5856
    %5862 = vrot.lane.b32.xlu0 %v4143, 50
    %v5863 = vpop.permute.xlu0 %5862
    %5864 = vrot.lane.b32.xlu0 %v4255, 50
    %v5865 = vpop.permute.xlu0 %5864
    %5870 = vrot.lane.b32.xlu0 %v4145, 52
    %v5871 = vpop.permute.xlu0 %5870
    %5872 = vrot.lane.b32.xlu0 %v4257, 52
    %v5873 = vpop.permute.xlu0 %5872
    %5878 = vrot.lane.b32.xlu0 %v4147, 54
    %v5879 = vpop.permute.xlu0 %5878
    %5880 = vrot.lane.b32.xlu0 %v4259, 54
    %v5881 = vpop.permute.xlu0 %5880
    %5886 = vrot.lane.b32.xlu0 %v4149, 56
    %v5887 = vpop.permute.xlu0 %5886
    %5888 = vrot.lane.b32.xlu0 %v4261, 56
    %v5889 = vpop.permute.xlu0 %5888
    %5894 = vrot.lane.b32.xlu0 %v4151, 58
    %v5895 = vpop.permute.xlu0 %5894
    %5896 = vrot.lane.b32.xlu0 %v4263, 58
    %v5897 = vpop.permute.xlu0 %5896
    %5902 = vrot.lane.b32.xlu0 %v4153, 60
    %v5903 = vpop.permute.xlu0 %5902
    %5904 = vrot.lane.b32.xlu0 %v4265, 60
    %v5905 = vpop.permute.xlu0 %5904
    %5910 = vrot.lane.b32.xlu0 %v4155, 62
    %v5911 = vpop.permute.xlu0 %5910
    %5912 = vrot.lane.b32.xlu0 %v4267, 62
    %v5913 = vpop.permute.xlu0 %5912
    %5918 = vrot.lane.b32.xlu0 %v4365, 64
    %v5919 = vpop.permute.xlu0 %5918
    %5920 = vrot.lane.b32.xlu0 %v4477, 64
    %v5921 = vpop.permute.xlu0 %5920
    %5926 = vrot.lane.b32.xlu0 %v4367, 66
    %v5927 = vpop.permute.xlu0 %5926
    %5928 = vrot.lane.b32.xlu0 %v4479, 66
    %v5929 = vpop.permute.xlu0 %5928
    %5934 = vrot.lane.b32.xlu0 %v4369, 68
    %v5935 = vpop.permute.xlu0 %5934
    %5936 = vrot.lane.b32.xlu0 %v4481, 68
    %v5937 = vpop.permute.xlu0 %5936
    %5942 = vrot.lane.b32.xlu0 %v4371, 70
    %v5943 = vpop.permute.xlu0 %5942
    %5944 = vrot.lane.b32.xlu0 %v4483, 70
    %v5945 = vpop.permute.xlu0 %5944
    %5950 = vrot.lane.b32.xlu0 %v4373, 72
    %v5951 = vpop.permute.xlu0 %5950
    %5952 = vrot.lane.b32.xlu0 %v4485, 72
    %v5953 = vpop.permute.xlu0 %5952
    %5958 = vrot.lane.b32.xlu0 %v4375, 74
    %v5959 = vpop.permute.xlu0 %5958
    %5960 = vrot.lane.b32.xlu0 %v4487, 74
    %v5961 = vpop.permute.xlu0 %5960
    %5966 = vrot.lane.b32.xlu0 %v4377, 76
    %v5967 = vpop.permute.xlu0 %5966
    %5968 = vrot.lane.b32.xlu0 %v4489, 76
    %v5969 = vpop.permute.xlu0 %5968
    %5974 = vrot.lane.b32.xlu0 %v4379, 78
    %v5975 = vpop.permute.xlu0 %5974
    %5976 = vrot.lane.b32.xlu0 %v4491, 78
    %v5977 = vpop.permute.xlu0 %5976
    %5982 = vrot.lane.b32.xlu0 %v4589, 80
    %v5983 = vpop.permute.xlu0 %5982
    %5984 = vrot.lane.b32.xlu0 %v4701, 80
    %v5985 = vpop.permute.xlu0 %5984
    %5990 = vrot.lane.b32.xlu0 %v4591, 82
    %v5991 = vpop.permute.xlu0 %5990
    %5992 = vrot.lane.b32.xlu0 %v4703, 82
    %v5993 = vpop.permute.xlu0 %5992
    %5998 = vrot.lane.b32.xlu0 %v4593, 84
    %v5999 = vpop.permute.xlu0 %5998
    %6000 = vrot.lane.b32.xlu0 %v4705, 84
    %v6001 = vpop.permute.xlu0 %6000
    %6006 = vrot.lane.b32.xlu0 %v4595, 86
    %v6007 = vpop.permute.xlu0 %6006
    %6008 = vrot.lane.b32.xlu0 %v4707, 86
    %v6009 = vpop.permute.xlu0 %6008
    %6014 = vrot.lane.b32.xlu0 %v4597, 88
    %v6015 = vpop.permute.xlu0 %6014
    %6016 = vrot.lane.b32.xlu0 %v4709, 88
    %v6017 = vpop.permute.xlu0 %6016
    %6022 = vrot.lane.b32.xlu0 %v4599, 90
    %v6023 = vpop.permute.xlu0 %6022
    %6024 = vrot.lane.b32.xlu0 %v4711, 90
    %v6025 = vpop.permute.xlu0 %6024
    %6030 = vrot.lane.b32.xlu0 %v4601, 92
    %v6031 = vpop.permute.xlu0 %6030
    %6032 = vrot.lane.b32.xlu0 %v4713, 92
    %v6033 = vpop.permute.xlu0 %6032
    %6038 = vrot.lane.b32.xlu0 %v4603, 94
    %v6039 = vpop.permute.xlu0 %6038
    %6040 = vrot.lane.b32.xlu0 %v4715, 94
    %v6041 = vpop.permute.xlu0 %6040
    %6046 = vrot.lane.b32.xlu0 %v4813, 96
    %v6047 = vpop.permute.xlu0 %6046
    %6048 = vrot.lane.b32.xlu0 %v4925, 96
    %v6049 = vpop.permute.xlu0 %6048
    %6054 = vrot.lane.b32.xlu0 %v4815, 98
    %v6055 = vpop.permute.xlu0 %6054
    %6056 = vrot.lane.b32.xlu0 %v4927, 98
    %v6057 = vpop.permute.xlu0 %6056
    %6062 = vrot.lane.b32.xlu0 %v4817, 100
    %v6063 = vpop.permute.xlu0 %6062
    %6064 = vrot.lane.b32.xlu0 %v4929, 100
    %v6065 = vpop.permute.xlu0 %6064
    %6070 = vrot.lane.b32.xlu0 %v4819, 102
    %v6071 = vpop.permute.xlu0 %6070
    %6072 = vrot.lane.b32.xlu0 %v4931, 102
    %v6073 = vpop.permute.xlu0 %6072
    %6078 = vrot.lane.b32.xlu0 %v4821, 104
    %v6079 = vpop.permute.xlu0 %6078
    %6080 = vrot.lane.b32.xlu0 %v4933, 104
    %v6081 = vpop.permute.xlu0 %6080
    %6086 = vrot.lane.b32.xlu0 %v4823, 106
    %v6087 = vpop.permute.xlu0 %6086
    %6088 = vrot.lane.b32.xlu0 %v4935, 106
    %v6089 = vpop.permute.xlu0 %6088
    %6094 = vrot.lane.b32.xlu0 %v4825, 108
    %v6095 = vpop.permute.xlu0 %6094
    %6096 = vrot.lane.b32.xlu0 %v4937, 108
    %v6097 = vpop.permute.xlu0 %6096
    %6102 = vrot.lane.b32.xlu0 %v4827, 110
    %v6103 = vpop.permute.xlu0 %6102
    %6104 = vrot.lane.b32.xlu0 %v4939, 110
    %v6105 = vpop.permute.xlu0 %6104
    %6110 = vrot.lane.b32.xlu0 %v5037, 112
    %v6111 = vpop.permute.xlu0 %6110
    %6112 = vrot.lane.b32.xlu0 %v5149, 112
    %v6113 = vpop.permute.xlu0 %6112
    %6118 = vrot.lane.b32.xlu0 %v5039, 114
    %v6119 = vpop.permute.xlu0 %6118
    %6120 = vrot.lane.b32.xlu0 %v5151, 114
    %v6121 = vpop.permute.xlu0 %6120
    %6126 = vrot.lane.b32.xlu0 %v5041, 116
    %v6127 = vpop.permute.xlu0 %6126
    %6128 = vrot.lane.b32.xlu0 %v5153, 116
    %v6129 = vpop.permute.xlu0 %6128
    %6134 = vrot.lane.b32.xlu0 %v5043, 118
    %v6135 = vpop.permute.xlu0 %6134
    %6136 = vrot.lane.b32.xlu0 %v5155, 118
    %v6137 = vpop.permute.xlu0 %6136
    %6142 = vrot.lane.b32.xlu0 %v5045, 120
    %v6143 = vpop.permute.xlu0 %6142
    %6144 = vrot.lane.b32.xlu0 %v5157, 120
    %v6145 = vpop.permute.xlu0 %6144
    %6150 = vrot.lane.b32.xlu0 %v5047, 122
    %v6151 = vpop.permute.xlu0 %6150
    %6152 = vrot.lane.b32.xlu0 %v5159, 122
    %v6153 = vpop.permute.xlu0 %6152
    %6158 = vrot.lane.b32.xlu0 %v5049, 124
    %v6159 = vpop.permute.xlu0 %6158
    %6160 = vrot.lane.b32.xlu0 %v5161, 124
    %v6161 = vpop.permute.xlu0 %6160
    %6166 = vrot.lane.b32.xlu0 %v5051, 126
    %v6167 = vpop.permute.xlu0 %6166
    %6168 = vrot.lane.b32.xlu0 %v5163, 126
    %v6169 = vpop.permute.xlu0 %6168
    %vm6172 = vcmask 15360
    %v6173 = vsel %vm6172, %v1677, %v5167
    %v6174 = vsel %vm6172, %v1789, %v5169
    %vm6175 = vcmask 31744
    %v6176 = vsel %vm6175, %v6173, %v5175
    %v6177 = vsel %vm6175, %v6174, %v5177
    %vm6178 = vcmask 48128
    %v6179 = vsel %vm6178, %v6176, %v5183
    %v6180 = vsel %vm6178, %v6177, %v5185
    %vm6181 = vcmask 64512
    %v6182 = vsel %vm6181, %v6179, %v5191
    %v6183 = vsel %vm6181, %v6180, %v5193
    %vm6184 = vcmask 80896
    %v6185 = vsel %vm6184, %v6182, %v5199
    %v6186 = vsel %vm6184, %v6183, %v5201
    %vm6187 = vcmask 97280
    %v6188 = vsel %vm6187, %v6185, %v5207
    %v6189 = vsel %vm6187, %v6186, %v5209
    %vm6190 = vcmask 113664
    %v6191 = vsel %vm6190, %v6188, %v5215
    %v6192 = vsel %vm6190, %v6189, %v5217
    %vm6193 = vcmask 130048
    %v6194 = vsel %vm6193, %v6191, %v5223
    %v6195 = vsel %vm6193, %v6192, %v5225
    %vm6196 = vcmask 146432
    %v6197 = vsel %vm6196, %v6194, %v5231
    %v6198 = vsel %vm6196, %v6195, %v5233
    %vm6199 = vcmask 162816
    %v6200 = vsel %vm6199, %v6197, %v5239
    %v6201 = vsel %vm6199, %v6198, %v5241
    %vm6202 = vcmask 179200
    %v6203 = vsel %vm6202, %v6200, %v5247
    %v6204 = vsel %vm6202, %v6201, %v5249
    %vm6205 = vcmask 195584
    %v6206 = vsel %vm6205, %v6203, %v5255
    %v6207 = vsel %vm6205, %v6204, %v5257
    %vm6208 = vcmask 211968
    %v6209 = vsel %vm6208, %v6206, %v5263
    %v6210 = vsel %vm6208, %v6207, %v5265
    %vm6211 = vcmask 228352
    %v6212 = vsel %vm6211, %v6209, %v5271
    %v6213 = vsel %vm6211, %v6210, %v5273
    %vm6214 = vcmask 244736
    %v6215 = vsel %vm6214, %v6212, %v5279
    %v6216 = vsel %vm6214, %v6213, %v5281
    %vm6217 = vcmask 261120
    %v6218 = vsel %vm6217, %v6215, %v5287
    %v6219 = vsel %vm6217, %v6216, %v5289
    %vm6220 = vcmask 277504
    %v6221 = vsel %vm6220, %v6218, %v5295
    %v6222 = vsel %vm6220, %v6219, %v5297
    %vm6223 = vcmask 293888
    %v6224 = vsel %vm6223, %v6221, %v5303
    %v6225 = vsel %vm6223, %v6222, %v5305
    %vm6226 = vcmask 310272
    %v6227 = vsel %vm6226, %v6224, %v5311
    %v6228 = vsel %vm6226, %v6225, %v5313
    %vm6229 = vcmask 326656
    %v6230 = vsel %vm6229, %v6227, %v5319
    %v6231 = vsel %vm6229, %v6228, %v5321
    %vm6232 = vcmask 343040
    %v6233 = vsel %vm6232, %v6230, %v5327
    %v6234 = vsel %vm6232, %v6231, %v5329
    %vm6235 = vcmask 359424
    %v6236 = vsel %vm6235, %v6233, %v5335
    %v6237 = vsel %vm6235, %v6234, %v5337
    %vm6238 = vcmask 375808
    %v6239 = vsel %vm6238, %v6236, %v5343
    %v6240 = vsel %vm6238, %v6237, %v5345
    %vm6241 = vcmask 392192
    %v6242 = vsel %vm6241, %v6239, %v5351
    %v6243 = vsel %vm6241, %v6240, %v5353
    %vm6244 = vcmask 408576
    %v6245 = vsel %vm6244, %v6242, %v5359
    %v6246 = vsel %vm6244, %v6243, %v5361
    %vm6247 = vcmask 424960
    %v6248 = vsel %vm6247, %v6245, %v5367
    %v6249 = vsel %vm6247, %v6246, %v5369
    %vm6250 = vcmask 441344
    %v6251 = vsel %vm6250, %v6248, %v5375
    %v6252 = vsel %vm6250, %v6249, %v5377
    %vm6253 = vcmask 457728
    %v6254 = vsel %vm6253, %v6251, %v5383
    %v6255 = vsel %vm6253, %v6252, %v5385
    %vm6256 = vcmask 474112
    %v6257 = vsel %vm6256, %v6254, %v5391
    %v6258 = vsel %vm6256, %v6255, %v5393
    %vm6259 = vcmask 490496
    %v6260 = vsel %vm6259, %v6257, %v5399
    %v6261 = vsel %vm6259, %v6258, %v5401
    %vm6262 = vcmask 506880
    %v6263 = vsel %vm6262, %v6260, %v5407
    %v6264 = vsel %vm6262, %v6261, %v5409
    %vm6265 = vcmask 523264
    %v6266 = vsel %vm6265, %v6263, %v5415
    %v6267 = vsel %vm6265, %v6264, %v5417
    %vm6268 = vcmask 539648
    %v6269 = vsel %vm6268, %v6266, %v5423
    %v6270 = vsel %vm6268, %v6267, %v5425
    %vm6271 = vcmask 556032
    %v6272 = vsel %vm6271, %v6269, %v5431
    %v6273 = vsel %vm6271, %v6270, %v5433
    %vm6274 = vcmask 572416
    %v6275 = vsel %vm6274, %v6272, %v5439
    %v6276 = vsel %vm6274, %v6273, %v5441
    %vm6277 = vcmask 588800
    %v6278 = vsel %vm6277, %v6275, %v5447
    %v6279 = vsel %vm6277, %v6276, %v5449
    %vm6280 = vcmask 605184
    %v6281 = vsel %vm6280, %v6278, %v5455
    %v6282 = vsel %vm6280, %v6279, %v5457
    %vm6283 = vcmask 621568
    %v6284 = vsel %vm6283, %v6281, %v5463
    %v6285 = vsel %vm6283, %v6282, %v5465
    %vm6286 = vcmask 637952
    %v6287 = vsel %vm6286, %v6284, %v5471
    %v6288 = vsel %vm6286, %v6285, %v5473
    %vm6289 = vcmask 654336
    %v6290 = vsel %vm6289, %v6287, %v5479
    %v6291 = vsel %vm6289, %v6288, %v5481
    %vm6292 = vcmask 670720
    %v6293 = vsel %vm6292, %v6290, %v5487
    %v6294 = vsel %vm6292, %v6291, %v5489
    %vm6295 = vcmask 687104
    %v6296 = vsel %vm6295, %v6293, %v5495
    %v6297 = vsel %vm6295, %v6294, %v5497
    %vm6298 = vcmask 703488
    %v6299 = vsel %vm6298, %v6296, %v5503
    %v6300 = vsel %vm6298, %v6297, %v5505
    %vm6301 = vcmask 719872
    %v6302 = vsel %vm6301, %v6299, %v5511
    %v6303 = vsel %vm6301, %v6300, %v5513
    %vm6304 = vcmask 736256
    %v6305 = vsel %vm6304, %v6302, %v5519
    %v6306 = vsel %vm6304, %v6303, %v5521
    %vm6307 = vcmask 752640
    %v6308 = vsel %vm6307, %v6305, %v5527
    %v6309 = vsel %vm6307, %v6306, %v5529
    %vm6310 = vcmask 769024
    %v6311 = vsel %vm6310, %v6308, %v5535
    %v6312 = vsel %vm6310, %v6309, %v5537
    %vm6313 = vcmask 785408
    %v6314 = vsel %vm6313, %v6311, %v5543
    %v6315 = vsel %vm6313, %v6312, %v5545
    %vm6316 = vcmask 801792
    %v6317 = vsel %vm6316, %v6314, %v5551
    %v6318 = vsel %vm6316, %v6315, %v5553
    %vm6319 = vcmask 818176
    %v6320 = vsel %vm6319, %v6317, %v5559
    %v6321 = vsel %vm6319, %v6318, %v5561
    %vm6322 = vcmask 834560
    %v6323 = vsel %vm6322, %v6320, %v5567
    %v6324 = vsel %vm6322, %v6321, %v5569
    %vm6325 = vcmask 850944
    %v6326 = vsel %vm6325, %v6323, %v5575
    %v6327 = vsel %vm6325, %v6324, %v5577
    %vm6328 = vcmask 867328
    %v6329 = vsel %vm6328, %v6326, %v5583
    %v6330 = vsel %vm6328, %v6327, %v5585
    %vm6331 = vcmask 883712
    %v6332 = vsel %vm6331, %v6329, %v5591
    %v6333 = vsel %vm6331, %v6330, %v5593
    %vm6334 = vcmask 900096
    %v6335 = vsel %vm6334, %v6332, %v5599
    %v6336 = vsel %vm6334, %v6333, %v5601
    %vm6337 = vcmask 916480
    %v6338 = vsel %vm6337, %v6335, %v5607
    %v6339 = vsel %vm6337, %v6336, %v5609
    %vm6340 = vcmask 932864
    %v6341 = vsel %vm6340, %v6338, %v5615
    %v6342 = vsel %vm6340, %v6339, %v5617
    %vm6343 = vcmask 949248
    %v6344 = vsel %vm6343, %v6341, %v5623
    %v6345 = vsel %vm6343, %v6342, %v5625
    %vm6346 = vcmask 965632
    %v6347 = vsel %vm6346, %v6344, %v5631
    %v6348 = vsel %vm6346, %v6345, %v5633
    %vm6349 = vcmask 982016
    %v6350 = vsel %vm6349, %v6347, %v5639
    %v6351 = vsel %vm6349, %v6348, %v5641
    %vm6352 = vcmask 998400
    %v6353 = vsel %vm6352, %v6350, %v5647
    %v6354 = vsel %vm6352, %v6351, %v5649
    %vm6355 = vcmask 1014784
    %v6356 = vsel %vm6355, %v6353, %v5655
    %v6357 = vsel %vm6355, %v6354, %v5657
    %vm6358 = vcmask 1031168
    %v6359 = vsel %vm6358, %v6356, %v5663
    %v6360 = vsel %vm6358, %v6357, %v5665
    %v6361 = vsel %vm6172, %v3469, %v5671
    %v6362 = vsel %vm6172, %v3581, %v5673
    %v6363 = vsel %vm6175, %v6361, %v5679
    %v6364 = vsel %vm6175, %v6362, %v5681
    %v6365 = vsel %vm6178, %v6363, %v5687
    %v6366 = vsel %vm6178, %v6364, %v5689
    %v6367 = vsel %vm6181, %v6365, %v5695
    %v6368 = vsel %vm6181, %v6366, %v5697
    %v6369 = vsel %vm6184, %v6367, %v5703
    %v6370 = vsel %vm6184, %v6368, %v5705
    %v6371 = vsel %vm6187, %v6369, %v5711
    %v6372 = vsel %vm6187, %v6370, %v5713
    %v6373 = vsel %vm6190, %v6371, %v5719
    %v6374 = vsel %vm6190, %v6372, %v5721
    %v6375 = vsel %vm6193, %v6373, %v5727
    %v6376 = vsel %vm6193, %v6374, %v5729
    %v6377 = vsel %vm6196, %v6375, %v5735
    %v6378 = vsel %vm6196, %v6376, %v5737
    %v6379 = vsel %vm6199, %v6377, %v5743
    %v6380 = vsel %vm6199, %v6378, %v5745
    %v6381 = vsel %vm6202, %v6379, %v5751
    %v6382 = vsel %vm6202, %v6380, %v5753
    %v6383 = vsel %vm6205, %v6381, %v5759
    %v6384 = vsel %vm6205, %v6382, %v5761
    %v6385 = vsel %vm6208, %v6383, %v5767
    %v6386 = vsel %vm6208, %v6384, %v5769
    %v6387 = vsel %vm6211, %v6385, %v5775
    %v6388 = vsel %vm6211, %v6386, %v5777
    %v6389 = vsel %vm6214, %v6387, %v5783
    %v6390 = vsel %vm6214, %v6388, %v5785
    %v6391 = vsel %vm6217, %v6389, %v5791
    %v6392 = vsel %vm6217, %v6390, %v5793
    %v6393 = vsel %vm6220, %v6391, %v5799
    %v6394 = vsel %vm6220, %v6392, %v5801
    %v6395 = vsel %vm6223, %v6393, %v5807
    %v6396 = vsel %vm6223, %v6394, %v5809
    %v6397 = vsel %vm6226, %v6395, %v5815
    %v6398 = vsel %vm6226, %v6396, %v5817
    %v6399 = vsel %vm6229, %v6397, %v5823
    %v6400 = vsel %vm6229, %v6398, %v5825
    %v6401 = vsel %vm6232, %v6399, %v5831
    %v6402 = vsel %vm6232, %v6400, %v5833
    %v6403 = vsel %vm6235, %v6401, %v5839
    %v6404 = vsel %vm6235, %v6402, %v5841
    %v6405 = vsel %vm6238, %v6403, %v5847
    %v6406 = vsel %vm6238, %v6404, %v5849
    %v6407 = vsel %vm6241, %v6405, %v5855
    %v6408 = vsel %vm6241, %v6406, %v5857
    %v6409 = vsel %vm6244, %v6407, %v5863
    %v6410 = vsel %vm6244, %v6408, %v5865
    %v6411 = vsel %vm6247, %v6409, %v5871
    %v6412 = vsel %vm6247, %v6410, %v5873
    %v6413 = vsel %vm6250, %v6411, %v5879
    %v6414 = vsel %vm6250, %v6412, %v5881
    %v6415 = vsel %vm6253, %v6413, %v5887
    %v6416 = vsel %vm6253, %v6414, %v5889
    %v6417 = vsel %vm6256, %v6415, %v5895
    %v6418 = vsel %vm6256, %v6416, %v5897
    %v6419 = vsel %vm6259, %v6417, %v5903
    %v6420 = vsel %vm6259, %v6418, %v5905
    %v6421 = vsel %vm6262, %v6419, %v5911
    %v6422 = vsel %vm6262, %v6420, %v5913
    %v6423 = vsel %vm6265, %v6421, %v5919
    %v6424 = vsel %vm6265, %v6422, %v5921
    %v6425 = vsel %vm6268, %v6423, %v5927
    %v6426 = vsel %vm6268, %v6424, %v5929
    %v6427 = vsel %vm6271, %v6425, %v5935
    %v6428 = vsel %vm6271, %v6426, %v5937
    %v6429 = vsel %vm6274, %v6427, %v5943
    %v6430 = vsel %vm6274, %v6428, %v5945
    %v6431 = vsel %vm6277, %v6429, %v5951
    %v6432 = vsel %vm6277, %v6430, %v5953
    %v6433 = vsel %vm6280, %v6431, %v5959
    %v6434 = vsel %vm6280, %v6432, %v5961
    %v6435 = vsel %vm6283, %v6433, %v5967
    %v6436 = vsel %vm6283, %v6434, %v5969
    %v6437 = vsel %vm6286, %v6435, %v5975
    %v6438 = vsel %vm6286, %v6436, %v5977
    %v6439 = vsel %vm6289, %v6437, %v5983
    %v6440 = vsel %vm6289, %v6438, %v5985
    %v6441 = vsel %vm6292, %v6439, %v5991
    %v6442 = vsel %vm6292, %v6440, %v5993
    %v6443 = vsel %vm6295, %v6441, %v5999
    %v6444 = vsel %vm6295, %v6442, %v6001
    %v6445 = vsel %vm6298, %v6443, %v6007
    %v6446 = vsel %vm6298, %v6444, %v6009
    %v6447 = vsel %vm6301, %v6445, %v6015
    %v6448 = vsel %vm6301, %v6446, %v6017
    %v6449 = vsel %vm6304, %v6447, %v6023
    %v6450 = vsel %vm6304, %v6448, %v6025
    %v6451 = vsel %vm6307, %v6449, %v6031
    %v6452 = vsel %vm6307, %v6450, %v6033
    %v6453 = vsel %vm6310, %v6451, %v6039
    %v6454 = vsel %vm6310, %v6452, %v6041
    %v6455 = vsel %vm6313, %v6453, %v6047
    %v6456 = vsel %vm6313, %v6454, %v6049
    %v6457 = vsel %vm6316, %v6455, %v6055
    %v6458 = vsel %vm6316, %v6456, %v6057
    %v6459 = vsel %vm6319, %v6457, %v6063
    %v6460 = vsel %vm6319, %v6458, %v6065
    %v6461 = vsel %vm6322, %v6459, %v6071
    %v6462 = vsel %vm6322, %v6460, %v6073
    %v6463 = vsel %vm6325, %v6461, %v6079
    %v6464 = vsel %vm6325, %v6462, %v6081
    %v6465 = vsel %vm6328, %v6463, %v6087
    %v6466 = vsel %vm6328, %v6464, %v6089
    %v6467 = vsel %vm6331, %v6465, %v6095
    %v6468 = vsel %vm6331, %v6466, %v6097
    %v6469 = vsel %vm6334, %v6467, %v6103
    %v6470 = vsel %vm6334, %v6468, %v6105
    %v6471 = vsel %vm6337, %v6469, %v6111
    %v6472 = vsel %vm6337, %v6470, %v6113
    %v6473 = vsel %vm6340, %v6471, %v6119
    %v6474 = vsel %vm6340, %v6472, %v6121
    %v6475 = vsel %vm6343, %v6473, %v6127
    %v6476 = vsel %vm6343, %v6474, %v6129
    %v6477 = vsel %vm6346, %v6475, %v6135
    %v6478 = vsel %vm6346, %v6476, %v6137
    %v6479 = vsel %vm6349, %v6477, %v6143
    %v6480 = vsel %vm6349, %v6478, %v6145
    %v6481 = vsel %vm6352, %v6479, %v6151
    %v6482 = vsel %vm6352, %v6480, %v6153
    %v6483 = vsel %vm6355, %v6481, %v6159
    %v6484 = vsel %vm6355, %v6482, %v6161
    %v6485 = vsel %vm6358, %v6483, %v6167
    %v6486 = vsel %vm6358, %v6484, %v6169
    %6487 = vst.msk [vmem:[#allocation5] sm:$0xff] %vm6217, %v6359
    %6488 = vst.msk [vmem:[#allocation5 + $0x20] sm:$0xff] %vm6217, %v6360
    %6491 = vrot.lane.b32.xlu0 %v6359, 32
    %v6492 = vpop.permute.xlu0 %6491
    %6493 = vrot.lane.b32.xlu0 %v6360, 32
    %v6494 = vpop.permute.xlu0 %6493
    %vm6497 = vcmask 523520
    %6498 = vst.msk [vmem:[#allocation5] sm:$0xff] %vm6497, %v6492
    %6499 = vst.msk [vmem:[#allocation5 + $0x20] sm:$0xff] %vm6497, %v6494
    %vm6500 = vcmask 785920
    %6501 = vst.msk [vmem:[#allocation5] sm:$0xff] %vm6500, %v6492
    %6502 = vst.msk [vmem:[#allocation5 + $0x20] sm:$0xff] %vm6500, %v6494
    %6503 = vrot.lane.b32.xlu0 %v6359, 64
    %v6504 = vpop.permute.xlu0 %6503
    %6505 = vrot.lane.b32.xlu0 %v6360, 64
    %v6506 = vpop.permute.xlu0 %6505
    %vm6509 = vcmask 1048320
    %6510 = vst.msk [vmem:[#allocation5] sm:$0xff] %vm6509, %v6504
    %6511 = vst.msk [vmem:[#allocation5 + $0x20] sm:$0xff] %vm6509, %v6506
    %6512 = vst.msk [vmem:[#allocation5 + $0x8] sm:$0xff] %vm6217, %v6504
    %6513 = vst.msk [vmem:[#allocation5 + $0x28] sm:$0xff] %vm6217, %v6506
    %6514 = vrot.lane.b32.xlu0 %v6359, 96
    %v6515 = vpop.permute.xlu0 %6514
    %6516 = vrot.lane.b32.xlu0 %v6360, 96
    %v6517 = vpop.permute.xlu0 %6516
    %6520 = vst.msk [vmem:[#allocation5 + $0x8] sm:$0xff] %vm6497, %v6515
    %6521 = vst.msk [vmem:[#allocation5 + $0x28] sm:$0xff] %vm6497, %v6517
    %6522 = vst.msk [vmem:[#allocation5 + $0x8] sm:$0xff] %vm6500, %v6515
    %6523 = vst.msk [vmem:[#allocation5 + $0x28] sm:$0xff] %vm6500, %v6517
    %6524 = vst.msk [vmem:[#allocation5 + $0x8] sm:$0xff] %vm6509, %v6359
    %6525 = vst.msk [vmem:[#allocation5 + $0x28] sm:$0xff] %vm6509, %v6360
    %6526 = vst.msk [vmem:[#allocation5 + $0x10] sm:$0xff] %vm6217, %v6485
    %6527 = vst.msk [vmem:[#allocation5 + $0x30] sm:$0xff] %vm6217, %v6486
    %6530 = vrot.lane.b32.xlu0 %v6485, 32
    %v6531 = vpop.permute.xlu0 %6530
    %6532 = vrot.lane.b32.xlu0 %v6486, 32
    %v6533 = vpop.permute.xlu0 %6532
    %6536 = vst.msk [vmem:[#allocation5 + $0x10] sm:$0xff] %vm6497, %v6531
    %6537 = vst.msk [vmem:[#allocation5 + $0x30] sm:$0xff] %vm6497, %v6533
    %6538 = vst.msk [vmem:[#allocation5 + $0x10] sm:$0xff] %vm6500, %v6531
    %6539 = vst.msk [vmem:[#allocation5 + $0x30] sm:$0xff] %vm6500, %v6533
    %6540 = vrot.lane.b32.xlu0 %v6485, 64
    %v6541 = vpop.permute.xlu0 %6540
    %6542 = vrot.lane.b32.xlu0 %v6486, 64
    %v6543 = vpop.permute.xlu0 %6542
    %6546 = vst.msk [vmem:[#allocation5 + $0x10] sm:$0xff] %vm6509, %v6541
    %6547 = vst.msk [vmem:[#allocation5 + $0x30] sm:$0xff] %vm6509, %v6543
    %6548 = vst.msk [vmem:[#allocation5 + $0x18] sm:$0xff] %vm6217, %v6541
    %6549 = vst.msk [vmem:[#allocation5 + $0x38] sm:$0xff] %vm6217, %v6543
    %6550 = vrot.lane.b32.xlu0 %v6485, 96
    %v6551 = vpop.permute.xlu0 %6550
    %6552 = vrot.lane.b32.xlu0 %v6486, 96
    %v6553 = vpop.permute.xlu0 %6552
    %6556 = vst.msk [vmem:[#allocation5 + $0x18] sm:$0xff] %vm6497, %v6551
    %6557 = vst.msk [vmem:[#allocation5 + $0x38] sm:$0xff] %vm6497, %v6553
    %6558 = vst.msk [vmem:[#allocation5 + $0x18] sm:$0xff] %vm6500, %v6551
    %6559 = vst.msk [vmem:[#allocation5 + $0x38] sm:$0xff] %vm6500, %v6553
    %6560 = vst.msk [vmem:[#allocation5 + $0x18] sm:$0xff] %vm6509, %v6485
    %6561 = vst.msk [vmem:[#allocation5 + $0x38] sm:$0xff] %vm6509, %v6486
    // Predicated region
    $region10: #{tpu_custom_call.1} parent=1 // pred_check
      _
    $region11: #{tpu_custom_call.1} parent=1 // pred_check_branch
      %6563 = sbr.rel (0) target = $region13
    $region12: #{tpu_custom_call.1} parent=1 // pred_region
      %6565 = vsyncadd [#allocation4], 0
      %s6566 = sshll.u32 [#allocation5], 4
      %s6567 = int_to_ptr.vmem [resolvable:$true] %s6566
      %s6568 = sshll.u32 %s1, 4
      %s6569 = int_to_ptr.hbm [resolvable:$true] %s6568
      %6574 = dma.vmem_to_hbm [thread:$0]  %s6567, 1024, %s6569, [#allocation4], 512, 512, 32
    $region13: #{tpu_custom_call.1} parent=1 // pred_fallthru
      _
    // Predicated region
    $region14: #{tpu_custom_call.1} parent=1 // pred_check
      _
    $region15: #{tpu_custom_call.1} parent=1 // pred_check_branch
      %6576 = sbr.rel (0) target = $region17
    $region16: #{tpu_custom_call.1} parent=1 // pred_region
      %6578 = dma.done [#allocation4], 1024
    $region17: #{tpu_custom_call.1} parent=1 // pred_fallthru
      _
    %6579 = vsyncpa [#allocation3], 1
    %6580 = vsyncpa [#allocation4], 1

</llo_original>
